<compile_context>
chip_gen: v6e
topology: v6e:2x2x1
jax: 0.10.0
libtpu: 0.0.40
codegen_flags: <defaults>
</compile_context>

<pallas_src>
import functools
import numpy as np
import jax
import jax.numpy as jnp
from jax import lax
from jax.experimental import pallas as pl
from jax.experimental.pallas import tpu as pltpu


# ----------------------------- Pallas kernel -------------------------------

def _bigru_net_kernel(n_layers, len_ref, x_ref, *refs):
    """Fused bidirectional multi-layer GRU + final linear.

    len_ref : (Bp, 1)   int32  sequence lengths (padded rows have length 0)
    x_ref   : (T*Bp, E) f32    embedded tokens, row t*Bp + b
    refs    : per layer l: wih_f (Din,3H), wih_b (Din,3H),
                           whh_blk (2H,2G) block-diag, bih_f (1,3H),
                           bih_b (1,3H), bhh_blk (1,2G)
              then fc_wf (H,O), fc_wb (H,O), fc_b (1,O)
              then output logits_ref (Bp,O)
              then scratch gi_f (T*Bp,3H), gi_b (T*Bp,3H),
                           seq_f (T*Bp,H), seq_b (T*Bp,H)
    """
    n_w = 6 * n_layers + 3
    w = refs[:n_w]
    logits_ref = refs[n_w]
    gi_f_scr, gi_b_scr, seq_f_scr, seq_b_scr = refs[n_w + 1:n_w + 5]
    fc_wf_ref, fc_wb_ref, fc_b_ref = w[-3], w[-2], w[-1]

    Bp = len_ref.shape[0]                      # padded batch (multiple of 8)
    T = x_ref.shape[0] // Bp
    H = fc_wf_ref.shape[0]
    G = w[2].shape[1] // 2                     # lane-padded gate width (>=3H, mult of 128)
    lengths = len_ref[...]                     # (Bp, 1) int32

    h_f = h_b = None
    for l in range(n_layers):
        wih_f, wih_b, whh_blk, bih_f, bih_b, bhh_blk = w[6 * l:6 * l + 6]

        # Hoisted input projection: one big MXU matmul per direction per layer.
        if l == 0:
            x = x_ref[...]                                           # (T*Bp, E)
            gi_f_scr[...] = (jnp.dot(x, wih_f[...],
                                     preferred_element_type=jnp.float32)
                             + bih_f[...])
            gi_b_scr[...] = (jnp.dot(x, wih_b[...],
                                     preferred_element_type=jnp.float32)
                             + bih_b[...])
        else:
            # Previous layer's outputs live in two offset-0 buffers; the
            # (2H, 3H) input weight is row-split so no lane concat is needed.
            sf = seq_f_scr[...]
            sb = seq_b_scr[...]
            gi_f_scr[...] = (jnp.dot(sf, wih_f[0:H, :],
                                     preferred_element_type=jnp.float32)
                             + jnp.dot(sb, wih_f[H:2 * H, :],
                                       preferred_element_type=jnp.float32)
                             + bih_f[...])
            gi_b_scr[...] = (jnp.dot(sf, wih_b[0:H, :],
                                     preferred_element_type=jnp.float32)
                             + jnp.dot(sb, wih_b[H:2 * H, :],
                                       preferred_element_type=jnp.float32)
                             + bih_b[...])

        whh = whh_blk[...]                     # (2H, 2G) block-diagonal, loop-invariant
        bhh = bhh_blk[...]                     # (1, 2G)
        write_seq = (l + 1 < n_layers)

        def step(t, carry):
            hf, hb = carry
            rt = (T - 1) - t                                   # backward position
            off_f = pl.multiple_of(t * Bp, Bp)                 # sublane-aligned
            off_b = pl.multiple_of(rt * Bp, Bp)
            gi_f = gi_f_scr[pl.ds(off_f, Bp), :]               # (Bp, 3H) fwd proj @ t
            gi_b = gi_b_scr[pl.ds(off_b, Bp), :]               # (Bp, 3H) bwd proj @ T-1-t

            # Single MXU call for both directions' recurrent projections.
            h_cat = jnp.concatenate([hf, hb], axis=1)          # (Bp, 2H), one vreg row group
            gh = (jnp.dot(h_cat, whh, preferred_element_type=jnp.float32)
                  + bhh)                                       # (Bp, 2G)
            gh_f = gh[:, 0:3 * H]
            gh_b = gh[:, G:G + 3 * H]                          # starts at lane-tile boundary

            def gru_update(gi, gh_d, h):
                r = jax.nn.sigmoid(gi[:, 0:H] + gh_d[:, 0:H])
                z = jax.nn.sigmoid(gi[:, H:2 * H] + gh_d[:, H:2 * H])
                n = jnp.tanh(gi[:, 2 * H:3 * H] + r * gh_d[:, 2 * H:3 * H])
                return (1.0 - z) * n + z * h                   # PyTorch GRU update

            hc_f = gru_update(gi_f, gh_f, hf)
            hc_b = gru_update(gi_b, gh_b, hb)

            # pack_padded semantics: freeze state past each sequence's length.
            hf = jnp.where(lengths > t, hc_f, hf)
            hb = jnp.where(lengths > rt, hc_b, hb)

            if write_seq:                                      # next layer's inputs
                seq_f_scr[pl.ds(off_f, Bp), :] = hf            # offset-0 stores
                seq_b_scr[pl.ds(off_b, Bp), :] = hb
            return hf, hb

        h0 = jnp.zeros((Bp, H), jnp.float32)
        h_f, h_b = lax.fori_loop(0, T, step, (h0, h0), unroll=True)

    # Final linear without a lane concat: fc_w split once in pack_params.
    logits_ref[...] = (jnp.dot(h_f, fc_wf_ref[...],
                               preferred_element_type=jnp.float32)
                       + jnp.dot(h_b, fc_wb_ref[...],
                                 preferred_element_type=jnp.float32)
                       + fc_b_ref[...])


# ----------------------------- wrappers -------------------------------------

def pack_params(raw):
    """One-time weight packing (transposes, block-diag W_hh, fc split)."""
    layers = []
    for (fwd, bwd) in raw["layers"]:
        w_ih_f, w_hh_f, b_ih_f, b_hh_f = fwd
        w_ih_b, w_hh_b, b_ih_b, b_hh_b = bwd
        H = w_hh_f.shape[1]
        G = ((3 * H + 127) // 128) * 128               # lane-pad each direction's gates
        whh_blk = jnp.zeros((2 * H, 2 * G), jnp.float32)
        whh_blk = whh_blk.at[0:H, 0:3 * H].set(w_hh_f.T)
        whh_blk = whh_blk.at[H:2 * H, G:G + 3 * H].set(w_hh_b.T)
        bhh_blk = jnp.zeros((1, 2 * G), jnp.float32)
        bhh_blk = bhh_blk.at[0, 0:3 * H].set(b_hh_f)
        bhh_blk = bhh_blk.at[0, G:G + 3 * H].set(b_hh_b)
        layers.append(dict(
            wih_f=w_ih_f.T,                            # (Din, 3H)
            wih_b=w_ih_b.T,                            # (Din, 3H)
            whh_blk=whh_blk,                           # (2H, 2G) block-diagonal
            bih_f=b_ih_f.reshape(1, -1),
            bih_b=b_ih_b.reshape(1, -1),
            bhh_blk=bhh_blk,
        ))
    H = raw["layers"][0][0][1].shape[1]
    fc_w = raw["fc_w"]                                 # (O, 2H)
    return dict(emb=raw["emb"], layers=layers,
                fc_wf=fc_w[:, :H].T,                   # (H, O)
                fc_wb=fc_w[:, H:].T,                   # (H, O)
                fc_b=raw["fc_b"].reshape(1, -1))       # (1, O)


@jax.jit
def gru_net_forward(packed, text, text_lengths):
    """text (T,B) int32, text_lengths (B,) int32 -> (B, output_dim)."""
    T, B = text.shape
    H = packed["fc_wf"].shape[0]
    O = packed["fc_wf"].shape[1]
    n_layers = len(packed["layers"])
    Bp = ((B + 7) // 8) * 8                            # sublane-aligned batch

    # dropout == identity (eval mode); embedding gather stays in XLA.
    x = packed["emb"][text]                            # (T, B, E)
    lens = text_lengths.astype(jnp.int32)
    if Bp != B:
        x = jnp.pad(x, ((0, 0), (0, Bp - B), (0, 0)))  # zero rows
        lens = jnp.pad(lens, (0, Bp - B))              # padded rows: length 0
    x = x.reshape(T * Bp, -1)                          # row t*Bp + b
    lens = lens.reshape(Bp, 1)

    weight_args = []
    for lp in packed["layers"]:
        weight_args += [lp["wih_f"], lp["wih_b"], lp["whh_blk"],
                        lp["bih_f"], lp["bih_b"], lp["bhh_blk"]]
    weight_args += [packed["fc_wf"], packed["fc_wb"], packed["fc_b"]]

    vmem = pl.BlockSpec(memory_space=pltpu.MemorySpace.VMEM)
    logits = pl.pallas_call(
        functools.partial(_bigru_net_kernel, n_layers),
        out_shape=jax.ShapeDtypeStruct((Bp, O), jnp.float32),
        in_specs=[vmem] * (2 + len(weight_args)),
        out_specs=vmem,
        scratch_shapes=[pltpu.VMEM((T * Bp, 3 * H), jnp.float32),   # gi fwd
                        pltpu.VMEM((T * Bp, 3 * H), jnp.float32),   # gi bwd
                        pltpu.VMEM((T * Bp, H), jnp.float32),       # seq fwd
                        pltpu.VMEM((T * Bp, H), jnp.float32)],      # seq bwd
    )(lens, x, *weight_args)
    return logits[:B]                                  # drop padded rows


def init_params(key, vocab_size, embedding_dim, hidden_dim, output_dim,
                n_layers, pad_idx):
    keys = jax.random.split(key, 2 + n_layers * 2 * 4 + 2)
    ki = iter(range(len(keys)))

    emb = jax.random.normal(keys[next(ki)], (vocab_size, embedding_dim),
                            jnp.float32)
    emb = emb.at[pad_idx].set(0.0)  # padding_idx row is zero in nn.Embedding

    k = 1.0 / np.sqrt(hidden_dim)
    layers = []
    for layer in range(n_layers):
        din = embedding_dim if layer == 0 else 2 * hidden_dim
        dirs = []
        for _ in range(2):  # forward, backward
            w_ih = jax.random.uniform(keys[next(ki)], (3 * hidden_dim, din),
                                      jnp.float32, -k, k)
            w_hh = jax.random.uniform(keys[next(ki)], (3 * hidden_dim, hidden_dim),
                                      jnp.float32, -k, k)
            b_ih = jax.random.uniform(keys[next(ki)], (3 * hidden_dim,),
                                      jnp.float32, -k, k)
            b_hh = jax.random.uniform(keys[next(ki)], (3 * hidden_dim,),
                                      jnp.float32, -k, k)
            dirs.append((w_ih, w_hh, b_ih, b_hh))
        layers.append(tuple(dirs))

    kf = 1.0 / np.sqrt(2 * hidden_dim)
    fc_w = jax.random.uniform(keys[next(ki)], (output_dim, 2 * hidden_dim),
                              jnp.float32, -kf, kf)
    fc_b = jax.random.uniform(keys[next(ki)], (output_dim,),
                              jnp.float32, -kf, kf)
    return {"emb": emb, "layers": layers, "fc_w": fc_w, "fc_b": fc_b}


# ----------------------- pure-JAX reference (checking) ----------------------

def _gru_layer_ref(x_seq, mask, w_ih, w_hh, b_ih, b_hh):
    T, B, _ = x_seq.shape
    H = w_hh.shape[1]
    h = jnp.zeros((B, H), jnp.float32)
    outs = []
    for t in range(T):
        gi = x_seq[t] @ w_ih.T + b_ih
        gh = h @ w_hh.T + b_hh
        r = jax.nn.sigmoid(gi[:, :H] + gh[:, :H])
        z = jax.nn.sigmoid(gi[:, H:2 * H] + gh[:, H:2 * H])
        n = jnp.tanh(gi[:, 2 * H:] + r * gh[:, 2 * H:])
        h_cand = (1.0 - z) * n + z * h
        m = mask[t]
        h = m * h_cand + (1.0 - m) * h
        outs.append(h)
    return jnp.stack(outs), h


def gru_net_forward_ref(params, text, text_lengths):
    T, B = text.shape
    x = params["emb"][text]
    mask = (jnp.arange(T)[:, None] < text_lengths[None, :]).astype(jnp.float32)
    mask = mask[:, :, None]
    h_fwd = h_bwd = None
    for (fwd, bwd) in params["layers"]:
        out_f, h_fwd = _gru_layer_ref(x, mask, *fwd)
        out_b_rev, h_bwd = _gru_layer_ref(x[::-1], mask[::-1], *bwd)
        x = jnp.concatenate([out_f, out_b_rev[::-1]], axis=-1)
    hidden = jnp.concatenate([h_fwd, h_bwd], axis=1)
    return hidden @ params["fc_w"].T + params["fc_b"]


# --------------------------------- main --------------------------------------

if __name__ == "__main__":
    VOCAB, EMB, HID, OUT = 50, 32, 32, 4
    N_LAYERS, PAD_IDX = 2, 0
    T, B = 8, 4

    key = jax.random.PRNGKey(0)
    k_param, k_tok = jax.random.split(key)
    raw_params = init_params(k_param, VOCAB, EMB, HID, OUT, N_LAYERS, PAD_IDX)
    packed_params = pack_params(raw_params)

    text_lengths = jnp.array([8, 5, 3, 6], dtype=jnp.int32)           # (B,)
    tokens = jax.random.randint(k_tok, (T, B), 1, VOCAB, dtype=jnp.int32)
    pad_mask = jnp.arange(T)[:, None] < text_lengths[None, :]
    text = jnp.where(pad_mask, tokens, PAD_IDX)                       # (T,B)

    out = gru_net_forward(packed_params, text, text_lengths)
    out = jax.block_until_ready(out)

    ref = jax.block_until_ready(
        gru_net_forward_ref(raw_params, text, text_lengths))
    assert out.shape == (B, OUT)
    np.testing.assert_allclose(np.asarray(out), np.asarray(ref),
                               rtol=1e-4, atol=1e-4)
    print("KERNEL_OK")
</pallas_src>

<mosaic_0001>
module attributes {stable_mosaic.version = 11 : i64} {
  func.func @_bigru_net_kernel(%arg0: memref<8x1xi32, #tpu.memory_space<vmem>>, %arg1: memref<64x32xf32, #tpu.memory_space<vmem>>, %arg2: memref<32x96xf32, #tpu.memory_space<vmem>>, %arg3: memref<32x96xf32, #tpu.memory_space<vmem>>, %arg4: memref<64x256xf32, #tpu.memory_space<vmem>>, %arg5: memref<1x96xf32, #tpu.memory_space<vmem>>, %arg6: memref<1x96xf32, #tpu.memory_space<vmem>>, %arg7: memref<1x256xf32, #tpu.memory_space<vmem>>, %arg8: memref<64x96xf32, #tpu.memory_space<vmem>>, %arg9: memref<64x96xf32, #tpu.memory_space<vmem>>, %arg10: memref<64x256xf32, #tpu.memory_space<vmem>>, %arg11: memref<1x96xf32, #tpu.memory_space<vmem>>, %arg12: memref<1x96xf32, #tpu.memory_space<vmem>>, %arg13: memref<1x256xf32, #tpu.memory_space<vmem>>, %arg14: memref<32x4xf32, #tpu.memory_space<vmem>>, %arg15: memref<32x4xf32, #tpu.memory_space<vmem>>, %arg16: memref<1x4xf32, #tpu.memory_space<vmem>>, %arg17: memref<8x4xf32, #tpu.memory_space<vmem>>, %arg18: memref<64x96xf32, #tpu.memory_space<vmem>>, %arg19: memref<64x96xf32, #tpu.memory_space<vmem>>, %arg20: memref<64x32xf32, #tpu.memory_space<vmem>>, %arg21: memref<64x32xf32, #tpu.memory_space<vmem>>) attributes {dimension_semantics = [], scalar_prefetch = 0 : i64, scratch_operands = 4 : i64, tpu.core_type = #tpu.core_type<tc>} {
    %c0 = arith.constant 0 : index
    %c0_0 = arith.constant 0 : index
    %0 = vector.load %arg0[%c0, %c0_0] : memref<8x1xi32, #tpu.memory_space<vmem>>, vector<8x1xi32>
    %c0_1 = arith.constant 0 : index
    %c0_2 = arith.constant 0 : index
    %1 = vector.load %arg1[%c0_1, %c0_2] : memref<64x32xf32, #tpu.memory_space<vmem>>, vector<64x32xf32>
    %c0_3 = arith.constant 0 : index
    %c0_4 = arith.constant 0 : index
    %2 = vector.load %arg2[%c0_3, %c0_4] : memref<32x96xf32, #tpu.memory_space<vmem>>, vector<32x96xf32>
    %cst = arith.constant dense<0.000000e+00> : vector<64x96xf32>
    %3 = tpu.matmul %1, %2, %cst {dimension_numbers = #tpu.dot_dimension_numbers<[1], [0], [0], [1], [0, 0, 1, 1], [], []>} : vector<64x32xf32>, vector<32x96xf32>, vector<64x96xf32> -> vector<64x96xf32>
    %c0_5 = arith.constant 0 : index
    %c0_6 = arith.constant 0 : index
    %4 = vector.load %arg5[%c0_5, %c0_6] : memref<1x96xf32, #tpu.memory_space<vmem>>, vector<1x96xf32>
    %5 = vector.broadcast %4 : vector<1x96xf32> to vector<64x96xf32>
    %6 = arith.addf %3, %5 : vector<64x96xf32>
    %c0_7 = arith.constant 0 : index
    %c0_8 = arith.constant 0 : index
    %7 = vector.load %arg18[%c0_7, %c0_8] : memref<64x96xf32, #tpu.memory_space<vmem>>, vector<64x96xf32>
    tpu.vector_store %arg18[%c0_7, %c0_8], %6 {strides = array<i32>} : memref<64x96xf32, #tpu.memory_space<vmem>>, vector<64x96xf32>,
    %c0_9 = arith.constant 0 : index
    %c0_10 = arith.constant 0 : index
    %8 = vector.load %arg3[%c0_9, %c0_10] : memref<32x96xf32, #tpu.memory_space<vmem>>, vector<32x96xf32>
    %cst_11 = arith.constant dense<0.000000e+00> : vector<64x96xf32>
    %9 = tpu.matmul %1, %8, %cst_11 {dimension_numbers = #tpu.dot_dimension_numbers<[1], [0], [0], [1], [0, 0, 1, 1], [], []>} : vector<64x32xf32>, vector<32x96xf32>, vector<64x96xf32> -> vector<64x96xf32>
    %c0_12 = arith.constant 0 : index
    %c0_13 = arith.constant 0 : index
    %10 = vector.load %arg6[%c0_12, %c0_13] : memref<1x96xf32, #tpu.memory_space<vmem>>, vector<1x96xf32>
    %11 = vector.broadcast %10 : vector<1x96xf32> to vector<64x96xf32>
    %12 = arith.addf %9, %11 : vector<64x96xf32>
    %c0_14 = arith.constant 0 : index
    %c0_15 = arith.constant 0 : index
    %13 = vector.load %arg19[%c0_14, %c0_15] : memref<64x96xf32, #tpu.memory_space<vmem>>, vector<64x96xf32>
    tpu.vector_store %arg19[%c0_14, %c0_15], %12 {strides = array<i32>} : memref<64x96xf32, #tpu.memory_space<vmem>>, vector<64x96xf32>,
    %c0_16 = arith.constant 0 : index
    %c0_17 = arith.constant 0 : index
    %14 = vector.load %arg4[%c0_16, %c0_17] : memref<64x256xf32, #tpu.memory_space<vmem>>, vector<64x256xf32>
    %c0_18 = arith.constant 0 : index
    %c0_19 = arith.constant 0 : index
    %15 = vector.load %arg7[%c0_18, %c0_19] : memref<1x256xf32, #tpu.memory_space<vmem>>, vector<1x256xf32>
    %cst_20 = arith.constant 0.000000e+00 : f32
    %16 = vector.broadcast %cst_20 : f32 to vector<8x32xf32>
    %c0_i32 = arith.constant 0 : i32
    %c7_i32 = arith.constant 7 : i32
    %17 = arith.subi %c7_i32, %c0_i32 : i32
    %c8_i32 = arith.constant 8 : i32
    %18 = arith.muli %c0_i32, %c8_i32 : i32
    %19 = tpu.assume_multiple %18, 8 : i32
    %c8_i32_21 = arith.constant 8 : i32
    %20 = arith.muli %17, %c8_i32_21 : i32
    %21 = tpu.assume_multiple %20, 8 : i32
    %22 = arith.index_cast %19 : i32 to index
    %c0_22 = arith.constant 0 : index
    %23 = vector.load %arg18[%22, %c0_22] : memref<64x96xf32, #tpu.memory_space<vmem>>, vector<8x96xf32>
    %24 = arith.index_cast %21 : i32 to index
    %c0_23 = arith.constant 0 : index
    %25 = vector.load %arg19[%24, %c0_23] : memref<64x96xf32, #tpu.memory_space<vmem>>, vector<8x96xf32>
    %26 = tpu.concatenate %16, %16 in 1 : vector<8x32xf32>, vector<8x32xf32> -> vector<8x64xf32>
    %cst_24 = arith.constant dense<0.000000e+00> : vector<8x256xf32>
    %27 = tpu.matmul %26, %14, %cst_24 {dimension_numbers = #tpu.dot_dimension_numbers<[1], [0], [0], [1], [0, 0, 1, 1], [], []>} : vector<8x64xf32>, vector<64x256xf32>, vector<8x256xf32> -> vector<8x256xf32>
    %28 = vector.broadcast %15 : vector<1x256xf32> to vector<8x256xf32>
    %29 = arith.addf %27, %28 : vector<8x256xf32>
    %30 = vector.extract_strided_slice %29 {offsets = [0, 0], sizes = [8, 96], strides = [1, 1]} : vector<8x256xf32> to vector<8x96xf32>
    %31 = vector.extract_strided_slice %29 {offsets = [0, 128], sizes = [8, 96], strides = [1, 1]} : vector<8x256xf32> to vector<8x96xf32>
    %32 = vector.extract_strided_slice %23 {offsets = [0, 0], sizes = [8, 32], strides = [1, 1]} : vector<8x96xf32> to vector<8x32xf32>
    %33 = vector.extract_strided_slice %30 {offsets = [0, 0], sizes = [8, 32], strides = [1, 1]} : vector<8x96xf32> to vector<8x32xf32>
    %34 = arith.addf %32, %33 : vector<8x32xf32>
    %35 = arith.negf %34 : vector<8x32xf32>
    %36 = math.exp %35 : vector<8x32xf32>
    %cst_25 = arith.constant 1.000000e+00 : f32
    %37 = vector.broadcast %cst_25 : f32 to vector<8x32xf32>
    %38 = arith.addf %37, %36 : vector<8x32xf32>
    %39 = arith.divf %37, %38 : vector<8x32xf32>
    %40 = vector.extract_strided_slice %23 {offsets = [0, 32], sizes = [8, 32], strides = [1, 1]} : vector<8x96xf32> to vector<8x32xf32>
    %41 = vector.extract_strided_slice %30 {offsets = [0, 32], sizes = [8, 32], strides = [1, 1]} : vector<8x96xf32> to vector<8x32xf32>
    %42 = arith.addf %40, %41 : vector<8x32xf32>
    %43 = arith.negf %42 : vector<8x32xf32>
    %44 = math.exp %43 : vector<8x32xf32>
    %cst_26 = arith.constant 1.000000e+00 : f32
    %45 = vector.broadcast %cst_26 : f32 to vector<8x32xf32>
    %46 = arith.addf %45, %44 : vector<8x32xf32>
    %47 = arith.divf %45, %46 : vector<8x32xf32>
    %48 = vector.extract_strided_slice %23 {offsets = [0, 64], sizes = [8, 32], strides = [1, 1]} : vector<8x96xf32> to vector<8x32xf32>
    %49 = vector.extract_strided_slice %30 {offsets = [0, 64], sizes = [8, 32], strides = [1, 1]} : vector<8x96xf32> to vector<8x32xf32>
    %50 = arith.mulf %39, %49 : vector<8x32xf32>
    %51 = arith.addf %48, %50 : vector<8x32xf32>
    %52 = math.tanh %51 : vector<8x32xf32>
    %cst_27 = arith.constant 1.000000e+00 : f32
    %53 = vector.broadcast %cst_27 : f32 to vector<8x32xf32>
    %54 = arith.subf %53, %47 : vector<8x32xf32>
    %55 = arith.mulf %54, %52 : vector<8x32xf32>
    %56 = arith.mulf %47, %16 : vector<8x32xf32>
    %57 = arith.addf %55, %56 : vector<8x32xf32>
    %58 = vector.extract_strided_slice %25 {offsets = [0, 0], sizes = [8, 32], strides = [1, 1]} : vector<8x96xf32> to vector<8x32xf32>
    %59 = vector.extract_strided_slice %31 {offsets = [0, 0], sizes = [8, 32], strides = [1, 1]} : vector<8x96xf32> to vector<8x32xf32>
    %60 = arith.addf %58, %59 : vector<8x32xf32>
    %61 = arith.negf %60 : vector<8x32xf32>
    %62 = math.exp %61 : vector<8x32xf32>
    %cst_28 = arith.constant 1.000000e+00 : f32
    %63 = vector.broadcast %cst_28 : f32 to vector<8x32xf32>
    %64 = arith.addf %63, %62 : vector<8x32xf32>
    %65 = arith.divf %63, %64 : vector<8x32xf32>
    %66 = vector.extract_strided_slice %25 {offsets = [0, 32], sizes = [8, 32], strides = [1, 1]} : vector<8x96xf32> to vector<8x32xf32>
    %67 = vector.extract_strided_slice %31 {offsets = [0, 32], sizes = [8, 32], strides = [1, 1]} : vector<8x96xf32> to vector<8x32xf32>
    %68 = arith.addf %66, %67 : vector<8x32xf32>
    %69 = arith.negf %68 : vector<8x32xf32>
    %70 = math.exp %69 : vector<8x32xf32>
    %cst_29 = arith.constant 1.000000e+00 : f32
    %71 = vector.broadcast %cst_29 : f32 to vector<8x32xf32>
    %72 = arith.addf %71, %70 : vector<8x32xf32>
    %73 = arith.divf %71, %72 : vector<8x32xf32>
    %74 = vector.extract_strided_slice %25 {offsets = [0, 64], sizes = [8, 32], strides = [1, 1]} : vector<8x96xf32> to vector<8x32xf32>
    %75 = vector.extract_strided_slice %31 {offsets = [0, 64], sizes = [8, 32], strides = [1, 1]} : vector<8x96xf32> to vector<8x32xf32>
    %76 = arith.mulf %65, %75 : vector<8x32xf32>
    %77 = arith.addf %74, %76 : vector<8x32xf32>
    %78 = math.tanh %77 : vector<8x32xf32>
    %cst_30 = arith.constant 1.000000e+00 : f32
    %79 = vector.broadcast %cst_30 : f32 to vector<8x32xf32>
    %80 = arith.subf %79, %73 : vector<8x32xf32>
    %81 = arith.mulf %80, %78 : vector<8x32xf32>
    %82 = arith.mulf %73, %16 : vector<8x32xf32>
    %83 = arith.addf %81, %82 : vector<8x32xf32>
    %84 = vector.broadcast %c0_i32 : i32 to vector<8x1xi32>
    %85 = arith.cmpi sgt, %0, %84 : vector<8x1xi32>
    %86 = vector.shape_cast %85 : vector<8x1xi1> to vector<8x1xi1>
    %87 = vector.broadcast %86 : vector<8x1xi1> to vector<8x32xi1>
    %88 = arith.select %87, %57, %16 : vector<8x32xi1>, vector<8x32xf32>
    %89 = vector.broadcast %17 : i32 to vector<8x1xi32>
    %90 = arith.cmpi sgt, %0, %89 : vector<8x1xi32>
    %91 = vector.shape_cast %90 : vector<8x1xi1> to vector<8x1xi1>
    %92 = vector.broadcast %91 : vector<8x1xi1> to vector<8x32xi1>
    %93 = arith.select %92, %83, %16 : vector<8x32xi1>, vector<8x32xf32>
    %94 = arith.index_cast %19 : i32 to index
    %c0_31 = arith.constant 0 : index
    %95 = vector.load %arg20[%94, %c0_31] : memref<64x32xf32, #tpu.memory_space<vmem>>, vector<8x32xf32>
    tpu.vector_store %arg20[%94, %c0_31], %88 {strides = array<i32>} : memref<64x32xf32, #tpu.memory_space<vmem>>, vector<8x32xf32>,
    %96 = arith.index_cast %21 : i32 to index
    %c0_32 = arith.constant 0 : index
    %97 = vector.load %arg21[%96, %c0_32] : memref<64x32xf32, #tpu.memory_space<vmem>>, vector<8x32xf32>
    tpu.vector_store %arg21[%96, %c0_32], %93 {strides = array<i32>} : memref<64x32xf32, #tpu.memory_space<vmem>>, vector<8x32xf32>,
    %c1_i32 = arith.constant 1 : i32
    %c7_i32_33 = arith.constant 7 : i32
    %98 = arith.subi %c7_i32_33, %c1_i32 : i32
    %c8_i32_34 = arith.constant 8 : i32
    %99 = arith.muli %c1_i32, %c8_i32_34 : i32
    %100 = tpu.assume_multiple %99, 8 : i32
    %c8_i32_35 = arith.constant 8 : i32
    %101 = arith.muli %98, %c8_i32_35 : i32
    %102 = tpu.assume_multiple %101, 8 : i32
    %103 = arith.index_cast %100 : i32 to index
    %c0_36 = arith.constant 0 : index
    %104 = vector.load %arg18[%103, %c0_36] : memref<64x96xf32, #tpu.memory_space<vmem>>, vector<8x96xf32>
    %105 = arith.index_cast %102 : i32 to index
    %c0_37 = arith.constant 0 : index
    %106 = vector.load %arg19[%105, %c0_37] : memref<64x96xf32, #tpu.memory_space<vmem>>, vector<8x96xf32>
    %107 = tpu.concatenate %88, %93 in 1 : vector<8x32xf32>, vector<8x32xf32> -> vector<8x64xf32>
    %cst_38 = arith.constant dense<0.000000e+00> : vector<8x256xf32>
    %108 = tpu.matmul %107, %14, %cst_38 {dimension_numbers = #tpu.dot_dimension_numbers<[1], [0], [0], [1], [0, 0, 1, 1], [], []>} : vector<8x64xf32>, vector<64x256xf32>, vector<8x256xf32> -> vector<8x256xf32>
    %109 = vector.broadcast %15 : vector<1x256xf32> to vector<8x256xf32>
    %110 = arith.addf %108, %109 : vector<8x256xf32>
    %111 = vector.extract_strided_slice %110 {offsets = [0, 0], sizes = [8, 96], strides = [1, 1]} : vector<8x256xf32> to vector<8x96xf32>
    %112 = vector.extract_strided_slice %110 {offsets = [0, 128], sizes = [8, 96], strides = [1, 1]} : vector<8x256xf32> to vector<8x96xf32>
    %113 = vector.extract_strided_slice %104 {offsets = [0, 0], sizes = [8, 32], strides = [1, 1]} : vector<8x96xf32> to vector<8x32xf32>
    %114 = vector.extract_strided_slice %111 {offsets = [0, 0], sizes = [8, 32], strides = [1, 1]} : vector<8x96xf32> to vector<8x32xf32>
    %115 = arith.addf %113, %114 : vector<8x32xf32>
    %116 = arith.negf %115 : vector<8x32xf32>
    %117 = math.exp %116 : vector<8x32xf32>
    %cst_39 = arith.constant 1.000000e+00 : f32
    %118 = vector.broadcast %cst_39 : f32 to vector<8x32xf32>
    %119 = arith.addf %118, %117 : vector<8x32xf32>
    %120 = arith.divf %118, %119 : vector<8x32xf32>
    %121 = vector.extract_strided_slice %104 {offsets = [0, 32], sizes = [8, 32], strides = [1, 1]} : vector<8x96xf32> to vector<8x32xf32>
    %122 = vector.extract_strided_slice %111 {offsets = [0, 32], sizes = [8, 32], strides = [1, 1]} : vector<8x96xf32> to vector<8x32xf32>
    %123 = arith.addf %121, %122 : vector<8x32xf32>
    %124 = arith.negf %123 : vector<8x32xf32>
    %125 = math.exp %124 : vector<8x32xf32>
    %cst_40 = arith.constant 1.000000e+00 : f32
    %126 = vector.broadcast %cst_40 : f32 to vector<8x32xf32>
    %127 = arith.addf %126, %125 : vector<8x32xf32>
    %128 = arith.divf %126, %127 : vector<8x32xf32>
    %129 = vector.extract_strided_slice %104 {offsets = [0, 64], sizes = [8, 32], strides = [1, 1]} : vector<8x96xf32> to vector<8x32xf32>
    %130 = vector.extract_strided_slice %111 {offsets = [0, 64], sizes = [8, 32], strides = [1, 1]} : vector<8x96xf32> to vector<8x32xf32>
    %131 = arith.mulf %120, %130 : vector<8x32xf32>
    %132 = arith.addf %129, %131 : vector<8x32xf32>
    %133 = math.tanh %132 : vector<8x32xf32>
    %cst_41 = arith.constant 1.000000e+00 : f32
    %134 = vector.broadcast %cst_41 : f32 to vector<8x32xf32>
    %135 = arith.subf %134, %128 : vector<8x32xf32>
    %136 = arith.mulf %135, %133 : vector<8x32xf32>
    %137 = arith.mulf %128, %88 : vector<8x32xf32>
    %138 = arith.addf %136, %137 : vector<8x32xf32>
    %139 = vector.extract_strided_slice %106 {offsets = [0, 0], sizes = [8, 32], strides = [1, 1]} : vector<8x96xf32> to vector<8x32xf32>
    %140 = vector.extract_strided_slice %112 {offsets = [0, 0], sizes = [8, 32], strides = [1, 1]} : vector<8x96xf32> to vector<8x32xf32>
    %141 = arith.addf %139, %140 : vector<8x32xf32>
    %142 = arith.negf %141 : vector<8x32xf32>
    %143 = math.exp %142 : vector<8x32xf32>
    %cst_42 = arith.constant 1.000000e+00 : f32
    %144 = vector.broadcast %cst_42 : f32 to vector<8x32xf32>
    %145 = arith.addf %144, %143 : vector<8x32xf32>
    %146 = arith.divf %144, %145 : vector<8x32xf32>
    %147 = vector.extract_strided_slice %106 {offsets = [0, 32], sizes = [8, 32], strides = [1, 1]} : vector<8x96xf32> to vector<8x32xf32>
    %148 = vector.extract_strided_slice %112 {offsets = [0, 32], sizes = [8, 32], strides = [1, 1]} : vector<8x96xf32> to vector<8x32xf32>
    %149 = arith.addf %147, %148 : vector<8x32xf32>
    %150 = arith.negf %149 : vector<8x32xf32>
    %151 = math.exp %150 : vector<8x32xf32>
    %cst_43 = arith.constant 1.000000e+00 : f32
    %152 = vector.broadcast %cst_43 : f32 to vector<8x32xf32>
    %153 = arith.addf %152, %151 : vector<8x32xf32>
    %154 = arith.divf %152, %153 : vector<8x32xf32>
    %155 = vector.extract_strided_slice %106 {offsets = [0, 64], sizes = [8, 32], strides = [1, 1]} : vector<8x96xf32> to vector<8x32xf32>
    %156 = vector.extract_strided_slice %112 {offsets = [0, 64], sizes = [8, 32], strides = [1, 1]} : vector<8x96xf32> to vector<8x32xf32>
    %157 = arith.mulf %146, %156 : vector<8x32xf32>
    %158 = arith.addf %155, %157 : vector<8x32xf32>
    %159 = math.tanh %158 : vector<8x32xf32>
    %cst_44 = arith.constant 1.000000e+00 : f32
    %160 = vector.broadcast %cst_44 : f32 to vector<8x32xf32>
    %161 = arith.subf %160, %154 : vector<8x32xf32>
    %162 = arith.mulf %161, %159 : vector<8x32xf32>
    %163 = arith.mulf %154, %93 : vector<8x32xf32>
    %164 = arith.addf %162, %163 : vector<8x32xf32>
    %165 = vector.broadcast %c1_i32 : i32 to vector<8x1xi32>
    %166 = arith.cmpi sgt, %0, %165 : vector<8x1xi32>
    %167 = vector.shape_cast %166 : vector<8x1xi1> to vector<8x1xi1>
    %168 = vector.broadcast %167 : vector<8x1xi1> to vector<8x32xi1>
    %169 = arith.select %168, %138, %88 : vector<8x32xi1>, vector<8x32xf32>
    %170 = vector.broadcast %98 : i32 to vector<8x1xi32>
    %171 = arith.cmpi sgt, %0, %170 : vector<8x1xi32>
    %172 = vector.shape_cast %171 : vector<8x1xi1> to vector<8x1xi1>
    %173 = vector.broadcast %172 : vector<8x1xi1> to vector<8x32xi1>
    %174 = arith.select %173, %164, %93 : vector<8x32xi1>, vector<8x32xf32>
    %175 = arith.index_cast %100 : i32 to index
    %c0_45 = arith.constant 0 : index
    %176 = vector.load %arg20[%175, %c0_45] : memref<64x32xf32, #tpu.memory_space<vmem>>, vector<8x32xf32>
    tpu.vector_store %arg20[%175, %c0_45], %169 {strides = array<i32>} : memref<64x32xf32, #tpu.memory_space<vmem>>, vector<8x32xf32>,
    %177 = arith.index_cast %102 : i32 to index
    %c0_46 = arith.constant 0 : index
    %178 = vector.load %arg21[%177, %c0_46] : memref<64x32xf32, #tpu.memory_space<vmem>>, vector<8x32xf32>
    tpu.vector_store %arg21[%177, %c0_46], %174 {strides = array<i32>} : memref<64x32xf32, #tpu.memory_space<vmem>>, vector<8x32xf32>,
    %c2_i32 = arith.constant 2 : i32
    %c7_i32_47 = arith.constant 7 : i32
    %179 = arith.subi %c7_i32_47, %c2_i32 : i32
    %c8_i32_48 = arith.constant 8 : i32
    %180 = arith.muli %c2_i32, %c8_i32_48 : i32
    %181 = tpu.assume_multiple %180, 8 : i32
    %c8_i32_49 = arith.constant 8 : i32
    %182 = arith.muli %179, %c8_i32_49 : i32
    %183 = tpu.assume_multiple %182, 8 : i32
    %184 = arith.index_cast %181 : i32 to index
    %c0_50 = arith.constant 0 : index
    %185 = vector.load %arg18[%184, %c0_50] : memref<64x96xf32, #tpu.memory_space<vmem>>, vector<8x96xf32>
    %186 = arith.index_cast %183 : i32 to index
    %c0_51 = arith.constant 0 : index
    %187 = vector.load %arg19[%186, %c0_51] : memref<64x96xf32, #tpu.memory_space<vmem>>, vector<8x96xf32>
    %188 = tpu.concatenate %169, %174 in 1 : vector<8x32xf32>, vector<8x32xf32> -> vector<8x64xf32>
    %cst_52 = arith.constant dense<0.000000e+00> : vector<8x256xf32>
    %189 = tpu.matmul %188, %14, %cst_52 {dimension_numbers = #tpu.dot_dimension_numbers<[1], [0], [0], [1], [0, 0, 1, 1], [], []>} : vector<8x64xf32>, vector<64x256xf32>, vector<8x256xf32> -> vector<8x256xf32>
    %190 = vector.broadcast %15 : vector<1x256xf32> to vector<8x256xf32>
    %191 = arith.addf %189, %190 : vector<8x256xf32>
    %192 = vector.extract_strided_slice %191 {offsets = [0, 0], sizes = [8, 96], strides = [1, 1]} : vector<8x256xf32> to vector<8x96xf32>
    %193 = vector.extract_strided_slice %191 {offsets = [0, 128], sizes = [8, 96], strides = [1, 1]} : vector<8x256xf32> to vector<8x96xf32>
    %194 = vector.extract_strided_slice %185 {offsets = [0, 0], sizes = [8, 32], strides = [1, 1]} : vector<8x96xf32> to vector<8x32xf32>
    %195 = vector.extract_strided_slice %192 {offsets = [0, 0], sizes = [8, 32], strides = [1, 1]} : vector<8x96xf32> to vector<8x32xf32>
    %196 = arith.addf %194, %195 : vector<8x32xf32>
    %197 = arith.negf %196 : vector<8x32xf32>
    %198 = math.exp %197 : vector<8x32xf32>
    %cst_53 = arith.constant 1.000000e+00 : f32
    %199 = vector.broadcast %cst_53 : f32 to vector<8x32xf32>
    %200 = arith.addf %199, %198 : vector<8x32xf32>
    %201 = arith.divf %199, %200 : vector<8x32xf32>
    %202 = vector.extract_strided_slice %185 {offsets = [0, 32], sizes = [8, 32], strides = [1, 1]} : vector<8x96xf32> to vector<8x32xf32>
    %203 = vector.extract_strided_slice %192 {offsets = [0, 32], sizes = [8, 32], strides = [1, 1]} : vector<8x96xf32> to vector<8x32xf32>
    %204 = arith.addf %202, %203 : vector<8x32xf32>
    %205 = arith.negf %204 : vector<8x32xf32>
    %206 = math.exp %205 : vector<8x32xf32>
    %cst_54 = arith.constant 1.000000e+00 : f32
    %207 = vector.broadcast %cst_54 : f32 to vector<8x32xf32>
    %208 = arith.addf %207, %206 : vector<8x32xf32>
    %209 = arith.divf %207, %208 : vector<8x32xf32>
    %210 = vector.extract_strided_slice %185 {offsets = [0, 64], sizes = [8, 32], strides = [1, 1]} : vector<8x96xf32> to vector<8x32xf32>
    %211 = vector.extract_strided_slice %192 {offsets = [0, 64], sizes = [8, 32], strides = [1, 1]} : vector<8x96xf32> to vector<8x32xf32>
    %212 = arith.mulf %201, %211 : vector<8x32xf32>
    %213 = arith.addf %210, %212 : vector<8x32xf32>
    %214 = math.tanh %213 : vector<8x32xf32>
    %cst_55 = arith.constant 1.000000e+00 : f32
    %215 = vector.broadcast %cst_55 : f32 to vector<8x32xf32>
    %216 = arith.subf %215, %209 : vector<8x32xf32>
    %217 = arith.mulf %216, %214 : vector<8x32xf32>
    %218 = arith.mulf %209, %169 : vector<8x32xf32>
    %219 = arith.addf %217, %218 : vector<8x32xf32>
    %220 = vector.extract_strided_slice %187 {offsets = [0, 0], sizes = [8, 32], strides = [1, 1]} : vector<8x96xf32> to vector<8x32xf32>
    %221 = vector.extract_strided_slice %193 {offsets = [0, 0], sizes = [8, 32], strides = [1, 1]} : vector<8x96xf32> to vector<8x32xf32>
    %222 = arith.addf %220, %221 : vector<8x32xf32>
    %223 = arith.negf %222 : vector<8x32xf32>
    %224 = math.exp %223 : vector<8x32xf32>
    %cst_56 = arith.constant 1.000000e+00 : f32
    %225 = vector.broadcast %cst_56 : f32 to vector<8x32xf32>
    %226 = arith.addf %225, %224 : vector<8x32xf32>
    %227 = arith.divf %225, %226 : vector<8x32xf32>
    %228 = vector.extract_strided_slice %187 {offsets = [0, 32], sizes = [8, 32], strides = [1, 1]} : vector<8x96xf32> to vector<8x32xf32>
    %229 = vector.extract_strided_slice %193 {offsets = [0, 32], sizes = [8, 32], strides = [1, 1]} : vector<8x96xf32> to vector<8x32xf32>
    %230 = arith.addf %228, %229 : vector<8x32xf32>
    %231 = arith.negf %230 : vector<8x32xf32>
    %232 = math.exp %231 : vector<8x32xf32>
    %cst_57 = arith.constant 1.000000e+00 : f32
    %233 = vector.broadcast %cst_57 : f32 to vector<8x32xf32>
    %234 = arith.addf %233, %232 : vector<8x32xf32>
    %235 = arith.divf %233, %234 : vector<8x32xf32>
    %236 = vector.extract_strided_slice %187 {offsets = [0, 64], sizes = [8, 32], strides = [1, 1]} : vector<8x96xf32> to vector<8x32xf32>
    %237 = vector.extract_strided_slice %193 {offsets = [0, 64], sizes = [8, 32], strides = [1, 1]} : vector<8x96xf32> to vector<8x32xf32>
    %238 = arith.mulf %227, %237 : vector<8x32xf32>
    %239 = arith.addf %236, %238 : vector<8x32xf32>
    %240 = math.tanh %239 : vector<8x32xf32>
    %cst_58 = arith.constant 1.000000e+00 : f32
    %241 = vector.broadcast %cst_58 : f32 to vector<8x32xf32>
    %242 = arith.subf %241, %235 : vector<8x32xf32>
    %243 = arith.mulf %242, %240 : vector<8x32xf32>
    %244 = arith.mulf %235, %174 : vector<8x32xf32>
    %245 = arith.addf %243, %244 : vector<8x32xf32>
    %246 = vector.broadcast %c2_i32 : i32 to vector<8x1xi32>
    %247 = arith.cmpi sgt, %0, %246 : vector<8x1xi32>
    %248 = vector.shape_cast %247 : vector<8x1xi1> to vector<8x1xi1>
    %249 = vector.broadcast %248 : vector<8x1xi1> to vector<8x32xi1>
    %250 = arith.select %249, %219, %169 : vector<8x32xi1>, vector<8x32xf32>
    %251 = vector.broadcast %179 : i32 to vector<8x1xi32>
    %252 = arith.cmpi sgt, %0, %251 : vector<8x1xi32>
    %253 = vector.shape_cast %252 : vector<8x1xi1> to vector<8x1xi1>
    %254 = vector.broadcast %253 : vector<8x1xi1> to vector<8x32xi1>
    %255 = arith.select %254, %245, %174 : vector<8x32xi1>, vector<8x32xf32>
    %256 = arith.index_cast %181 : i32 to index
    %c0_59 = arith.constant 0 : index
    %257 = vector.load %arg20[%256, %c0_59] : memref<64x32xf32, #tpu.memory_space<vmem>>, vector<8x32xf32>
    tpu.vector_store %arg20[%256, %c0_59], %250 {strides = array<i32>} : memref<64x32xf32, #tpu.memory_space<vmem>>, vector<8x32xf32>,
    %258 = arith.index_cast %183 : i32 to index
    %c0_60 = arith.constant 0 : index
    %259 = vector.load %arg21[%258, %c0_60] : memref<64x32xf32, #tpu.memory_space<vmem>>, vector<8x32xf32>
    tpu.vector_store %arg21[%258, %c0_60], %255 {strides = array<i32>} : memref<64x32xf32, #tpu.memory_space<vmem>>, vector<8x32xf32>,
    %c3_i32 = arith.constant 3 : i32
    %c7_i32_61 = arith.constant 7 : i32
    %260 = arith.subi %c7_i32_61, %c3_i32 : i32
    %c8_i32_62 = arith.constant 8 : i32
    %261 = arith.muli %c3_i32, %c8_i32_62 : i32
    %262 = tpu.assume_multiple %261, 8 : i32
    %c8_i32_63 = arith.constant 8 : i32
    %263 = arith.muli %260, %c8_i32_63 : i32
    %264 = tpu.assume_multiple %263, 8 : i32
    %265 = arith.index_cast %262 : i32 to index
    %c0_64 = arith.constant 0 : index
    %266 = vector.load %arg18[%265, %c0_64] : memref<64x96xf32, #tpu.memory_space<vmem>>, vector<8x96xf32>
    %267 = arith.index_cast %264 : i32 to index
    %c0_65 = arith.constant 0 : index
    %268 = vector.load %arg19[%267, %c0_65] : memref<64x96xf32, #tpu.memory_space<vmem>>, vector<8x96xf32>
    %269 = tpu.concatenate %250, %255 in 1 : vector<8x32xf32>, vector<8x32xf32> -> vector<8x64xf32>
    %cst_66 = arith.constant dense<0.000000e+00> : vector<8x256xf32>
    %270 = tpu.matmul %269, %14, %cst_66 {dimension_numbers = #tpu.dot_dimension_numbers<[1], [0], [0], [1], [0, 0, 1, 1], [], []>} : vector<8x64xf32>, vector<64x256xf32>, vector<8x256xf32> -> vector<8x256xf32>
    %271 = vector.broadcast %15 : vector<1x256xf32> to vector<8x256xf32>
    %272 = arith.addf %270, %271 : vector<8x256xf32>
    %273 = vector.extract_strided_slice %272 {offsets = [0, 0], sizes = [8, 96], strides = [1, 1]} : vector<8x256xf32> to vector<8x96xf32>
    %274 = vector.extract_strided_slice %272 {offsets = [0, 128], sizes = [8, 96], strides = [1, 1]} : vector<8x256xf32> to vector<8x96xf32>
    %275 = vector.extract_strided_slice %266 {offsets = [0, 0], sizes = [8, 32], strides = [1, 1]} : vector<8x96xf32> to vector<8x32xf32>
    %276 = vector.extract_strided_slice %273 {offsets = [0, 0], sizes = [8, 32], strides = [1, 1]} : vector<8x96xf32> to vector<8x32xf32>
    %277 = arith.addf %275, %276 : vector<8x32xf32>
    %278 = arith.negf %277 : vector<8x32xf32>
    %279 = math.exp %278 : vector<8x32xf32>
    %cst_67 = arith.constant 1.000000e+00 : f32
    %280 = vector.broadcast %cst_67 : f32 to vector<8x32xf32>
    %281 = arith.addf %280, %279 : vector<8x32xf32>
    %282 = arith.divf %280, %281 : vector<8x32xf32>
    %283 = vector.extract_strided_slice %266 {offsets = [0, 32], sizes = [8, 32], strides = [1, 1]} : vector<8x96xf32> to vector<8x32xf32>
    %284 = vector.extract_strided_slice %273 {offsets = [0, 32], sizes = [8, 32], strides = [1, 1]} : vector<8x96xf32> to vector<8x32xf32>
    %285 = arith.addf %283, %284 : vector<8x32xf32>
    %286 = arith.negf %285 : vector<8x32xf32>
    %287 = math.exp %286 : vector<8x32xf32>
    %cst_68 = arith.constant 1.000000e+00 : f32
    %288 = vector.broadcast %cst_68 : f32 to vector<8x32xf32>
    %289 = arith.addf %288, %287 : vector<8x32xf32>
    %290 = arith.divf %288, %289 : vector<8x32xf32>
    %291 = vector.extract_strided_slice %266 {offsets = [0, 64], sizes = [8, 32], strides = [1, 1]} : vector<8x96xf32> to vector<8x32xf32>
    %292 = vector.extract_strided_slice %273 {offsets = [0, 64], sizes = [8, 32], strides = [1, 1]} : vector<8x96xf32> to vector<8x32xf32>
    %293 = arith.mulf %282, %292 : vector<8x32xf32>
    %294 = arith.addf %291, %293 : vector<8x32xf32>
    %295 = math.tanh %294 : vector<8x32xf32>
    %cst_69 = arith.constant 1.000000e+00 : f32
    %296 = vector.broadcast %cst_69 : f32 to vector<8x32xf32>
    %297 = arith.subf %296, %290 : vector<8x32xf32>
    %298 = arith.mulf %297, %295 : vector<8x32xf32>
    %299 = arith.mulf %290, %250 : vector<8x32xf32>
    %300 = arith.addf %298, %299 : vector<8x32xf32>
    %301 = vector.extract_strided_slice %268 {offsets = [0, 0], sizes = [8, 32], strides = [1, 1]} : vector<8x96xf32> to vector<8x32xf32>
    %302 = vector.extract_strided_slice %274 {offsets = [0, 0], sizes = [8, 32], strides = [1, 1]} : vector<8x96xf32> to vector<8x32xf32>
    %303 = arith.addf %301, %302 : vector<8x32xf32>
    %304 = arith.negf %303 : vector<8x32xf32>
    %305 = math.exp %304 : vector<8x32xf32>
    %cst_70 = arith.constant 1.000000e+00 : f32
    %306 = vector.broadcast %cst_70 : f32 to vector<8x32xf32>
    %307 = arith.addf %306, %305 : vector<8x32xf32>
    %308 = arith.divf %306, %307 : vector<8x32xf32>
    %309 = vector.extract_strided_slice %268 {offsets = [0, 32], sizes = [8, 32], strides = [1, 1]} : vector<8x96xf32> to vector<8x32xf32>
    %310 = vector.extract_strided_slice %274 {offsets = [0, 32], sizes = [8, 32], strides = [1, 1]} : vector<8x96xf32> to vector<8x32xf32>
    %311 = arith.addf %309, %310 : vector<8x32xf32>
    %312 = arith.negf %311 : vector<8x32xf32>
    %313 = math.exp %312 : vector<8x32xf32>
    %cst_71 = arith.constant 1.000000e+00 : f32
    %314 = vector.broadcast %cst_71 : f32 to vector<8x32xf32>
    %315 = arith.addf %314, %313 : vector<8x32xf32>
    %316 = arith.divf %314, %315 : vector<8x32xf32>
    %317 = vector.extract_strided_slice %268 {offsets = [0, 64], sizes = [8, 32], strides = [1, 1]} : vector<8x96xf32> to vector<8x32xf32>
    %318 = vector.extract_strided_slice %274 {offsets = [0, 64], sizes = [8, 32], strides = [1, 1]} : vector<8x96xf32> to vector<8x32xf32>
    %319 = arith.mulf %308, %318 : vector<8x32xf32>
    %320 = arith.addf %317, %319 : vector<8x32xf32>
    %321 = math.tanh %320 : vector<8x32xf32>
    %cst_72 = arith.constant 1.000000e+00 : f32
    %322 = vector.broadcast %cst_72 : f32 to vector<8x32xf32>
    %323 = arith.subf %322, %316 : vector<8x32xf32>
    %324 = arith.mulf %323, %321 : vector<8x32xf32>
    %325 = arith.mulf %316, %255 : vector<8x32xf32>
    %326 = arith.addf %324, %325 : vector<8x32xf32>
    %327 = vector.broadcast %c3_i32 : i32 to vector<8x1xi32>
    %328 = arith.cmpi sgt, %0, %327 : vector<8x1xi32>
    %329 = vector.shape_cast %328 : vector<8x1xi1> to vector<8x1xi1>
    %330 = vector.broadcast %329 : vector<8x1xi1> to vector<8x32xi1>
    %331 = arith.select %330, %300, %250 : vector<8x32xi1>, vector<8x32xf32>
    %332 = vector.broadcast %260 : i32 to vector<8x1xi32>
    %333 = arith.cmpi sgt, %0, %332 : vector<8x1xi32>
    %334 = vector.shape_cast %333 : vector<8x1xi1> to vector<8x1xi1>
    %335 = vector.broadcast %334 : vector<8x1xi1> to vector<8x32xi1>
    %336 = arith.select %335, %326, %255 : vector<8x32xi1>, vector<8x32xf32>
    %337 = arith.index_cast %262 : i32 to index
    %c0_73 = arith.constant 0 : index
    %338 = vector.load %arg20[%337, %c0_73] : memref<64x32xf32, #tpu.memory_space<vmem>>, vector<8x32xf32>
    tpu.vector_store %arg20[%337, %c0_73], %331 {strides = array<i32>} : memref<64x32xf32, #tpu.memory_space<vmem>>, vector<8x32xf32>,
    %339 = arith.index_cast %264 : i32 to index
    %c0_74 = arith.constant 0 : index
    %340 = vector.load %arg21[%339, %c0_74] : memref<64x32xf32, #tpu.memory_space<vmem>>, vector<8x32xf32>
    tpu.vector_store %arg21[%339, %c0_74], %336 {strides = array<i32>} : memref<64x32xf32, #tpu.memory_space<vmem>>, vector<8x32xf32>,
    %c4_i32 = arith.constant 4 : i32
    %c7_i32_75 = arith.constant 7 : i32
    %341 = arith.subi %c7_i32_75, %c4_i32 : i32
    %c8_i32_76 = arith.constant 8 : i32
    %342 = arith.muli %c4_i32, %c8_i32_76 : i32
    %343 = tpu.assume_multiple %342, 8 : i32
    %c8_i32_77 = arith.constant 8 : i32
    %344 = arith.muli %341, %c8_i32_77 : i32
    %345 = tpu.assume_multiple %344, 8 : i32
    %346 = arith.index_cast %343 : i32 to index
    %c0_78 = arith.constant 0 : index
    %347 = vector.load %arg18[%346, %c0_78] : memref<64x96xf32, #tpu.memory_space<vmem>>, vector<8x96xf32>
    %348 = arith.index_cast %345 : i32 to index
    %c0_79 = arith.constant 0 : index
    %349 = vector.load %arg19[%348, %c0_79] : memref<64x96xf32, #tpu.memory_space<vmem>>, vector<8x96xf32>
    %350 = tpu.concatenate %331, %336 in 1 : vector<8x32xf32>, vector<8x32xf32> -> vector<8x64xf32>
    %cst_80 = arith.constant dense<0.000000e+00> : vector<8x256xf32>
    %351 = tpu.matmul %350, %14, %cst_80 {dimension_numbers = #tpu.dot_dimension_numbers<[1], [0], [0], [1], [0, 0, 1, 1], [], []>} : vector<8x64xf32>, vector<64x256xf32>, vector<8x256xf32> -> vector<8x256xf32>
    %352 = vector.broadcast %15 : vector<1x256xf32> to vector<8x256xf32>
    %353 = arith.addf %351, %352 : vector<8x256xf32>
    %354 = vector.extract_strided_slice %353 {offsets = [0, 0], sizes = [8, 96], strides = [1, 1]} : vector<8x256xf32> to vector<8x96xf32>
    %355 = vector.extract_strided_slice %353 {offsets = [0, 128], sizes = [8, 96], strides = [1, 1]} : vector<8x256xf32> to vector<8x96xf32>
    %356 = vector.extract_strided_slice %347 {offsets = [0, 0], sizes = [8, 32], strides = [1, 1]} : vector<8x96xf32> to vector<8x32xf32>
    %357 = vector.extract_strided_slice %354 {offsets = [0, 0], sizes = [8, 32], strides = [1, 1]} : vector<8x96xf32> to vector<8x32xf32>
    %358 = arith.addf %356, %357 : vector<8x32xf32>
    %359 = arith.negf %358 : vector<8x32xf32>
    %360 = math.exp %359 : vector<8x32xf32>
    %cst_81 = arith.constant 1.000000e+00 : f32
    %361 = vector.broadcast %cst_81 : f32 to vector<8x32xf32>
    %362 = arith.addf %361, %360 : vector<8x32xf32>
    %363 = arith.divf %361, %362 : vector<8x32xf32>
    %364 = vector.extract_strided_slice %347 {offsets = [0, 32], sizes = [8, 32], strides = [1, 1]} : vector<8x96xf32> to vector<8x32xf32>
    %365 = vector.extract_strided_slice %354 {offsets = [0, 32], sizes = [8, 32], strides = [1, 1]} : vector<8x96xf32> to vector<8x32xf32>
    %366 = arith.addf %364, %365 : vector<8x32xf32>
    %367 = arith.negf %366 : vector<8x32xf32>
    %368 = math.exp %367 : vector<8x32xf32>
    %cst_82 = arith.constant 1.000000e+00 : f32
    %369 = vector.broadcast %cst_82 : f32 to vector<8x32xf32>
    %370 = arith.addf %369, %368 : vector<8x32xf32>
    %371 = arith.divf %369, %370 : vector<8x32xf32>
    %372 = vector.extract_strided_slice %347 {offsets = [0, 64], sizes = [8, 32], strides = [1, 1]} : vector<8x96xf32> to vector<8x32xf32>
    %373 = vector.extract_strided_slice %354 {offsets = [0, 64], sizes = [8, 32], strides = [1, 1]} : vector<8x96xf32> to vector<8x32xf32>
    %374 = arith.mulf %363, %373 : vector<8x32xf32>
    %375 = arith.addf %372, %374 : vector<8x32xf32>
    %376 = math.tanh %375 : vector<8x32xf32>
    %cst_83 = arith.constant 1.000000e+00 : f32
    %377 = vector.broadcast %cst_83 : f32 to vector<8x32xf32>
    %378 = arith.subf %377, %371 : vector<8x32xf32>
    %379 = arith.mulf %378, %376 : vector<8x32xf32>
    %380 = arith.mulf %371, %331 : vector<8x32xf32>
    %381 = arith.addf %379, %380 : vector<8x32xf32>
    %382 = vector.extract_strided_slice %349 {offsets = [0, 0], sizes = [8, 32], strides = [1, 1]} : vector<8x96xf32> to vector<8x32xf32>
    %383 = vector.extract_strided_slice %355 {offsets = [0, 0], sizes = [8, 32], strides = [1, 1]} : vector<8x96xf32> to vector<8x32xf32>
    %384 = arith.addf %382, %383 : vector<8x32xf32>
    %385 = arith.negf %384 : vector<8x32xf32>
    %386 = math.exp %385 : vector<8x32xf32>
    %cst_84 = arith.constant 1.000000e+00 : f32
    %387 = vector.broadcast %cst_84 : f32 to vector<8x32xf32>
    %388 = arith.addf %387, %386 : vector<8x32xf32>
    %389 = arith.divf %387, %388 : vector<8x32xf32>
    %390 = vector.extract_strided_slice %349 {offsets = [0, 32], sizes = [8, 32], strides = [1, 1]} : vector<8x96xf32> to vector<8x32xf32>
    %391 = vector.extract_strided_slice %355 {offsets = [0, 32], sizes = [8, 32], strides = [1, 1]} : vector<8x96xf32> to vector<8x32xf32>
    %392 = arith.addf %390, %391 : vector<8x32xf32>
    %393 = arith.negf %392 : vector<8x32xf32>
    %394 = math.exp %393 : vector<8x32xf32>
    %cst_85 = arith.constant 1.000000e+00 : f32
    %395 = vector.broadcast %cst_85 : f32 to vector<8x32xf32>
    %396 = arith.addf %395, %394 : vector<8x32xf32>
    %397 = arith.divf %395, %396 : vector<8x32xf32>
    %398 = vector.extract_strided_slice %349 {offsets = [0, 64], sizes = [8, 32], strides = [1, 1]} : vector<8x96xf32> to vector<8x32xf32>
    %399 = vector.extract_strided_slice %355 {offsets = [0, 64], sizes = [8, 32], strides = [1, 1]} : vector<8x96xf32> to vector<8x32xf32>
    %400 = arith.mulf %389, %399 : vector<8x32xf32>
    %401 = arith.addf %398, %400 : vector<8x32xf32>
    %402 = math.tanh %401 : vector<8x32xf32>
    %cst_86 = arith.constant 1.000000e+00 : f32
    %403 = vector.broadcast %cst_86 : f32 to vector<8x32xf32>
    %404 = arith.subf %403, %397 : vector<8x32xf32>
    %405 = arith.mulf %404, %402 : vector<8x32xf32>
    %406 = arith.mulf %397, %336 : vector<8x32xf32>
    %407 = arith.addf %405, %406 : vector<8x32xf32>
    %408 = vector.broadcast %c4_i32 : i32 to vector<8x1xi32>
    %409 = arith.cmpi sgt, %0, %408 : vector<8x1xi32>
    %410 = vector.shape_cast %409 : vector<8x1xi1> to vector<8x1xi1>
    %411 = vector.broadcast %410 : vector<8x1xi1> to vector<8x32xi1>
    %412 = arith.select %411, %381, %331 : vector<8x32xi1>, vector<8x32xf32>
    %413 = vector.broadcast %341 : i32 to vector<8x1xi32>
    %414 = arith.cmpi sgt, %0, %413 : vector<8x1xi32>
    %415 = vector.shape_cast %414 : vector<8x1xi1> to vector<8x1xi1>
    %416 = vector.broadcast %415 : vector<8x1xi1> to vector<8x32xi1>
    %417 = arith.select %416, %407, %336 : vector<8x32xi1>, vector<8x32xf32>
    %418 = arith.index_cast %343 : i32 to index
    %c0_87 = arith.constant 0 : index
    %419 = vector.load %arg20[%418, %c0_87] : memref<64x32xf32, #tpu.memory_space<vmem>>, vector<8x32xf32>
    tpu.vector_store %arg20[%418, %c0_87], %412 {strides = array<i32>} : memref<64x32xf32, #tpu.memory_space<vmem>>, vector<8x32xf32>,
    %420 = arith.index_cast %345 : i32 to index
    %c0_88 = arith.constant 0 : index
    %421 = vector.load %arg21[%420, %c0_88] : memref<64x32xf32, #tpu.memory_space<vmem>>, vector<8x32xf32>
    tpu.vector_store %arg21[%420, %c0_88], %417 {strides = array<i32>} : memref<64x32xf32, #tpu.memory_space<vmem>>, vector<8x32xf32>,
    %c5_i32 = arith.constant 5 : i32
    %c7_i32_89 = arith.constant 7 : i32
    %422 = arith.subi %c7_i32_89, %c5_i32 : i32
    %c8_i32_90 = arith.constant 8 : i32
    %423 = arith.muli %c5_i32, %c8_i32_90 : i32
    %424 = tpu.assume_multiple %423, 8 : i32
    %c8_i32_91 = arith.constant 8 : i32
    %425 = arith.muli %422, %c8_i32_91 : i32
    %426 = tpu.assume_multiple %425, 8 : i32
    %427 = arith.index_cast %424 : i32 to index
    %c0_92 = arith.constant 0 : index
    %428 = vector.load %arg18[%427, %c0_92] : memref<64x96xf32, #tpu.memory_space<vmem>>, vector<8x96xf32>
    %429 = arith.index_cast %426 : i32 to index
    %c0_93 = arith.constant 0 : index
    %430 = vector.load %arg19[%429, %c0_93] : memref<64x96xf32, #tpu.memory_space<vmem>>, vector<8x96xf32>
    %431 = tpu.concatenate %412, %417 in 1 : vector<8x32xf32>, vector<8x32xf32> -> vector<8x64xf32>
    %cst_94 = arith.constant dense<0.000000e+00> : vector<8x256xf32>
    %432 = tpu.matmul %431, %14, %cst_94 {dimension_numbers = #tpu.dot_dimension_numbers<[1], [0], [0], [1], [0, 0, 1, 1], [], []>} : vector<8x64xf32>, vector<64x256xf32>, vector<8x256xf32> -> vector<8x256xf32>
    %433 = vector.broadcast %15 : vector<1x256xf32> to vector<8x256xf32>
    %434 = arith.addf %432, %433 : vector<8x256xf32>
    %435 = vector.extract_strided_slice %434 {offsets = [0, 0], sizes = [8, 96], strides = [1, 1]} : vector<8x256xf32> to vector<8x96xf32>
    %436 = vector.extract_strided_slice %434 {offsets = [0, 128], sizes = [8, 96], strides = [1, 1]} : vector<8x256xf32> to vector<8x96xf32>
    %437 = vector.extract_strided_slice %428 {offsets = [0, 0], sizes = [8, 32], strides = [1, 1]} : vector<8x96xf32> to vector<8x32xf32>
    %438 = vector.extract_strided_slice %435 {offsets = [0, 0], sizes = [8, 32], strides = [1, 1]} : vector<8x96xf32> to vector<8x32xf32>
    %439 = arith.addf %437, %438 : vector<8x32xf32>
    %440 = arith.negf %439 : vector<8x32xf32>
    %441 = math.exp %440 : vector<8x32xf32>
    %cst_95 = arith.constant 1.000000e+00 : f32
    %442 = vector.broadcast %cst_95 : f32 to vector<8x32xf32>
    %443 = arith.addf %442, %441 : vector<8x32xf32>
    %444 = arith.divf %442, %443 : vector<8x32xf32>
    %445 = vector.extract_strided_slice %428 {offsets = [0, 32], sizes = [8, 32], strides = [1, 1]} : vector<8x96xf32> to vector<8x32xf32>
    %446 = vector.extract_strided_slice %435 {offsets = [0, 32], sizes = [8, 32], strides = [1, 1]} : vector<8x96xf32> to vector<8x32xf32>
    %447 = arith.addf %445, %446 : vector<8x32xf32>
    %448 = arith.negf %447 : vector<8x32xf32>
    %449 = math.exp %448 : vector<8x32xf32>
    %cst_96 = arith.constant 1.000000e+00 : f32
    %450 = vector.broadcast %cst_96 : f32 to vector<8x32xf32>
    %451 = arith.addf %450, %449 : vector<8x32xf32>
    %452 = arith.divf %450, %451 : vector<8x32xf32>
    %453 = vector.extract_strided_slice %428 {offsets = [0, 64], sizes = [8, 32], strides = [1, 1]} : vector<8x96xf32> to vector<8x32xf32>
    %454 = vector.extract_strided_slice %435 {offsets = [0, 64], sizes = [8, 32], strides = [1, 1]} : vector<8x96xf32> to vector<8x32xf32>
    %455 = arith.mulf %444, %454 : vector<8x32xf32>
    %456 = arith.addf %453, %455 : vector<8x32xf32>
    %457 = math.tanh %456 : vector<8x32xf32>
    %cst_97 = arith.constant 1.000000e+00 : f32
    %458 = vector.broadcast %cst_97 : f32 to vector<8x32xf32>
    %459 = arith.subf %458, %452 : vector<8x32xf32>
    %460 = arith.mulf %459, %457 : vector<8x32xf32>
    %461 = arith.mulf %452, %412 : vector<8x32xf32>
    %462 = arith.addf %460, %461 : vector<8x32xf32>
    %463 = vector.extract_strided_slice %430 {offsets = [0, 0], sizes = [8, 32], strides = [1, 1]} : vector<8x96xf32> to vector<8x32xf32>
    %464 = vector.extract_strided_slice %436 {offsets = [0, 0], sizes = [8, 32], strides = [1, 1]} : vector<8x96xf32> to vector<8x32xf32>
    %465 = arith.addf %463, %464 : vector<8x32xf32>
    %466 = arith.negf %465 : vector<8x32xf32>
    %467 = math.exp %466 : vector<8x32xf32>
    %cst_98 = arith.constant 1.000000e+00 : f32
    %468 = vector.broadcast %cst_98 : f32 to vector<8x32xf32>
    %469 = arith.addf %468, %467 : vector<8x32xf32>
    %470 = arith.divf %468, %469 : vector<8x32xf32>
    %471 = vector.extract_strided_slice %430 {offsets = [0, 32], sizes = [8, 32], strides = [1, 1]} : vector<8x96xf32> to vector<8x32xf32>
    %472 = vector.extract_strided_slice %436 {offsets = [0, 32], sizes = [8, 32], strides = [1, 1]} : vector<8x96xf32> to vector<8x32xf32>
    %473 = arith.addf %471, %472 : vector<8x32xf32>
    %474 = arith.negf %473 : vector<8x32xf32>
    %475 = math.exp %474 : vector<8x32xf32>
    %cst_99 = arith.constant 1.000000e+00 : f32
    %476 = vector.broadcast %cst_99 : f32 to vector<8x32xf32>
    %477 = arith.addf %476, %475 : vector<8x32xf32>
    %478 = arith.divf %476, %477 : vector<8x32xf32>
    %479 = vector.extract_strided_slice %430 {offsets = [0, 64], sizes = [8, 32], strides = [1, 1]} : vector<8x96xf32> to vector<8x32xf32>
    %480 = vector.extract_strided_slice %436 {offsets = [0, 64], sizes = [8, 32], strides = [1, 1]} : vector<8x96xf32> to vector<8x32xf32>
    %481 = arith.mulf %470, %480 : vector<8x32xf32>
    %482 = arith.addf %479, %481 : vector<8x32xf32>
    %483 = math.tanh %482 : vector<8x32xf32>
    %cst_100 = arith.constant 1.000000e+00 : f32
    %484 = vector.broadcast %cst_100 : f32 to vector<8x32xf32>
    %485 = arith.subf %484, %478 : vector<8x32xf32>
    %486 = arith.mulf %485, %483 : vector<8x32xf32>
    %487 = arith.mulf %478, %417 : vector<8x32xf32>
    %488 = arith.addf %486, %487 : vector<8x32xf32>
    %489 = vector.broadcast %c5_i32 : i32 to vector<8x1xi32>
    %490 = arith.cmpi sgt, %0, %489 : vector<8x1xi32>
    %491 = vector.shape_cast %490 : vector<8x1xi1> to vector<8x1xi1>
    %492 = vector.broadcast %491 : vector<8x1xi1> to vector<8x32xi1>
    %493 = arith.select %492, %462, %412 : vector<8x32xi1>, vector<8x32xf32>
    %494 = vector.broadcast %422 : i32 to vector<8x1xi32>
    %495 = arith.cmpi sgt, %0, %494 : vector<8x1xi32>
    %496 = vector.shape_cast %495 : vector<8x1xi1> to vector<8x1xi1>
    %497 = vector.broadcast %496 : vector<8x1xi1> to vector<8x32xi1>
    %498 = arith.select %497, %488, %417 : vector<8x32xi1>, vector<8x32xf32>
    %499 = arith.index_cast %424 : i32 to index
    %c0_101 = arith.constant 0 : index
    %500 = vector.load %arg20[%499, %c0_101] : memref<64x32xf32, #tpu.memory_space<vmem>>, vector<8x32xf32>
    tpu.vector_store %arg20[%499, %c0_101], %493 {strides = array<i32>} : memref<64x32xf32, #tpu.memory_space<vmem>>, vector<8x32xf32>,
    %501 = arith.index_cast %426 : i32 to index
    %c0_102 = arith.constant 0 : index
    %502 = vector.load %arg21[%501, %c0_102] : memref<64x32xf32, #tpu.memory_space<vmem>>, vector<8x32xf32>
    tpu.vector_store %arg21[%501, %c0_102], %498 {strides = array<i32>} : memref<64x32xf32, #tpu.memory_space<vmem>>, vector<8x32xf32>,
    %c6_i32 = arith.constant 6 : i32
    %c7_i32_103 = arith.constant 7 : i32
    %503 = arith.subi %c7_i32_103, %c6_i32 : i32
    %c8_i32_104 = arith.constant 8 : i32
    %504 = arith.muli %c6_i32, %c8_i32_104 : i32
    %505 = tpu.assume_multiple %504, 8 : i32
    %c8_i32_105 = arith.constant 8 : i32
    %506 = arith.muli %503, %c8_i32_105 : i32
    %507 = tpu.assume_multiple %506, 8 : i32
    %508 = arith.index_cast %505 : i32 to index
    %c0_106 = arith.constant 0 : index
    %509 = vector.load %arg18[%508, %c0_106] : memref<64x96xf32, #tpu.memory_space<vmem>>, vector<8x96xf32>
    %510 = arith.index_cast %507 : i32 to index
    %c0_107 = arith.constant 0 : index
    %511 = vector.load %arg19[%510, %c0_107] : memref<64x96xf32, #tpu.memory_space<vmem>>, vector<8x96xf32>
    %512 = tpu.concatenate %493, %498 in 1 : vector<8x32xf32>, vector<8x32xf32> -> vector<8x64xf32>
    %cst_108 = arith.constant dense<0.000000e+00> : vector<8x256xf32>
    %513 = tpu.matmul %512, %14, %cst_108 {dimension_numbers = #tpu.dot_dimension_numbers<[1], [0], [0], [1], [0, 0, 1, 1], [], []>} : vector<8x64xf32>, vector<64x256xf32>, vector<8x256xf32> -> vector<8x256xf32>
    %514 = vector.broadcast %15 : vector<1x256xf32> to vector<8x256xf32>
    %515 = arith.addf %513, %514 : vector<8x256xf32>
    %516 = vector.extract_strided_slice %515 {offsets = [0, 0], sizes = [8, 96], strides = [1, 1]} : vector<8x256xf32> to vector<8x96xf32>
    %517 = vector.extract_strided_slice %515 {offsets = [0, 128], sizes = [8, 96], strides = [1, 1]} : vector<8x256xf32> to vector<8x96xf32>
    %518 = vector.extract_strided_slice %509 {offsets = [0, 0], sizes = [8, 32], strides = [1, 1]} : vector<8x96xf32> to vector<8x32xf32>
    %519 = vector.extract_strided_slice %516 {offsets = [0, 0], sizes = [8, 32], strides = [1, 1]} : vector<8x96xf32> to vector<8x32xf32>
    %520 = arith.addf %518, %519 : vector<8x32xf32>
    %521 = arith.negf %520 : vector<8x32xf32>
    %522 = math.exp %521 : vector<8x32xf32>
    %cst_109 = arith.constant 1.000000e+00 : f32
    %523 = vector.broadcast %cst_109 : f32 to vector<8x32xf32>
    %524 = arith.addf %523, %522 : vector<8x32xf32>
    %525 = arith.divf %523, %524 : vector<8x32xf32>
    %526 = vector.extract_strided_slice %509 {offsets = [0, 32], sizes = [8, 32], strides = [1, 1]} : vector<8x96xf32> to vector<8x32xf32>
    %527 = vector.extract_strided_slice %516 {offsets = [0, 32], sizes = [8, 32], strides = [1, 1]} : vector<8x96xf32> to vector<8x32xf32>
    %528 = arith.addf %526, %527 : vector<8x32xf32>
    %529 = arith.negf %528 : vector<8x32xf32>
    %530 = math.exp %529 : vector<8x32xf32>
    %cst_110 = arith.constant 1.000000e+00 : f32
    %531 = vector.broadcast %cst_110 : f32 to vector<8x32xf32>
    %532 = arith.addf %531, %530 : vector<8x32xf32>
    %533 = arith.divf %531, %532 : vector<8x32xf32>
    %534 = vector.extract_strided_slice %509 {offsets = [0, 64], sizes = [8, 32], strides = [1, 1]} : vector<8x96xf32> to vector<8x32xf32>
    %535 = vector.extract_strided_slice %516 {offsets = [0, 64], sizes = [8, 32], strides = [1, 1]} : vector<8x96xf32> to vector<8x32xf32>
    %536 = arith.mulf %525, %535 : vector<8x32xf32>
    %537 = arith.addf %534, %536 : vector<8x32xf32>
    %538 = math.tanh %537 : vector<8x32xf32>
    %cst_111 = arith.constant 1.000000e+00 : f32
    %539 = vector.broadcast %cst_111 : f32 to vector<8x32xf32>
    %540 = arith.subf %539, %533 : vector<8x32xf32>
    %541 = arith.mulf %540, %538 : vector<8x32xf32>
    %542 = arith.mulf %533, %493 : vector<8x32xf32>
    %543 = arith.addf %541, %542 : vector<8x32xf32>
    %544 = vector.extract_strided_slice %511 {offsets = [0, 0], sizes = [8, 32], strides = [1, 1]} : vector<8x96xf32> to vector<8x32xf32>
    %545 = vector.extract_strided_slice %517 {offsets = [0, 0], sizes = [8, 32], strides = [1, 1]} : vector<8x96xf32> to vector<8x32xf32>
    %546 = arith.addf %544, %545 : vector<8x32xf32>
    %547 = arith.negf %546 : vector<8x32xf32>
    %548 = math.exp %547 : vector<8x32xf32>
    %cst_112 = arith.constant 1.000000e+00 : f32
    %549 = vector.broadcast %cst_112 : f32 to vector<8x32xf32>
    %550 = arith.addf %549, %548 : vector<8x32xf32>
    %551 = arith.divf %549, %550 : vector<8x32xf32>
    %552 = vector.extract_strided_slice %511 {offsets = [0, 32], sizes = [8, 32], strides = [1, 1]} : vector<8x96xf32> to vector<8x32xf32>
    %553 = vector.extract_strided_slice %517 {offsets = [0, 32], sizes = [8, 32], strides = [1, 1]} : vector<8x96xf32> to vector<8x32xf32>
    %554 = arith.addf %552, %553 : vector<8x32xf32>
    %555 = arith.negf %554 : vector<8x32xf32>
    %556 = math.exp %555 : vector<8x32xf32>
    %cst_113 = arith.constant 1.000000e+00 : f32
    %557 = vector.broadcast %cst_113 : f32 to vector<8x32xf32>
    %558 = arith.addf %557, %556 : vector<8x32xf32>
    %559 = arith.divf %557, %558 : vector<8x32xf32>
    %560 = vector.extract_strided_slice %511 {offsets = [0, 64], sizes = [8, 32], strides = [1, 1]} : vector<8x96xf32> to vector<8x32xf32>
    %561 = vector.extract_strided_slice %517 {offsets = [0, 64], sizes = [8, 32], strides = [1, 1]} : vector<8x96xf32> to vector<8x32xf32>
    %562 = arith.mulf %551, %561 : vector<8x32xf32>
    %563 = arith.addf %560, %562 : vector<8x32xf32>
    %564 = math.tanh %563 : vector<8x32xf32>
    %cst_114 = arith.constant 1.000000e+00 : f32
    %565 = vector.broadcast %cst_114 : f32 to vector<8x32xf32>
    %566 = arith.subf %565, %559 : vector<8x32xf32>
    %567 = arith.mulf %566, %564 : vector<8x32xf32>
    %568 = arith.mulf %559, %498 : vector<8x32xf32>
    %569 = arith.addf %567, %568 : vector<8x32xf32>
    %570 = vector.broadcast %c6_i32 : i32 to vector<8x1xi32>
    %571 = arith.cmpi sgt, %0, %570 : vector<8x1xi32>
    %572 = vector.shape_cast %571 : vector<8x1xi1> to vector<8x1xi1>
    %573 = vector.broadcast %572 : vector<8x1xi1> to vector<8x32xi1>
    %574 = arith.select %573, %543, %493 : vector<8x32xi1>, vector<8x32xf32>
    %575 = vector.broadcast %503 : i32 to vector<8x1xi32>
    %576 = arith.cmpi sgt, %0, %575 : vector<8x1xi32>
    %577 = vector.shape_cast %576 : vector<8x1xi1> to vector<8x1xi1>
    %578 = vector.broadcast %577 : vector<8x1xi1> to vector<8x32xi1>
    %579 = arith.select %578, %569, %498 : vector<8x32xi1>, vector<8x32xf32>
    %580 = arith.index_cast %505 : i32 to index
    %c0_115 = arith.constant 0 : index
    %581 = vector.load %arg20[%580, %c0_115] : memref<64x32xf32, #tpu.memory_space<vmem>>, vector<8x32xf32>
    tpu.vector_store %arg20[%580, %c0_115], %574 {strides = array<i32>} : memref<64x32xf32, #tpu.memory_space<vmem>>, vector<8x32xf32>,
    %582 = arith.index_cast %507 : i32 to index
    %c0_116 = arith.constant 0 : index
    %583 = vector.load %arg21[%582, %c0_116] : memref<64x32xf32, #tpu.memory_space<vmem>>, vector<8x32xf32>
    tpu.vector_store %arg21[%582, %c0_116], %579 {strides = array<i32>} : memref<64x32xf32, #tpu.memory_space<vmem>>, vector<8x32xf32>,
    %c7_i32_117 = arith.constant 7 : i32
    %c7_i32_118 = arith.constant 7 : i32
    %584 = arith.subi %c7_i32_118, %c7_i32_117 : i32
    %c8_i32_119 = arith.constant 8 : i32
    %585 = arith.muli %c7_i32_117, %c8_i32_119 : i32
    %586 = tpu.assume_multiple %585, 8 : i32
    %c8_i32_120 = arith.constant 8 : i32
    %587 = arith.muli %584, %c8_i32_120 : i32
    %588 = tpu.assume_multiple %587, 8 : i32
    %589 = arith.index_cast %586 : i32 to index
    %c0_121 = arith.constant 0 : index
    %590 = vector.load %arg18[%589, %c0_121] : memref<64x96xf32, #tpu.memory_space<vmem>>, vector<8x96xf32>
    %591 = arith.index_cast %588 : i32 to index
    %c0_122 = arith.constant 0 : index
    %592 = vector.load %arg19[%591, %c0_122] : memref<64x96xf32, #tpu.memory_space<vmem>>, vector<8x96xf32>
    %593 = tpu.concatenate %574, %579 in 1 : vector<8x32xf32>, vector<8x32xf32> -> vector<8x64xf32>
    %cst_123 = arith.constant dense<0.000000e+00> : vector<8x256xf32>
    %594 = tpu.matmul %593, %14, %cst_123 {dimension_numbers = #tpu.dot_dimension_numbers<[1], [0], [0], [1], [0, 0, 1, 1], [], []>} : vector<8x64xf32>, vector<64x256xf32>, vector<8x256xf32> -> vector<8x256xf32>
    %595 = vector.broadcast %15 : vector<1x256xf32> to vector<8x256xf32>
    %596 = arith.addf %594, %595 : vector<8x256xf32>
    %597 = vector.extract_strided_slice %596 {offsets = [0, 0], sizes = [8, 96], strides = [1, 1]} : vector<8x256xf32> to vector<8x96xf32>
    %598 = vector.extract_strided_slice %596 {offsets = [0, 128], sizes = [8, 96], strides = [1, 1]} : vector<8x256xf32> to vector<8x96xf32>
    %599 = vector.extract_strided_slice %590 {offsets = [0, 0], sizes = [8, 32], strides = [1, 1]} : vector<8x96xf32> to vector<8x32xf32>
    %600 = vector.extract_strided_slice %597 {offsets = [0, 0], sizes = [8, 32], strides = [1, 1]} : vector<8x96xf32> to vector<8x32xf32>
    %601 = arith.addf %599, %600 : vector<8x32xf32>
    %602 = arith.negf %601 : vector<8x32xf32>
    %603 = math.exp %602 : vector<8x32xf32>
    %cst_124 = arith.constant 1.000000e+00 : f32
    %604 = vector.broadcast %cst_124 : f32 to vector<8x32xf32>
    %605 = arith.addf %604, %603 : vector<8x32xf32>
    %606 = arith.divf %604, %605 : vector<8x32xf32>
    %607 = vector.extract_strided_slice %590 {offsets = [0, 32], sizes = [8, 32], strides = [1, 1]} : vector<8x96xf32> to vector<8x32xf32>
    %608 = vector.extract_strided_slice %597 {offsets = [0, 32], sizes = [8, 32], strides = [1, 1]} : vector<8x96xf32> to vector<8x32xf32>
    %609 = arith.addf %607, %608 : vector<8x32xf32>
    %610 = arith.negf %609 : vector<8x32xf32>
    %611 = math.exp %610 : vector<8x32xf32>
    %cst_125 = arith.constant 1.000000e+00 : f32
    %612 = vector.broadcast %cst_125 : f32 to vector<8x32xf32>
    %613 = arith.addf %612, %611 : vector<8x32xf32>
    %614 = arith.divf %612, %613 : vector<8x32xf32>
    %615 = vector.extract_strided_slice %590 {offsets = [0, 64], sizes = [8, 32], strides = [1, 1]} : vector<8x96xf32> to vector<8x32xf32>
    %616 = vector.extract_strided_slice %597 {offsets = [0, 64], sizes = [8, 32], strides = [1, 1]} : vector<8x96xf32> to vector<8x32xf32>
    %617 = arith.mulf %606, %616 : vector<8x32xf32>
    %618 = arith.addf %615, %617 : vector<8x32xf32>
    %619 = math.tanh %618 : vector<8x32xf32>
    %cst_126 = arith.constant 1.000000e+00 : f32
    %620 = vector.broadcast %cst_126 : f32 to vector<8x32xf32>
    %621 = arith.subf %620, %614 : vector<8x32xf32>
    %622 = arith.mulf %621, %619 : vector<8x32xf32>
    %623 = arith.mulf %614, %574 : vector<8x32xf32>
    %624 = arith.addf %622, %623 : vector<8x32xf32>
    %625 = vector.extract_strided_slice %592 {offsets = [0, 0], sizes = [8, 32], strides = [1, 1]} : vector<8x96xf32> to vector<8x32xf32>
    %626 = vector.extract_strided_slice %598 {offsets = [0, 0], sizes = [8, 32], strides = [1, 1]} : vector<8x96xf32> to vector<8x32xf32>
    %627 = arith.addf %625, %626 : vector<8x32xf32>
    %628 = arith.negf %627 : vector<8x32xf32>
    %629 = math.exp %628 : vector<8x32xf32>
    %cst_127 = arith.constant 1.000000e+00 : f32
    %630 = vector.broadcast %cst_127 : f32 to vector<8x32xf32>
    %631 = arith.addf %630, %629 : vector<8x32xf32>
    %632 = arith.divf %630, %631 : vector<8x32xf32>
    %633 = vector.extract_strided_slice %592 {offsets = [0, 32], sizes = [8, 32], strides = [1, 1]} : vector<8x96xf32> to vector<8x32xf32>
    %634 = vector.extract_strided_slice %598 {offsets = [0, 32], sizes = [8, 32], strides = [1, 1]} : vector<8x96xf32> to vector<8x32xf32>
    %635 = arith.addf %633, %634 : vector<8x32xf32>
    %636 = arith.negf %635 : vector<8x32xf32>
    %637 = math.exp %636 : vector<8x32xf32>
    %cst_128 = arith.constant 1.000000e+00 : f32
    %638 = vector.broadcast %cst_128 : f32 to vector<8x32xf32>
    %639 = arith.addf %638, %637 : vector<8x32xf32>
    %640 = arith.divf %638, %639 : vector<8x32xf32>
    %641 = vector.extract_strided_slice %592 {offsets = [0, 64], sizes = [8, 32], strides = [1, 1]} : vector<8x96xf32> to vector<8x32xf32>
    %642 = vector.extract_strided_slice %598 {offsets = [0, 64], sizes = [8, 32], strides = [1, 1]} : vector<8x96xf32> to vector<8x32xf32>
    %643 = arith.mulf %632, %642 : vector<8x32xf32>
    %644 = arith.addf %641, %643 : vector<8x32xf32>
    %645 = math.tanh %644 : vector<8x32xf32>
    %cst_129 = arith.constant 1.000000e+00 : f32
    %646 = vector.broadcast %cst_129 : f32 to vector<8x32xf32>
    %647 = arith.subf %646, %640 : vector<8x32xf32>
    %648 = arith.mulf %647, %645 : vector<8x32xf32>
    %649 = arith.mulf %640, %579 : vector<8x32xf32>
    %650 = arith.addf %648, %649 : vector<8x32xf32>
    %651 = vector.broadcast %c7_i32_117 : i32 to vector<8x1xi32>
    %652 = arith.cmpi sgt, %0, %651 : vector<8x1xi32>
    %653 = vector.shape_cast %652 : vector<8x1xi1> to vector<8x1xi1>
    %654 = vector.broadcast %653 : vector<8x1xi1> to vector<8x32xi1>
    %655 = arith.select %654, %624, %574 : vector<8x32xi1>, vector<8x32xf32>
    %656 = vector.broadcast %584 : i32 to vector<8x1xi32>
    %657 = arith.cmpi sgt, %0, %656 : vector<8x1xi32>
    %658 = vector.shape_cast %657 : vector<8x1xi1> to vector<8x1xi1>
    %659 = vector.broadcast %658 : vector<8x1xi1> to vector<8x32xi1>
    %660 = arith.select %659, %650, %579 : vector<8x32xi1>, vector<8x32xf32>
    %661 = arith.index_cast %586 : i32 to index
    %c0_130 = arith.constant 0 : index
    %662 = vector.load %arg20[%661, %c0_130] : memref<64x32xf32, #tpu.memory_space<vmem>>, vector<8x32xf32>
    tpu.vector_store %arg20[%661, %c0_130], %655 {strides = array<i32>} : memref<64x32xf32, #tpu.memory_space<vmem>>, vector<8x32xf32>,
    %663 = arith.index_cast %588 : i32 to index
    %c0_131 = arith.constant 0 : index
    %664 = vector.load %arg21[%663, %c0_131] : memref<64x32xf32, #tpu.memory_space<vmem>>, vector<8x32xf32>
    tpu.vector_store %arg21[%663, %c0_131], %660 {strides = array<i32>} : memref<64x32xf32, #tpu.memory_space<vmem>>, vector<8x32xf32>,
    %c8_i32_132 = arith.constant 8 : i32
    %c0_133 = arith.constant 0 : index
    %c0_134 = arith.constant 0 : index
    %665 = vector.load %arg20[%c0_133, %c0_134] : memref<64x32xf32, #tpu.memory_space<vmem>>, vector<64x32xf32>
    %c0_135 = arith.constant 0 : index
    %c0_136 = arith.constant 0 : index
    %666 = vector.load %arg21[%c0_135, %c0_136] : memref<64x32xf32, #tpu.memory_space<vmem>>, vector<64x32xf32>
    %c0_137 = arith.constant 0 : index
    %c0_138 = arith.constant 0 : index
    %667 = vector.load %arg8[%c0_137, %c0_138] : memref<64x96xf32, #tpu.memory_space<vmem>>, vector<32x96xf32>
    %cst_139 = arith.constant dense<0.000000e+00> : vector<64x96xf32>
    %668 = tpu.matmul %665, %667, %cst_139 {dimension_numbers = #tpu.dot_dimension_numbers<[1], [0], [0], [1], [0, 0, 1, 1], [], []>} : vector<64x32xf32>, vector<32x96xf32>, vector<64x96xf32> -> vector<64x96xf32>
    %c32 = arith.constant 32 : index
    %c0_140 = arith.constant 0 : index
    %669 = vector.load %arg8[%c32, %c0_140] : memref<64x96xf32, #tpu.memory_space<vmem>>, vector<32x96xf32>
    %cst_141 = arith.constant dense<0.000000e+00> : vector<64x96xf32>
    %670 = tpu.matmul %666, %669, %cst_141 {dimension_numbers = #tpu.dot_dimension_numbers<[1], [0], [0], [1], [0, 0, 1, 1], [], []>} : vector<64x32xf32>, vector<32x96xf32>, vector<64x96xf32> -> vector<64x96xf32>
    %671 = arith.addf %668, %670 : vector<64x96xf32>
    %c0_142 = arith.constant 0 : index
    %c0_143 = arith.constant 0 : index
    %672 = vector.load %arg11[%c0_142, %c0_143] : memref<1x96xf32, #tpu.memory_space<vmem>>, vector<1x96xf32>
    %673 = vector.broadcast %672 : vector<1x96xf32> to vector<64x96xf32>
    %674 = arith.addf %671, %673 : vector<64x96xf32>
    %c0_144 = arith.constant 0 : index
    %c0_145 = arith.constant 0 : index
    %675 = vector.load %arg18[%c0_144, %c0_145] : memref<64x96xf32, #tpu.memory_space<vmem>>, vector<64x96xf32>
    tpu.vector_store %arg18[%c0_144, %c0_145], %674 {strides = array<i32>} : memref<64x96xf32, #tpu.memory_space<vmem>>, vector<64x96xf32>,
    %c0_146 = arith.constant 0 : index
    %c0_147 = arith.constant 0 : index
    %676 = vector.load %arg9[%c0_146, %c0_147] : memref<64x96xf32, #tpu.memory_space<vmem>>, vector<32x96xf32>
    %cst_148 = arith.constant dense<0.000000e+00> : vector<64x96xf32>
    %677 = tpu.matmul %665, %676, %cst_148 {dimension_numbers = #tpu.dot_dimension_numbers<[1], [0], [0], [1], [0, 0, 1, 1], [], []>} : vector<64x32xf32>, vector<32x96xf32>, vector<64x96xf32> -> vector<64x96xf32>
    %c32_149 = arith.constant 32 : index
    %c0_150 = arith.constant 0 : index
    %678 = vector.load %arg9[%c32_149, %c0_150] : memref<64x96xf32, #tpu.memory_space<vmem>>, vector<32x96xf32>
    %cst_151 = arith.constant dense<0.000000e+00> : vector<64x96xf32>
    %679 = tpu.matmul %666, %678, %cst_151 {dimension_numbers = #tpu.dot_dimension_numbers<[1], [0], [0], [1], [0, 0, 1, 1], [], []>} : vector<64x32xf32>, vector<32x96xf32>, vector<64x96xf32> -> vector<64x96xf32>
    %680 = arith.addf %677, %679 : vector<64x96xf32>
    %c0_152 = arith.constant 0 : index
    %c0_153 = arith.constant 0 : index
    %681 = vector.load %arg12[%c0_152, %c0_153] : memref<1x96xf32, #tpu.memory_space<vmem>>, vector<1x96xf32>
    %682 = vector.broadcast %681 : vector<1x96xf32> to vector<64x96xf32>
    %683 = arith.addf %680, %682 : vector<64x96xf32>
    %c0_154 = arith.constant 0 : index
    %c0_155 = arith.constant 0 : index
    %684 = vector.load %arg19[%c0_154, %c0_155] : memref<64x96xf32, #tpu.memory_space<vmem>>, vector<64x96xf32>
    tpu.vector_store %arg19[%c0_154, %c0_155], %683 {strides = array<i32>} : memref<64x96xf32, #tpu.memory_space<vmem>>, vector<64x96xf32>,
    %c0_156 = arith.constant 0 : index
    %c0_157 = arith.constant 0 : index
    %685 = vector.load %arg10[%c0_156, %c0_157] : memref<64x256xf32, #tpu.memory_space<vmem>>, vector<64x256xf32>
    %c0_158 = arith.constant 0 : index
    %c0_159 = arith.constant 0 : index
    %686 = vector.load %arg13[%c0_158, %c0_159] : memref<1x256xf32, #tpu.memory_space<vmem>>, vector<1x256xf32>
    %cst_160 = arith.constant 0.000000e+00 : f32
    %687 = vector.broadcast %cst_160 : f32 to vector<8x32xf32>
    %c0_i32_161 = arith.constant 0 : i32
    %c7_i32_162 = arith.constant 7 : i32
    %688 = arith.subi %c7_i32_162, %c0_i32_161 : i32
    %c8_i32_163 = arith.constant 8 : i32
    %689 = arith.muli %c0_i32_161, %c8_i32_163 : i32
    %690 = tpu.assume_multiple %689, 8 : i32
    %c8_i32_164 = arith.constant 8 : i32
    %691 = arith.muli %688, %c8_i32_164 : i32
    %692 = tpu.assume_multiple %691, 8 : i32
    %693 = arith.index_cast %690 : i32 to index
    %c0_165 = arith.constant 0 : index
    %694 = vector.load %arg18[%693, %c0_165] : memref<64x96xf32, #tpu.memory_space<vmem>>, vector<8x96xf32>
    %695 = arith.index_cast %692 : i32 to index
    %c0_166 = arith.constant 0 : index
    %696 = vector.load %arg19[%695, %c0_166] : memref<64x96xf32, #tpu.memory_space<vmem>>, vector<8x96xf32>
    %697 = tpu.concatenate %687, %687 in 1 : vector<8x32xf32>, vector<8x32xf32> -> vector<8x64xf32>
    %cst_167 = arith.constant dense<0.000000e+00> : vector<8x256xf32>
    %698 = tpu.matmul %697, %685, %cst_167 {dimension_numbers = #tpu.dot_dimension_numbers<[1], [0], [0], [1], [0, 0, 1, 1], [], []>} : vector<8x64xf32>, vector<64x256xf32>, vector<8x256xf32> -> vector<8x256xf32>
    %699 = vector.broadcast %686 : vector<1x256xf32> to vector<8x256xf32>
    %700 = arith.addf %698, %699 : vector<8x256xf32>
    %701 = vector.extract_strided_slice %700 {offsets = [0, 0], sizes = [8, 96], strides = [1, 1]} : vector<8x256xf32> to vector<8x96xf32>
    %702 = vector.extract_strided_slice %700 {offsets = [0, 128], sizes = [8, 96], strides = [1, 1]} : vector<8x256xf32> to vector<8x96xf32>
    %703 = vector.extract_strided_slice %694 {offsets = [0, 0], sizes = [8, 32], strides = [1, 1]} : vector<8x96xf32> to vector<8x32xf32>
    %704 = vector.extract_strided_slice %701 {offsets = [0, 0], sizes = [8, 32], strides = [1, 1]} : vector<8x96xf32> to vector<8x32xf32>
    %705 = arith.addf %703, %704 : vector<8x32xf32>
    %706 = arith.negf %705 : vector<8x32xf32>
    %707 = math.exp %706 : vector<8x32xf32>
    %cst_168 = arith.constant 1.000000e+00 : f32
    %708 = vector.broadcast %cst_168 : f32 to vector<8x32xf32>
    %709 = arith.addf %708, %707 : vector<8x32xf32>
    %710 = arith.divf %708, %709 : vector<8x32xf32>
    %711 = vector.extract_strided_slice %694 {offsets = [0, 32], sizes = [8, 32], strides = [1, 1]} : vector<8x96xf32> to vector<8x32xf32>
    %712 = vector.extract_strided_slice %701 {offsets = [0, 32], sizes = [8, 32], strides = [1, 1]} : vector<8x96xf32> to vector<8x32xf32>
    %713 = arith.addf %711, %712 : vector<8x32xf32>
    %714 = arith.negf %713 : vector<8x32xf32>
    %715 = math.exp %714 : vector<8x32xf32>
    %cst_169 = arith.constant 1.000000e+00 : f32
    %716 = vector.broadcast %cst_169 : f32 to vector<8x32xf32>
    %717 = arith.addf %716, %715 : vector<8x32xf32>
    %718 = arith.divf %716, %717 : vector<8x32xf32>
    %719 = vector.extract_strided_slice %694 {offsets = [0, 64], sizes = [8, 32], strides = [1, 1]} : vector<8x96xf32> to vector<8x32xf32>
    %720 = vector.extract_strided_slice %701 {offsets = [0, 64], sizes = [8, 32], strides = [1, 1]} : vector<8x96xf32> to vector<8x32xf32>
    %721 = arith.mulf %710, %720 : vector<8x32xf32>
    %722 = arith.addf %719, %721 : vector<8x32xf32>
    %723 = math.tanh %722 : vector<8x32xf32>
    %cst_170 = arith.constant 1.000000e+00 : f32
    %724 = vector.broadcast %cst_170 : f32 to vector<8x32xf32>
    %725 = arith.subf %724, %718 : vector<8x32xf32>
    %726 = arith.mulf %725, %723 : vector<8x32xf32>
    %727 = arith.mulf %718, %687 : vector<8x32xf32>
    %728 = arith.addf %726, %727 : vector<8x32xf32>
    %729 = vector.extract_strided_slice %696 {offsets = [0, 0], sizes = [8, 32], strides = [1, 1]} : vector<8x96xf32> to vector<8x32xf32>
    %730 = vector.extract_strided_slice %702 {offsets = [0, 0], sizes = [8, 32], strides = [1, 1]} : vector<8x96xf32> to vector<8x32xf32>
    %731 = arith.addf %729, %730 : vector<8x32xf32>
    %732 = arith.negf %731 : vector<8x32xf32>
    %733 = math.exp %732 : vector<8x32xf32>
    %cst_171 = arith.constant 1.000000e+00 : f32
    %734 = vector.broadcast %cst_171 : f32 to vector<8x32xf32>
    %735 = arith.addf %734, %733 : vector<8x32xf32>
    %736 = arith.divf %734, %735 : vector<8x32xf32>
    %737 = vector.extract_strided_slice %696 {offsets = [0, 32], sizes = [8, 32], strides = [1, 1]} : vector<8x96xf32> to vector<8x32xf32>
    %738 = vector.extract_strided_slice %702 {offsets = [0, 32], sizes = [8, 32], strides = [1, 1]} : vector<8x96xf32> to vector<8x32xf32>
    %739 = arith.addf %737, %738 : vector<8x32xf32>
    %740 = arith.negf %739 : vector<8x32xf32>
    %741 = math.exp %740 : vector<8x32xf32>
    %cst_172 = arith.constant 1.000000e+00 : f32
    %742 = vector.broadcast %cst_172 : f32 to vector<8x32xf32>
    %743 = arith.addf %742, %741 : vector<8x32xf32>
    %744 = arith.divf %742, %743 : vector<8x32xf32>
    %745 = vector.extract_strided_slice %696 {offsets = [0, 64], sizes = [8, 32], strides = [1, 1]} : vector<8x96xf32> to vector<8x32xf32>
    %746 = vector.extract_strided_slice %702 {offsets = [0, 64], sizes = [8, 32], strides = [1, 1]} : vector<8x96xf32> to vector<8x32xf32>
    %747 = arith.mulf %736, %746 : vector<8x32xf32>
    %748 = arith.addf %745, %747 : vector<8x32xf32>
    %749 = math.tanh %748 : vector<8x32xf32>
    %cst_173 = arith.constant 1.000000e+00 : f32
    %750 = vector.broadcast %cst_173 : f32 to vector<8x32xf32>
    %751 = arith.subf %750, %744 : vector<8x32xf32>
    %752 = arith.mulf %751, %749 : vector<8x32xf32>
    %753 = arith.mulf %744, %687 : vector<8x32xf32>
    %754 = arith.addf %752, %753 : vector<8x32xf32>
    %755 = vector.broadcast %c0_i32_161 : i32 to vector<8x1xi32>
    %756 = arith.cmpi sgt, %0, %755 : vector<8x1xi32>
    %757 = vector.shape_cast %756 : vector<8x1xi1> to vector<8x1xi1>
    %758 = vector.broadcast %757 : vector<8x1xi1> to vector<8x32xi1>
    %759 = arith.select %758, %728, %687 : vector<8x32xi1>, vector<8x32xf32>
    %760 = vector.broadcast %688 : i32 to vector<8x1xi32>
    %761 = arith.cmpi sgt, %0, %760 : vector<8x1xi32>
    %762 = vector.shape_cast %761 : vector<8x1xi1> to vector<8x1xi1>
    %763 = vector.broadcast %762 : vector<8x1xi1> to vector<8x32xi1>
    %764 = arith.select %763, %754, %687 : vector<8x32xi1>, vector<8x32xf32>
    %c1_i32_174 = arith.constant 1 : i32
    %c7_i32_175 = arith.constant 7 : i32
    %765 = arith.subi %c7_i32_175, %c1_i32_174 : i32
    %c8_i32_176 = arith.constant 8 : i32
    %766 = arith.muli %c1_i32_174, %c8_i32_176 : i32
    %767 = tpu.assume_multiple %766, 8 : i32
    %c8_i32_177 = arith.constant 8 : i32
    %768 = arith.muli %765, %c8_i32_177 : i32
    %769 = tpu.assume_multiple %768, 8 : i32
    %770 = arith.index_cast %767 : i32 to index
    %c0_178 = arith.constant 0 : index
    %771 = vector.load %arg18[%770, %c0_178] : memref<64x96xf32, #tpu.memory_space<vmem>>, vector<8x96xf32>
    %772 = arith.index_cast %769 : i32 to index
    %c0_179 = arith.constant 0 : index
    %773 = vector.load %arg19[%772, %c0_179] : memref<64x96xf32, #tpu.memory_space<vmem>>, vector<8x96xf32>
    %774 = tpu.concatenate %759, %764 in 1 : vector<8x32xf32>, vector<8x32xf32> -> vector<8x64xf32>
    %cst_180 = arith.constant dense<0.000000e+00> : vector<8x256xf32>
    %775 = tpu.matmul %774, %685, %cst_180 {dimension_numbers = #tpu.dot_dimension_numbers<[1], [0], [0], [1], [0, 0, 1, 1], [], []>} : vector<8x64xf32>, vector<64x256xf32>, vector<8x256xf32> -> vector<8x256xf32>
    %776 = vector.broadcast %686 : vector<1x256xf32> to vector<8x256xf32>
    %777 = arith.addf %775, %776 : vector<8x256xf32>
    %778 = vector.extract_strided_slice %777 {offsets = [0, 0], sizes = [8, 96], strides = [1, 1]} : vector<8x256xf32> to vector<8x96xf32>
    %779 = vector.extract_strided_slice %777 {offsets = [0, 128], sizes = [8, 96], strides = [1, 1]} : vector<8x256xf32> to vector<8x96xf32>
    %780 = vector.extract_strided_slice %771 {offsets = [0, 0], sizes = [8, 32], strides = [1, 1]} : vector<8x96xf32> to vector<8x32xf32>
    %781 = vector.extract_strided_slice %778 {offsets = [0, 0], sizes = [8, 32], strides = [1, 1]} : vector<8x96xf32> to vector<8x32xf32>
    %782 = arith.addf %780, %781 : vector<8x32xf32>
    %783 = arith.negf %782 : vector<8x32xf32>
    %784 = math.exp %783 : vector<8x32xf32>
    %cst_181 = arith.constant 1.000000e+00 : f32
    %785 = vector.broadcast %cst_181 : f32 to vector<8x32xf32>
    %786 = arith.addf %785, %784 : vector<8x32xf32>
    %787 = arith.divf %785, %786 : vector<8x32xf32>
    %788 = vector.extract_strided_slice %771 {offsets = [0, 32], sizes = [8, 32], strides = [1, 1]} : vector<8x96xf32> to vector<8x32xf32>
    %789 = vector.extract_strided_slice %778 {offsets = [0, 32], sizes = [8, 32], strides = [1, 1]} : vector<8x96xf32> to vector<8x32xf32>
    %790 = arith.addf %788, %789 : vector<8x32xf32>
    %791 = arith.negf %790 : vector<8x32xf32>
    %792 = math.exp %791 : vector<8x32xf32>
    %cst_182 = arith.constant 1.000000e+00 : f32
    %793 = vector.broadcast %cst_182 : f32 to vector<8x32xf32>
    %794 = arith.addf %793, %792 : vector<8x32xf32>
    %795 = arith.divf %793, %794 : vector<8x32xf32>
    %796 = vector.extract_strided_slice %771 {offsets = [0, 64], sizes = [8, 32], strides = [1, 1]} : vector<8x96xf32> to vector<8x32xf32>
    %797 = vector.extract_strided_slice %778 {offsets = [0, 64], sizes = [8, 32], strides = [1, 1]} : vector<8x96xf32> to vector<8x32xf32>
    %798 = arith.mulf %787, %797 : vector<8x32xf32>
    %799 = arith.addf %796, %798 : vector<8x32xf32>
    %800 = math.tanh %799 : vector<8x32xf32>
    %cst_183 = arith.constant 1.000000e+00 : f32
    %801 = vector.broadcast %cst_183 : f32 to vector<8x32xf32>
    %802 = arith.subf %801, %795 : vector<8x32xf32>
    %803 = arith.mulf %802, %800 : vector<8x32xf32>
    %804 = arith.mulf %795, %759 : vector<8x32xf32>
    %805 = arith.addf %803, %804 : vector<8x32xf32>
    %806 = vector.extract_strided_slice %773 {offsets = [0, 0], sizes = [8, 32], strides = [1, 1]} : vector<8x96xf32> to vector<8x32xf32>
    %807 = vector.extract_strided_slice %779 {offsets = [0, 0], sizes = [8, 32], strides = [1, 1]} : vector<8x96xf32> to vector<8x32xf32>
    %808 = arith.addf %806, %807 : vector<8x32xf32>
    %809 = arith.negf %808 : vector<8x32xf32>
    %810 = math.exp %809 : vector<8x32xf32>
    %cst_184 = arith.constant 1.000000e+00 : f32
    %811 = vector.broadcast %cst_184 : f32 to vector<8x32xf32>
    %812 = arith.addf %811, %810 : vector<8x32xf32>
    %813 = arith.divf %811, %812 : vector<8x32xf32>
    %814 = vector.extract_strided_slice %773 {offsets = [0, 32], sizes = [8, 32], strides = [1, 1]} : vector<8x96xf32> to vector<8x32xf32>
    %815 = vector.extract_strided_slice %779 {offsets = [0, 32], sizes = [8, 32], strides = [1, 1]} : vector<8x96xf32> to vector<8x32xf32>
    %816 = arith.addf %814, %815 : vector<8x32xf32>
    %817 = arith.negf %816 : vector<8x32xf32>
    %818 = math.exp %817 : vector<8x32xf32>
    %cst_185 = arith.constant 1.000000e+00 : f32
    %819 = vector.broadcast %cst_185 : f32 to vector<8x32xf32>
    %820 = arith.addf %819, %818 : vector<8x32xf32>
    %821 = arith.divf %819, %820 : vector<8x32xf32>
    %822 = vector.extract_strided_slice %773 {offsets = [0, 64], sizes = [8, 32], strides = [1, 1]} : vector<8x96xf32> to vector<8x32xf32>
    %823 = vector.extract_strided_slice %779 {offsets = [0, 64], sizes = [8, 32], strides = [1, 1]} : vector<8x96xf32> to vector<8x32xf32>
    %824 = arith.mulf %813, %823 : vector<8x32xf32>
    %825 = arith.addf %822, %824 : vector<8x32xf32>
    %826 = math.tanh %825 : vector<8x32xf32>
    %cst_186 = arith.constant 1.000000e+00 : f32
    %827 = vector.broadcast %cst_186 : f32 to vector<8x32xf32>
    %828 = arith.subf %827, %821 : vector<8x32xf32>
    %829 = arith.mulf %828, %826 : vector<8x32xf32>
    %830 = arith.mulf %821, %764 : vector<8x32xf32>
    %831 = arith.addf %829, %830 : vector<8x32xf32>
    %832 = vector.broadcast %c1_i32_174 : i32 to vector<8x1xi32>
    %833 = arith.cmpi sgt, %0, %832 : vector<8x1xi32>
    %834 = vector.shape_cast %833 : vector<8x1xi1> to vector<8x1xi1>
    %835 = vector.broadcast %834 : vector<8x1xi1> to vector<8x32xi1>
    %836 = arith.select %835, %805, %759 : vector<8x32xi1>, vector<8x32xf32>
    %837 = vector.broadcast %765 : i32 to vector<8x1xi32>
    %838 = arith.cmpi sgt, %0, %837 : vector<8x1xi32>
    %839 = vector.shape_cast %838 : vector<8x1xi1> to vector<8x1xi1>
    %840 = vector.broadcast %839 : vector<8x1xi1> to vector<8x32xi1>
    %841 = arith.select %840, %831, %764 : vector<8x32xi1>, vector<8x32xf32>
    %c2_i32_187 = arith.constant 2 : i32
    %c7_i32_188 = arith.constant 7 : i32
    %842 = arith.subi %c7_i32_188, %c2_i32_187 : i32
    %c8_i32_189 = arith.constant 8 : i32
    %843 = arith.muli %c2_i32_187, %c8_i32_189 : i32
    %844 = tpu.assume_multiple %843, 8 : i32
    %c8_i32_190 = arith.constant 8 : i32
    %845 = arith.muli %842, %c8_i32_190 : i32
    %846 = tpu.assume_multiple %845, 8 : i32
    %847 = arith.index_cast %844 : i32 to index
    %c0_191 = arith.constant 0 : index
    %848 = vector.load %arg18[%847, %c0_191] : memref<64x96xf32, #tpu.memory_space<vmem>>, vector<8x96xf32>
    %849 = arith.index_cast %846 : i32 to index
    %c0_192 = arith.constant 0 : index
    %850 = vector.load %arg19[%849, %c0_192] : memref<64x96xf32, #tpu.memory_space<vmem>>, vector<8x96xf32>
    %851 = tpu.concatenate %836, %841 in 1 : vector<8x32xf32>, vector<8x32xf32> -> vector<8x64xf32>
    %cst_193 = arith.constant dense<0.000000e+00> : vector<8x256xf32>
    %852 = tpu.matmul %851, %685, %cst_193 {dimension_numbers = #tpu.dot_dimension_numbers<[1], [0], [0], [1], [0, 0, 1, 1], [], []>} : vector<8x64xf32>, vector<64x256xf32>, vector<8x256xf32> -> vector<8x256xf32>
    %853 = vector.broadcast %686 : vector<1x256xf32> to vector<8x256xf32>
    %854 = arith.addf %852, %853 : vector<8x256xf32>
    %855 = vector.extract_strided_slice %854 {offsets = [0, 0], sizes = [8, 96], strides = [1, 1]} : vector<8x256xf32> to vector<8x96xf32>
    %856 = vector.extract_strided_slice %854 {offsets = [0, 128], sizes = [8, 96], strides = [1, 1]} : vector<8x256xf32> to vector<8x96xf32>
    %857 = vector.extract_strided_slice %848 {offsets = [0, 0], sizes = [8, 32], strides = [1, 1]} : vector<8x96xf32> to vector<8x32xf32>
    %858 = vector.extract_strided_slice %855 {offsets = [0, 0], sizes = [8, 32], strides = [1, 1]} : vector<8x96xf32> to vector<8x32xf32>
    %859 = arith.addf %857, %858 : vector<8x32xf32>
    %860 = arith.negf %859 : vector<8x32xf32>
    %861 = math.exp %860 : vector<8x32xf32>
    %cst_194 = arith.constant 1.000000e+00 : f32
    %862 = vector.broadcast %cst_194 : f32 to vector<8x32xf32>
    %863 = arith.addf %862, %861 : vector<8x32xf32>
    %864 = arith.divf %862, %863 : vector<8x32xf32>
    %865 = vector.extract_strided_slice %848 {offsets = [0, 32], sizes = [8, 32], strides = [1, 1]} : vector<8x96xf32> to vector<8x32xf32>
    %866 = vector.extract_strided_slice %855 {offsets = [0, 32], sizes = [8, 32], strides = [1, 1]} : vector<8x96xf32> to vector<8x32xf32>
    %867 = arith.addf %865, %866 : vector<8x32xf32>
    %868 = arith.negf %867 : vector<8x32xf32>
    %869 = math.exp %868 : vector<8x32xf32>
    %cst_195 = arith.constant 1.000000e+00 : f32
    %870 = vector.broadcast %cst_195 : f32 to vector<8x32xf32>
    %871 = arith.addf %870, %869 : vector<8x32xf32>
    %872 = arith.divf %870, %871 : vector<8x32xf32>
    %873 = vector.extract_strided_slice %848 {offsets = [0, 64], sizes = [8, 32], strides = [1, 1]} : vector<8x96xf32> to vector<8x32xf32>
    %874 = vector.extract_strided_slice %855 {offsets = [0, 64], sizes = [8, 32], strides = [1, 1]} : vector<8x96xf32> to vector<8x32xf32>
    %875 = arith.mulf %864, %874 : vector<8x32xf32>
    %876 = arith.addf %873, %875 : vector<8x32xf32>
    %877 = math.tanh %876 : vector<8x32xf32>
    %cst_196 = arith.constant 1.000000e+00 : f32
    %878 = vector.broadcast %cst_196 : f32 to vector<8x32xf32>
    %879 = arith.subf %878, %872 : vector<8x32xf32>
    %880 = arith.mulf %879, %877 : vector<8x32xf32>
    %881 = arith.mulf %872, %836 : vector<8x32xf32>
    %882 = arith.addf %880, %881 : vector<8x32xf32>
    %883 = vector.extract_strided_slice %850 {offsets = [0, 0], sizes = [8, 32], strides = [1, 1]} : vector<8x96xf32> to vector<8x32xf32>
    %884 = vector.extract_strided_slice %856 {offsets = [0, 0], sizes = [8, 32], strides = [1, 1]} : vector<8x96xf32> to vector<8x32xf32>
    %885 = arith.addf %883, %884 : vector<8x32xf32>
    %886 = arith.negf %885 : vector<8x32xf32>
    %887 = math.exp %886 : vector<8x32xf32>
    %cst_197 = arith.constant 1.000000e+00 : f32
    %888 = vector.broadcast %cst_197 : f32 to vector<8x32xf32>
    %889 = arith.addf %888, %887 : vector<8x32xf32>
    %890 = arith.divf %888, %889 : vector<8x32xf32>
    %891 = vector.extract_strided_slice %850 {offsets = [0, 32], sizes = [8, 32], strides = [1, 1]} : vector<8x96xf32> to vector<8x32xf32>
    %892 = vector.extract_strided_slice %856 {offsets = [0, 32], sizes = [8, 32], strides = [1, 1]} : vector<8x96xf32> to vector<8x32xf32>
    %893 = arith.addf %891, %892 : vector<8x32xf32>
    %894 = arith.negf %893 : vector<8x32xf32>
    %895 = math.exp %894 : vector<8x32xf32>
    %cst_198 = arith.constant 1.000000e+00 : f32
    %896 = vector.broadcast %cst_198 : f32 to vector<8x32xf32>
    %897 = arith.addf %896, %895 : vector<8x32xf32>
    %898 = arith.divf %896, %897 : vector<8x32xf32>
    %899 = vector.extract_strided_slice %850 {offsets = [0, 64], sizes = [8, 32], strides = [1, 1]} : vector<8x96xf32> to vector<8x32xf32>
    %900 = vector.extract_strided_slice %856 {offsets = [0, 64], sizes = [8, 32], strides = [1, 1]} : vector<8x96xf32> to vector<8x32xf32>
    %901 = arith.mulf %890, %900 : vector<8x32xf32>
    %902 = arith.addf %899, %901 : vector<8x32xf32>
    %903 = math.tanh %902 : vector<8x32xf32>
    %cst_199 = arith.constant 1.000000e+00 : f32
    %904 = vector.broadcast %cst_199 : f32 to vector<8x32xf32>
    %905 = arith.subf %904, %898 : vector<8x32xf32>
    %906 = arith.mulf %905, %903 : vector<8x32xf32>
    %907 = arith.mulf %898, %841 : vector<8x32xf32>
    %908 = arith.addf %906, %907 : vector<8x32xf32>
    %909 = vector.broadcast %c2_i32_187 : i32 to vector<8x1xi32>
    %910 = arith.cmpi sgt, %0, %909 : vector<8x1xi32>
    %911 = vector.shape_cast %910 : vector<8x1xi1> to vector<8x1xi1>
    %912 = vector.broadcast %911 : vector<8x1xi1> to vector<8x32xi1>
    %913 = arith.select %912, %882, %836 : vector<8x32xi1>, vector<8x32xf32>
    %914 = vector.broadcast %842 : i32 to vector<8x1xi32>
    %915 = arith.cmpi sgt, %0, %914 : vector<8x1xi32>
    %916 = vector.shape_cast %915 : vector<8x1xi1> to vector<8x1xi1>
    %917 = vector.broadcast %916 : vector<8x1xi1> to vector<8x32xi1>
    %918 = arith.select %917, %908, %841 : vector<8x32xi1>, vector<8x32xf32>
    %c3_i32_200 = arith.constant 3 : i32
    %c7_i32_201 = arith.constant 7 : i32
    %919 = arith.subi %c7_i32_201, %c3_i32_200 : i32
    %c8_i32_202 = arith.constant 8 : i32
    %920 = arith.muli %c3_i32_200, %c8_i32_202 : i32
    %921 = tpu.assume_multiple %920, 8 : i32
    %c8_i32_203 = arith.constant 8 : i32
    %922 = arith.muli %919, %c8_i32_203 : i32
    %923 = tpu.assume_multiple %922, 8 : i32
    %924 = arith.index_cast %921 : i32 to index
    %c0_204 = arith.constant 0 : index
    %925 = vector.load %arg18[%924, %c0_204] : memref<64x96xf32, #tpu.memory_space<vmem>>, vector<8x96xf32>
    %926 = arith.index_cast %923 : i32 to index
    %c0_205 = arith.constant 0 : index
    %927 = vector.load %arg19[%926, %c0_205] : memref<64x96xf32, #tpu.memory_space<vmem>>, vector<8x96xf32>
    %928 = tpu.concatenate %913, %918 in 1 : vector<8x32xf32>, vector<8x32xf32> -> vector<8x64xf32>
    %cst_206 = arith.constant dense<0.000000e+00> : vector<8x256xf32>
    %929 = tpu.matmul %928, %685, %cst_206 {dimension_numbers = #tpu.dot_dimension_numbers<[1], [0], [0], [1], [0, 0, 1, 1], [], []>} : vector<8x64xf32>, vector<64x256xf32>, vector<8x256xf32> -> vector<8x256xf32>
    %930 = vector.broadcast %686 : vector<1x256xf32> to vector<8x256xf32>
    %931 = arith.addf %929, %930 : vector<8x256xf32>
    %932 = vector.extract_strided_slice %931 {offsets = [0, 0], sizes = [8, 96], strides = [1, 1]} : vector<8x256xf32> to vector<8x96xf32>
    %933 = vector.extract_strided_slice %931 {offsets = [0, 128], sizes = [8, 96], strides = [1, 1]} : vector<8x256xf32> to vector<8x96xf32>
    %934 = vector.extract_strided_slice %925 {offsets = [0, 0], sizes = [8, 32], strides = [1, 1]} : vector<8x96xf32> to vector<8x32xf32>
    %935 = vector.extract_strided_slice %932 {offsets = [0, 0], sizes = [8, 32], strides = [1, 1]} : vector<8x96xf32> to vector<8x32xf32>
    %936 = arith.addf %934, %935 : vector<8x32xf32>
    %937 = arith.negf %936 : vector<8x32xf32>
    %938 = math.exp %937 : vector<8x32xf32>
    %cst_207 = arith.constant 1.000000e+00 : f32
    %939 = vector.broadcast %cst_207 : f32 to vector<8x32xf32>
    %940 = arith.addf %939, %938 : vector<8x32xf32>
    %941 = arith.divf %939, %940 : vector<8x32xf32>
    %942 = vector.extract_strided_slice %925 {offsets = [0, 32], sizes = [8, 32], strides = [1, 1]} : vector<8x96xf32> to vector<8x32xf32>
    %943 = vector.extract_strided_slice %932 {offsets = [0, 32], sizes = [8, 32], strides = [1, 1]} : vector<8x96xf32> to vector<8x32xf32>
    %944 = arith.addf %942, %943 : vector<8x32xf32>
    %945 = arith.negf %944 : vector<8x32xf32>
    %946 = math.exp %945 : vector<8x32xf32>
    %cst_208 = arith.constant 1.000000e+00 : f32
    %947 = vector.broadcast %cst_208 : f32 to vector<8x32xf32>
    %948 = arith.addf %947, %946 : vector<8x32xf32>
    %949 = arith.divf %947, %948 : vector<8x32xf32>
    %950 = vector.extract_strided_slice %925 {offsets = [0, 64], sizes = [8, 32], strides = [1, 1]} : vector<8x96xf32> to vector<8x32xf32>
    %951 = vector.extract_strided_slice %932 {offsets = [0, 64], sizes = [8, 32], strides = [1, 1]} : vector<8x96xf32> to vector<8x32xf32>
    %952 = arith.mulf %941, %951 : vector<8x32xf32>
    %953 = arith.addf %950, %952 : vector<8x32xf32>
    %954 = math.tanh %953 : vector<8x32xf32>
    %cst_209 = arith.constant 1.000000e+00 : f32
    %955 = vector.broadcast %cst_209 : f32 to vector<8x32xf32>
    %956 = arith.subf %955, %949 : vector<8x32xf32>
    %957 = arith.mulf %956, %954 : vector<8x32xf32>
    %958 = arith.mulf %949, %913 : vector<8x32xf32>
    %959 = arith.addf %957, %958 : vector<8x32xf32>
    %960 = vector.extract_strided_slice %927 {offsets = [0, 0], sizes = [8, 32], strides = [1, 1]} : vector<8x96xf32> to vector<8x32xf32>
    %961 = vector.extract_strided_slice %933 {offsets = [0, 0], sizes = [8, 32], strides = [1, 1]} : vector<8x96xf32> to vector<8x32xf32>
    %962 = arith.addf %960, %961 : vector<8x32xf32>
    %963 = arith.negf %962 : vector<8x32xf32>
    %964 = math.exp %963 : vector<8x32xf32>
    %cst_210 = arith.constant 1.000000e+00 : f32
    %965 = vector.broadcast %cst_210 : f32 to vector<8x32xf32>
    %966 = arith.addf %965, %964 : vector<8x32xf32>
    %967 = arith.divf %965, %966 : vector<8x32xf32>
    %968 = vector.extract_strided_slice %927 {offsets = [0, 32], sizes = [8, 32], strides = [1, 1]} : vector<8x96xf32> to vector<8x32xf32>
    %969 = vector.extract_strided_slice %933 {offsets = [0, 32], sizes = [8, 32], strides = [1, 1]} : vector<8x96xf32> to vector<8x32xf32>
    %970 = arith.addf %968, %969 : vector<8x32xf32>
    %971 = arith.negf %970 : vector<8x32xf32>
    %972 = math.exp %971 : vector<8x32xf32>
    %cst_211 = arith.constant 1.000000e+00 : f32
    %973 = vector.broadcast %cst_211 : f32 to vector<8x32xf32>
    %974 = arith.addf %973, %972 : vector<8x32xf32>
    %975 = arith.divf %973, %974 : vector<8x32xf32>
    %976 = vector.extract_strided_slice %927 {offsets = [0, 64], sizes = [8, 32], strides = [1, 1]} : vector<8x96xf32> to vector<8x32xf32>
    %977 = vector.extract_strided_slice %933 {offsets = [0, 64], sizes = [8, 32], strides = [1, 1]} : vector<8x96xf32> to vector<8x32xf32>
    %978 = arith.mulf %967, %977 : vector<8x32xf32>
    %979 = arith.addf %976, %978 : vector<8x32xf32>
    %980 = math.tanh %979 : vector<8x32xf32>
    %cst_212 = arith.constant 1.000000e+00 : f32
    %981 = vector.broadcast %cst_212 : f32 to vector<8x32xf32>
    %982 = arith.subf %981, %975 : vector<8x32xf32>
    %983 = arith.mulf %982, %980 : vector<8x32xf32>
    %984 = arith.mulf %975, %918 : vector<8x32xf32>
    %985 = arith.addf %983, %984 : vector<8x32xf32>
    %986 = vector.broadcast %c3_i32_200 : i32 to vector<8x1xi32>
    %987 = arith.cmpi sgt, %0, %986 : vector<8x1xi32>
    %988 = vector.shape_cast %987 : vector<8x1xi1> to vector<8x1xi1>
    %989 = vector.broadcast %988 : vector<8x1xi1> to vector<8x32xi1>
    %990 = arith.select %989, %959, %913 : vector<8x32xi1>, vector<8x32xf32>
    %991 = vector.broadcast %919 : i32 to vector<8x1xi32>
    %992 = arith.cmpi sgt, %0, %991 : vector<8x1xi32>
    %993 = vector.shape_cast %992 : vector<8x1xi1> to vector<8x1xi1>
    %994 = vector.broadcast %993 : vector<8x1xi1> to vector<8x32xi1>
    %995 = arith.select %994, %985, %918 : vector<8x32xi1>, vector<8x32xf32>
    %c4_i32_213 = arith.constant 4 : i32
    %c7_i32_214 = arith.constant 7 : i32
    %996 = arith.subi %c7_i32_214, %c4_i32_213 : i32
    %c8_i32_215 = arith.constant 8 : i32
    %997 = arith.muli %c4_i32_213, %c8_i32_215 : i32
    %998 = tpu.assume_multiple %997, 8 : i32
    %c8_i32_216 = arith.constant 8 : i32
    %999 = arith.muli %996, %c8_i32_216 : i32
    %1000 = tpu.assume_multiple %999, 8 : i32
    %1001 = arith.index_cast %998 : i32 to index
    %c0_217 = arith.constant 0 : index
    %1002 = vector.load %arg18[%1001, %c0_217] : memref<64x96xf32, #tpu.memory_space<vmem>>, vector<8x96xf32>
    %1003 = arith.index_cast %1000 : i32 to index
    %c0_218 = arith.constant 0 : index
    %1004 = vector.load %arg19[%1003, %c0_218] : memref<64x96xf32, #tpu.memory_space<vmem>>, vector<8x96xf32>
    %1005 = tpu.concatenate %990, %995 in 1 : vector<8x32xf32>, vector<8x32xf32> -> vector<8x64xf32>
    %cst_219 = arith.constant dense<0.000000e+00> : vector<8x256xf32>
    %1006 = tpu.matmul %1005, %685, %cst_219 {dimension_numbers = #tpu.dot_dimension_numbers<[1], [0], [0], [1], [0, 0, 1, 1], [], []>} : vector<8x64xf32>, vector<64x256xf32>, vector<8x256xf32> -> vector<8x256xf32>
    %1007 = vector.broadcast %686 : vector<1x256xf32> to vector<8x256xf32>
    %1008 = arith.addf %1006, %1007 : vector<8x256xf32>
    %1009 = vector.extract_strided_slice %1008 {offsets = [0, 0], sizes = [8, 96], strides = [1, 1]} : vector<8x256xf32> to vector<8x96xf32>
    %1010 = vector.extract_strided_slice %1008 {offsets = [0, 128], sizes = [8, 96], strides = [1, 1]} : vector<8x256xf32> to vector<8x96xf32>
    %1011 = vector.extract_strided_slice %1002 {offsets = [0, 0], sizes = [8, 32], strides = [1, 1]} : vector<8x96xf32> to vector<8x32xf32>
    %1012 = vector.extract_strided_slice %1009 {offsets = [0, 0], sizes = [8, 32], strides = [1, 1]} : vector<8x96xf32> to vector<8x32xf32>
    %1013 = arith.addf %1011, %1012 : vector<8x32xf32>
    %1014 = arith.negf %1013 : vector<8x32xf32>
    %1015 = math.exp %1014 : vector<8x32xf32>
    %cst_220 = arith.constant 1.000000e+00 : f32
    %1016 = vector.broadcast %cst_220 : f32 to vector<8x32xf32>
    %1017 = arith.addf %1016, %1015 : vector<8x32xf32>
    %1018 = arith.divf %1016, %1017 : vector<8x32xf32>
    %1019 = vector.extract_strided_slice %1002 {offsets = [0, 32], sizes = [8, 32], strides = [1, 1]} : vector<8x96xf32> to vector<8x32xf32>
    %1020 = vector.extract_strided_slice %1009 {offsets = [0, 32], sizes = [8, 32], strides = [1, 1]} : vector<8x96xf32> to vector<8x32xf32>
    %1021 = arith.addf %1019, %1020 : vector<8x32xf32>
    %1022 = arith.negf %1021 : vector<8x32xf32>
    %1023 = math.exp %1022 : vector<8x32xf32>
    %cst_221 = arith.constant 1.000000e+00 : f32
    %1024 = vector.broadcast %cst_221 : f32 to vector<8x32xf32>
    %1025 = arith.addf %1024, %1023 : vector<8x32xf32>
    %1026 = arith.divf %1024, %1025 : vector<8x32xf32>
    %1027 = vector.extract_strided_slice %1002 {offsets = [0, 64], sizes = [8, 32], strides = [1, 1]} : vector<8x96xf32> to vector<8x32xf32>
    %1028 = vector.extract_strided_slice %1009 {offsets = [0, 64], sizes = [8, 32], strides = [1, 1]} : vector<8x96xf32> to vector<8x32xf32>
    %1029 = arith.mulf %1018, %1028 : vector<8x32xf32>
    %1030 = arith.addf %1027, %1029 : vector<8x32xf32>
    %1031 = math.tanh %1030 : vector<8x32xf32>
    %cst_222 = arith.constant 1.000000e+00 : f32
    %1032 = vector.broadcast %cst_222 : f32 to vector<8x32xf32>
    %1033 = arith.subf %1032, %1026 : vector<8x32xf32>
    %1034 = arith.mulf %1033, %1031 : vector<8x32xf32>
    %1035 = arith.mulf %1026, %990 : vector<8x32xf32>
    %1036 = arith.addf %1034, %1035 : vector<8x32xf32>
    %1037 = vector.extract_strided_slice %1004 {offsets = [0, 0], sizes = [8, 32], strides = [1, 1]} : vector<8x96xf32> to vector<8x32xf32>
    %1038 = vector.extract_strided_slice %1010 {offsets = [0, 0], sizes = [8, 32], strides = [1, 1]} : vector<8x96xf32> to vector<8x32xf32>
    %1039 = arith.addf %1037, %1038 : vector<8x32xf32>
    %1040 = arith.negf %1039 : vector<8x32xf32>
    %1041 = math.exp %1040 : vector<8x32xf32>
    %cst_223 = arith.constant 1.000000e+00 : f32
    %1042 = vector.broadcast %cst_223 : f32 to vector<8x32xf32>
    %1043 = arith.addf %1042, %1041 : vector<8x32xf32>
    %1044 = arith.divf %1042, %1043 : vector<8x32xf32>
    %1045 = vector.extract_strided_slice %1004 {offsets = [0, 32], sizes = [8, 32], strides = [1, 1]} : vector<8x96xf32> to vector<8x32xf32>
    %1046 = vector.extract_strided_slice %1010 {offsets = [0, 32], sizes = [8, 32], strides = [1, 1]} : vector<8x96xf32> to vector<8x32xf32>
    %1047 = arith.addf %1045, %1046 : vector<8x32xf32>
    %1048 = arith.negf %1047 : vector<8x32xf32>
    %1049 = math.exp %1048 : vector<8x32xf32>
    %cst_224 = arith.constant 1.000000e+00 : f32
    %1050 = vector.broadcast %cst_224 : f32 to vector<8x32xf32>
    %1051 = arith.addf %1050, %1049 : vector<8x32xf32>
    %1052 = arith.divf %1050, %1051 : vector<8x32xf32>
    %1053 = vector.extract_strided_slice %1004 {offsets = [0, 64], sizes = [8, 32], strides = [1, 1]} : vector<8x96xf32> to vector<8x32xf32>
    %1054 = vector.extract_strided_slice %1010 {offsets = [0, 64], sizes = [8, 32], strides = [1, 1]} : vector<8x96xf32> to vector<8x32xf32>
    %1055 = arith.mulf %1044, %1054 : vector<8x32xf32>
    %1056 = arith.addf %1053, %1055 : vector<8x32xf32>
    %1057 = math.tanh %1056 : vector<8x32xf32>
    %cst_225 = arith.constant 1.000000e+00 : f32
    %1058 = vector.broadcast %cst_225 : f32 to vector<8x32xf32>
    %1059 = arith.subf %1058, %1052 : vector<8x32xf32>
    %1060 = arith.mulf %1059, %1057 : vector<8x32xf32>
    %1061 = arith.mulf %1052, %995 : vector<8x32xf32>
    %1062 = arith.addf %1060, %1061 : vector<8x32xf32>
    %1063 = vector.broadcast %c4_i32_213 : i32 to vector<8x1xi32>
    %1064 = arith.cmpi sgt, %0, %1063 : vector<8x1xi32>
    %1065 = vector.shape_cast %1064 : vector<8x1xi1> to vector<8x1xi1>
    %1066 = vector.broadcast %1065 : vector<8x1xi1> to vector<8x32xi1>
    %1067 = arith.select %1066, %1036, %990 : vector<8x32xi1>, vector<8x32xf32>
    %1068 = vector.broadcast %996 : i32 to vector<8x1xi32>
    %1069 = arith.cmpi sgt, %0, %1068 : vector<8x1xi32>
    %1070 = vector.shape_cast %1069 : vector<8x1xi1> to vector<8x1xi1>
    %1071 = vector.broadcast %1070 : vector<8x1xi1> to vector<8x32xi1>
    %1072 = arith.select %1071, %1062, %995 : vector<8x32xi1>, vector<8x32xf32>
    %c5_i32_226 = arith.constant 5 : i32
    %c7_i32_227 = arith.constant 7 : i32
    %1073 = arith.subi %c7_i32_227, %c5_i32_226 : i32
    %c8_i32_228 = arith.constant 8 : i32
    %1074 = arith.muli %c5_i32_226, %c8_i32_228 : i32
    %1075 = tpu.assume_multiple %1074, 8 : i32
    %c8_i32_229 = arith.constant 8 : i32
    %1076 = arith.muli %1073, %c8_i32_229 : i32
    %1077 = tpu.assume_multiple %1076, 8 : i32
    %1078 = arith.index_cast %1075 : i32 to index
    %c0_230 = arith.constant 0 : index
    %1079 = vector.load %arg18[%1078, %c0_230] : memref<64x96xf32, #tpu.memory_space<vmem>>, vector<8x96xf32>
    %1080 = arith.index_cast %1077 : i32 to index
    %c0_231 = arith.constant 0 : index
    %1081 = vector.load %arg19[%1080, %c0_231] : memref<64x96xf32, #tpu.memory_space<vmem>>, vector<8x96xf32>
    %1082 = tpu.concatenate %1067, %1072 in 1 : vector<8x32xf32>, vector<8x32xf32> -> vector<8x64xf32>
    %cst_232 = arith.constant dense<0.000000e+00> : vector<8x256xf32>
    %1083 = tpu.matmul %1082, %685, %cst_232 {dimension_numbers = #tpu.dot_dimension_numbers<[1], [0], [0], [1], [0, 0, 1, 1], [], []>} : vector<8x64xf32>, vector<64x256xf32>, vector<8x256xf32> -> vector<8x256xf32>
    %1084 = vector.broadcast %686 : vector<1x256xf32> to vector<8x256xf32>
    %1085 = arith.addf %1083, %1084 : vector<8x256xf32>
    %1086 = vector.extract_strided_slice %1085 {offsets = [0, 0], sizes = [8, 96], strides = [1, 1]} : vector<8x256xf32> to vector<8x96xf32>
    %1087 = vector.extract_strided_slice %1085 {offsets = [0, 128], sizes = [8, 96], strides = [1, 1]} : vector<8x256xf32> to vector<8x96xf32>
    %1088 = vector.extract_strided_slice %1079 {offsets = [0, 0], sizes = [8, 32], strides = [1, 1]} : vector<8x96xf32> to vector<8x32xf32>
    %1089 = vector.extract_strided_slice %1086 {offsets = [0, 0], sizes = [8, 32], strides = [1, 1]} : vector<8x96xf32> to vector<8x32xf32>
    %1090 = arith.addf %1088, %1089 : vector<8x32xf32>
    %1091 = arith.negf %1090 : vector<8x32xf32>
    %1092 = math.exp %1091 : vector<8x32xf32>
    %cst_233 = arith.constant 1.000000e+00 : f32
    %1093 = vector.broadcast %cst_233 : f32 to vector<8x32xf32>
    %1094 = arith.addf %1093, %1092 : vector<8x32xf32>
    %1095 = arith.divf %1093, %1094 : vector<8x32xf32>
    %1096 = vector.extract_strided_slice %1079 {offsets = [0, 32], sizes = [8, 32], strides = [1, 1]} : vector<8x96xf32> to vector<8x32xf32>
    %1097 = vector.extract_strided_slice %1086 {offsets = [0, 32], sizes = [8, 32], strides = [1, 1]} : vector<8x96xf32> to vector<8x32xf32>
    %1098 = arith.addf %1096, %1097 : vector<8x32xf32>
    %1099 = arith.negf %1098 : vector<8x32xf32>
    %1100 = math.exp %1099 : vector<8x32xf32>
    %cst_234 = arith.constant 1.000000e+00 : f32
    %1101 = vector.broadcast %cst_234 : f32 to vector<8x32xf32>
    %1102 = arith.addf %1101, %1100 : vector<8x32xf32>
    %1103 = arith.divf %1101, %1102 : vector<8x32xf32>
    %1104 = vector.extract_strided_slice %1079 {offsets = [0, 64], sizes = [8, 32], strides = [1, 1]} : vector<8x96xf32> to vector<8x32xf32>
    %1105 = vector.extract_strided_slice %1086 {offsets = [0, 64], sizes = [8, 32], strides = [1, 1]} : vector<8x96xf32> to vector<8x32xf32>
    %1106 = arith.mulf %1095, %1105 : vector<8x32xf32>
    %1107 = arith.addf %1104, %1106 : vector<8x32xf32>
    %1108 = math.tanh %1107 : vector<8x32xf32>
    %cst_235 = arith.constant 1.000000e+00 : f32
    %1109 = vector.broadcast %cst_235 : f32 to vector<8x32xf32>
    %1110 = arith.subf %1109, %1103 : vector<8x32xf32>
    %1111 = arith.mulf %1110, %1108 : vector<8x32xf32>
    %1112 = arith.mulf %1103, %1067 : vector<8x32xf32>
    %1113 = arith.addf %1111, %1112 : vector<8x32xf32>
    %1114 = vector.extract_strided_slice %1081 {offsets = [0, 0], sizes = [8, 32], strides = [1, 1]} : vector<8x96xf32> to vector<8x32xf32>
    %1115 = vector.extract_strided_slice %1087 {offsets = [0, 0], sizes = [8, 32], strides = [1, 1]} : vector<8x96xf32> to vector<8x32xf32>
    %1116 = arith.addf %1114, %1115 : vector<8x32xf32>
    %1117 = arith.negf %1116 : vector<8x32xf32>
    %1118 = math.exp %1117 : vector<8x32xf32>
    %cst_236 = arith.constant 1.000000e+00 : f32
    %1119 = vector.broadcast %cst_236 : f32 to vector<8x32xf32>
    %1120 = arith.addf %1119, %1118 : vector<8x32xf32>
    %1121 = arith.divf %1119, %1120 : vector<8x32xf32>
    %1122 = vector.extract_strided_slice %1081 {offsets = [0, 32], sizes = [8, 32], strides = [1, 1]} : vector<8x96xf32> to vector<8x32xf32>
    %1123 = vector.extract_strided_slice %1087 {offsets = [0, 32], sizes = [8, 32], strides = [1, 1]} : vector<8x96xf32> to vector<8x32xf32>
    %1124 = arith.addf %1122, %1123 : vector<8x32xf32>
    %1125 = arith.negf %1124 : vector<8x32xf32>
    %1126 = math.exp %1125 : vector<8x32xf32>
    %cst_237 = arith.constant 1.000000e+00 : f32
    %1127 = vector.broadcast %cst_237 : f32 to vector<8x32xf32>
    %1128 = arith.addf %1127, %1126 : vector<8x32xf32>
    %1129 = arith.divf %1127, %1128 : vector<8x32xf32>
    %1130 = vector.extract_strided_slice %1081 {offsets = [0, 64], sizes = [8, 32], strides = [1, 1]} : vector<8x96xf32> to vector<8x32xf32>
    %1131 = vector.extract_strided_slice %1087 {offsets = [0, 64], sizes = [8, 32], strides = [1, 1]} : vector<8x96xf32> to vector<8x32xf32>
    %1132 = arith.mulf %1121, %1131 : vector<8x32xf32>
    %1133 = arith.addf %1130, %1132 : vector<8x32xf32>
    %1134 = math.tanh %1133 : vector<8x32xf32>
    %cst_238 = arith.constant 1.000000e+00 : f32
    %1135 = vector.broadcast %cst_238 : f32 to vector<8x32xf32>
    %1136 = arith.subf %1135, %1129 : vector<8x32xf32>
    %1137 = arith.mulf %1136, %1134 : vector<8x32xf32>
    %1138 = arith.mulf %1129, %1072 : vector<8x32xf32>
    %1139 = arith.addf %1137, %1138 : vector<8x32xf32>
    %1140 = vector.broadcast %c5_i32_226 : i32 to vector<8x1xi32>
    %1141 = arith.cmpi sgt, %0, %1140 : vector<8x1xi32>
    %1142 = vector.shape_cast %1141 : vector<8x1xi1> to vector<8x1xi1>
    %1143 = vector.broadcast %1142 : vector<8x1xi1> to vector<8x32xi1>
    %1144 = arith.select %1143, %1113, %1067 : vector<8x32xi1>, vector<8x32xf32>
    %1145 = vector.broadcast %1073 : i32 to vector<8x1xi32>
    %1146 = arith.cmpi sgt, %0, %1145 : vector<8x1xi32>
    %1147 = vector.shape_cast %1146 : vector<8x1xi1> to vector<8x1xi1>
    %1148 = vector.broadcast %1147 : vector<8x1xi1> to vector<8x32xi1>
    %1149 = arith.select %1148, %1139, %1072 : vector<8x32xi1>, vector<8x32xf32>
    %c6_i32_239 = arith.constant 6 : i32
    %c7_i32_240 = arith.constant 7 : i32
    %1150 = arith.subi %c7_i32_240, %c6_i32_239 : i32
    %c8_i32_241 = arith.constant 8 : i32
    %1151 = arith.muli %c6_i32_239, %c8_i32_241 : i32
    %1152 = tpu.assume_multiple %1151, 8 : i32
    %c8_i32_242 = arith.constant 8 : i32
    %1153 = arith.muli %1150, %c8_i32_242 : i32
    %1154 = tpu.assume_multiple %1153, 8 : i32
    %1155 = arith.index_cast %1152 : i32 to index
    %c0_243 = arith.constant 0 : index
    %1156 = vector.load %arg18[%1155, %c0_243] : memref<64x96xf32, #tpu.memory_space<vmem>>, vector<8x96xf32>
    %1157 = arith.index_cast %1154 : i32 to index
    %c0_244 = arith.constant 0 : index
    %1158 = vector.load %arg19[%1157, %c0_244] : memref<64x96xf32, #tpu.memory_space<vmem>>, vector<8x96xf32>
    %1159 = tpu.concatenate %1144, %1149 in 1 : vector<8x32xf32>, vector<8x32xf32> -> vector<8x64xf32>
    %cst_245 = arith.constant dense<0.000000e+00> : vector<8x256xf32>
    %1160 = tpu.matmul %1159, %685, %cst_245 {dimension_numbers = #tpu.dot_dimension_numbers<[1], [0], [0], [1], [0, 0, 1, 1], [], []>} : vector<8x64xf32>, vector<64x256xf32>, vector<8x256xf32> -> vector<8x256xf32>
    %1161 = vector.broadcast %686 : vector<1x256xf32> to vector<8x256xf32>
    %1162 = arith.addf %1160, %1161 : vector<8x256xf32>
    %1163 = vector.extract_strided_slice %1162 {offsets = [0, 0], sizes = [8, 96], strides = [1, 1]} : vector<8x256xf32> to vector<8x96xf32>
    %1164 = vector.extract_strided_slice %1162 {offsets = [0, 128], sizes = [8, 96], strides = [1, 1]} : vector<8x256xf32> to vector<8x96xf32>
    %1165 = vector.extract_strided_slice %1156 {offsets = [0, 0], sizes = [8, 32], strides = [1, 1]} : vector<8x96xf32> to vector<8x32xf32>
    %1166 = vector.extract_strided_slice %1163 {offsets = [0, 0], sizes = [8, 32], strides = [1, 1]} : vector<8x96xf32> to vector<8x32xf32>
    %1167 = arith.addf %1165, %1166 : vector<8x32xf32>
    %1168 = arith.negf %1167 : vector<8x32xf32>
    %1169 = math.exp %1168 : vector<8x32xf32>
    %cst_246 = arith.constant 1.000000e+00 : f32
    %1170 = vector.broadcast %cst_246 : f32 to vector<8x32xf32>
    %1171 = arith.addf %1170, %1169 : vector<8x32xf32>
    %1172 = arith.divf %1170, %1171 : vector<8x32xf32>
    %1173 = vector.extract_strided_slice %1156 {offsets = [0, 32], sizes = [8, 32], strides = [1, 1]} : vector<8x96xf32> to vector<8x32xf32>
    %1174 = vector.extract_strided_slice %1163 {offsets = [0, 32], sizes = [8, 32], strides = [1, 1]} : vector<8x96xf32> to vector<8x32xf32>
    %1175 = arith.addf %1173, %1174 : vector<8x32xf32>
    %1176 = arith.negf %1175 : vector<8x32xf32>
    %1177 = math.exp %1176 : vector<8x32xf32>
    %cst_247 = arith.constant 1.000000e+00 : f32
    %1178 = vector.broadcast %cst_247 : f32 to vector<8x32xf32>
    %1179 = arith.addf %1178, %1177 : vector<8x32xf32>
    %1180 = arith.divf %1178, %1179 : vector<8x32xf32>
    %1181 = vector.extract_strided_slice %1156 {offsets = [0, 64], sizes = [8, 32], strides = [1, 1]} : vector<8x96xf32> to vector<8x32xf32>
    %1182 = vector.extract_strided_slice %1163 {offsets = [0, 64], sizes = [8, 32], strides = [1, 1]} : vector<8x96xf32> to vector<8x32xf32>
    %1183 = arith.mulf %1172, %1182 : vector<8x32xf32>
    %1184 = arith.addf %1181, %1183 : vector<8x32xf32>
    %1185 = math.tanh %1184 : vector<8x32xf32>
    %cst_248 = arith.constant 1.000000e+00 : f32
    %1186 = vector.broadcast %cst_248 : f32 to vector<8x32xf32>
    %1187 = arith.subf %1186, %1180 : vector<8x32xf32>
    %1188 = arith.mulf %1187, %1185 : vector<8x32xf32>
    %1189 = arith.mulf %1180, %1144 : vector<8x32xf32>
    %1190 = arith.addf %1188, %1189 : vector<8x32xf32>
    %1191 = vector.extract_strided_slice %1158 {offsets = [0, 0], sizes = [8, 32], strides = [1, 1]} : vector<8x96xf32> to vector<8x32xf32>
    %1192 = vector.extract_strided_slice %1164 {offsets = [0, 0], sizes = [8, 32], strides = [1, 1]} : vector<8x96xf32> to vector<8x32xf32>
    %1193 = arith.addf %1191, %1192 : vector<8x32xf32>
    %1194 = arith.negf %1193 : vector<8x32xf32>
    %1195 = math.exp %1194 : vector<8x32xf32>
    %cst_249 = arith.constant 1.000000e+00 : f32
    %1196 = vector.broadcast %cst_249 : f32 to vector<8x32xf32>
    %1197 = arith.addf %1196, %1195 : vector<8x32xf32>
    %1198 = arith.divf %1196, %1197 : vector<8x32xf32>
    %1199 = vector.extract_strided_slice %1158 {offsets = [0, 32], sizes = [8, 32], strides = [1, 1]} : vector<8x96xf32> to vector<8x32xf32>
    %1200 = vector.extract_strided_slice %1164 {offsets = [0, 32], sizes = [8, 32], strides = [1, 1]} : vector<8x96xf32> to vector<8x32xf32>
    %1201 = arith.addf %1199, %1200 : vector<8x32xf32>
    %1202 = arith.negf %1201 : vector<8x32xf32>
    %1203 = math.exp %1202 : vector<8x32xf32>
    %cst_250 = arith.constant 1.000000e+00 : f32
    %1204 = vector.broadcast %cst_250 : f32 to vector<8x32xf32>
    %1205 = arith.addf %1204, %1203 : vector<8x32xf32>
    %1206 = arith.divf %1204, %1205 : vector<8x32xf32>
    %1207 = vector.extract_strided_slice %1158 {offsets = [0, 64], sizes = [8, 32], strides = [1, 1]} : vector<8x96xf32> to vector<8x32xf32>
    %1208 = vector.extract_strided_slice %1164 {offsets = [0, 64], sizes = [8, 32], strides = [1, 1]} : vector<8x96xf32> to vector<8x32xf32>
    %1209 = arith.mulf %1198, %1208 : vector<8x32xf32>
    %1210 = arith.addf %1207, %1209 : vector<8x32xf32>
    %1211 = math.tanh %1210 : vector<8x32xf32>
    %cst_251 = arith.constant 1.000000e+00 : f32
    %1212 = vector.broadcast %cst_251 : f32 to vector<8x32xf32>
    %1213 = arith.subf %1212, %1206 : vector<8x32xf32>
    %1214 = arith.mulf %1213, %1211 : vector<8x32xf32>
    %1215 = arith.mulf %1206, %1149 : vector<8x32xf32>
    %1216 = arith.addf %1214, %1215 : vector<8x32xf32>
    %1217 = vector.broadcast %c6_i32_239 : i32 to vector<8x1xi32>
    %1218 = arith.cmpi sgt, %0, %1217 : vector<8x1xi32>
    %1219 = vector.shape_cast %1218 : vector<8x1xi1> to vector<8x1xi1>
    %1220 = vector.broadcast %1219 : vector<8x1xi1> to vector<8x32xi1>
    %1221 = arith.select %1220, %1190, %1144 : vector<8x32xi1>, vector<8x32xf32>
    %1222 = vector.broadcast %1150 : i32 to vector<8x1xi32>
    %1223 = arith.cmpi sgt, %0, %1222 : vector<8x1xi32>
    %1224 = vector.shape_cast %1223 : vector<8x1xi1> to vector<8x1xi1>
    %1225 = vector.broadcast %1224 : vector<8x1xi1> to vector<8x32xi1>
    %1226 = arith.select %1225, %1216, %1149 : vector<8x32xi1>, vector<8x32xf32>
    %c7_i32_252 = arith.constant 7 : i32
    %c7_i32_253 = arith.constant 7 : i32
    %1227 = arith.subi %c7_i32_253, %c7_i32_252 : i32
    %c8_i32_254 = arith.constant 8 : i32
    %1228 = arith.muli %c7_i32_252, %c8_i32_254 : i32
    %1229 = tpu.assume_multiple %1228, 8 : i32
    %c8_i32_255 = arith.constant 8 : i32
    %1230 = arith.muli %1227, %c8_i32_255 : i32
    %1231 = tpu.assume_multiple %1230, 8 : i32
    %1232 = arith.index_cast %1229 : i32 to index
    %c0_256 = arith.constant 0 : index
    %1233 = vector.load %arg18[%1232, %c0_256] : memref<64x96xf32, #tpu.memory_space<vmem>>, vector<8x96xf32>
    %1234 = arith.index_cast %1231 : i32 to index
    %c0_257 = arith.constant 0 : index
    %1235 = vector.load %arg19[%1234, %c0_257] : memref<64x96xf32, #tpu.memory_space<vmem>>, vector<8x96xf32>
    %1236 = tpu.concatenate %1221, %1226 in 1 : vector<8x32xf32>, vector<8x32xf32> -> vector<8x64xf32>
    %cst_258 = arith.constant dense<0.000000e+00> : vector<8x256xf32>
    %1237 = tpu.matmul %1236, %685, %cst_258 {dimension_numbers = #tpu.dot_dimension_numbers<[1], [0], [0], [1], [0, 0, 1, 1], [], []>} : vector<8x64xf32>, vector<64x256xf32>, vector<8x256xf32> -> vector<8x256xf32>
    %1238 = vector.broadcast %686 : vector<1x256xf32> to vector<8x256xf32>
    %1239 = arith.addf %1237, %1238 : vector<8x256xf32>
    %1240 = vector.extract_strided_slice %1239 {offsets = [0, 0], sizes = [8, 96], strides = [1, 1]} : vector<8x256xf32> to vector<8x96xf32>
    %1241 = vector.extract_strided_slice %1239 {offsets = [0, 128], sizes = [8, 96], strides = [1, 1]} : vector<8x256xf32> to vector<8x96xf32>
    %1242 = vector.extract_strided_slice %1233 {offsets = [0, 0], sizes = [8, 32], strides = [1, 1]} : vector<8x96xf32> to vector<8x32xf32>
    %1243 = vector.extract_strided_slice %1240 {offsets = [0, 0], sizes = [8, 32], strides = [1, 1]} : vector<8x96xf32> to vector<8x32xf32>
    %1244 = arith.addf %1242, %1243 : vector<8x32xf32>
    %1245 = arith.negf %1244 : vector<8x32xf32>
    %1246 = math.exp %1245 : vector<8x32xf32>
    %cst_259 = arith.constant 1.000000e+00 : f32
    %1247 = vector.broadcast %cst_259 : f32 to vector<8x32xf32>
    %1248 = arith.addf %1247, %1246 : vector<8x32xf32>
    %1249 = arith.divf %1247, %1248 : vector<8x32xf32>
    %1250 = vector.extract_strided_slice %1233 {offsets = [0, 32], sizes = [8, 32], strides = [1, 1]} : vector<8x96xf32> to vector<8x32xf32>
    %1251 = vector.extract_strided_slice %1240 {offsets = [0, 32], sizes = [8, 32], strides = [1, 1]} : vector<8x96xf32> to vector<8x32xf32>
    %1252 = arith.addf %1250, %1251 : vector<8x32xf32>
    %1253 = arith.negf %1252 : vector<8x32xf32>
    %1254 = math.exp %1253 : vector<8x32xf32>
    %cst_260 = arith.constant 1.000000e+00 : f32
    %1255 = vector.broadcast %cst_260 : f32 to vector<8x32xf32>
    %1256 = arith.addf %1255, %1254 : vector<8x32xf32>
    %1257 = arith.divf %1255, %1256 : vector<8x32xf32>
    %1258 = vector.extract_strided_slice %1233 {offsets = [0, 64], sizes = [8, 32], strides = [1, 1]} : vector<8x96xf32> to vector<8x32xf32>
    %1259 = vector.extract_strided_slice %1240 {offsets = [0, 64], sizes = [8, 32], strides = [1, 1]} : vector<8x96xf32> to vector<8x32xf32>
    %1260 = arith.mulf %1249, %1259 : vector<8x32xf32>
    %1261 = arith.addf %1258, %1260 : vector<8x32xf32>
    %1262 = math.tanh %1261 : vector<8x32xf32>
    %cst_261 = arith.constant 1.000000e+00 : f32
    %1263 = vector.broadcast %cst_261 : f32 to vector<8x32xf32>
    %1264 = arith.subf %1263, %1257 : vector<8x32xf32>
    %1265 = arith.mulf %1264, %1262 : vector<8x32xf32>
    %1266 = arith.mulf %1257, %1221 : vector<8x32xf32>
    %1267 = arith.addf %1265, %1266 : vector<8x32xf32>
    %1268 = vector.extract_strided_slice %1235 {offsets = [0, 0], sizes = [8, 32], strides = [1, 1]} : vector<8x96xf32> to vector<8x32xf32>
    %1269 = vector.extract_strided_slice %1241 {offsets = [0, 0], sizes = [8, 32], strides = [1, 1]} : vector<8x96xf32> to vector<8x32xf32>
    %1270 = arith.addf %1268, %1269 : vector<8x32xf32>
    %1271 = arith.negf %1270 : vector<8x32xf32>
    %1272 = math.exp %1271 : vector<8x32xf32>
    %cst_262 = arith.constant 1.000000e+00 : f32
    %1273 = vector.broadcast %cst_262 : f32 to vector<8x32xf32>
    %1274 = arith.addf %1273, %1272 : vector<8x32xf32>
    %1275 = arith.divf %1273, %1274 : vector<8x32xf32>
    %1276 = vector.extract_strided_slice %1235 {offsets = [0, 32], sizes = [8, 32], strides = [1, 1]} : vector<8x96xf32> to vector<8x32xf32>
    %1277 = vector.extract_strided_slice %1241 {offsets = [0, 32], sizes = [8, 32], strides = [1, 1]} : vector<8x96xf32> to vector<8x32xf32>
    %1278 = arith.addf %1276, %1277 : vector<8x32xf32>
    %1279 = arith.negf %1278 : vector<8x32xf32>
    %1280 = math.exp %1279 : vector<8x32xf32>
    %cst_263 = arith.constant 1.000000e+00 : f32
    %1281 = vector.broadcast %cst_263 : f32 to vector<8x32xf32>
    %1282 = arith.addf %1281, %1280 : vector<8x32xf32>
    %1283 = arith.divf %1281, %1282 : vector<8x32xf32>
    %1284 = vector.extract_strided_slice %1235 {offsets = [0, 64], sizes = [8, 32], strides = [1, 1]} : vector<8x96xf32> to vector<8x32xf32>
    %1285 = vector.extract_strided_slice %1241 {offsets = [0, 64], sizes = [8, 32], strides = [1, 1]} : vector<8x96xf32> to vector<8x32xf32>
    %1286 = arith.mulf %1275, %1285 : vector<8x32xf32>
    %1287 = arith.addf %1284, %1286 : vector<8x32xf32>
    %1288 = math.tanh %1287 : vector<8x32xf32>
    %cst_264 = arith.constant 1.000000e+00 : f32
    %1289 = vector.broadcast %cst_264 : f32 to vector<8x32xf32>
    %1290 = arith.subf %1289, %1283 : vector<8x32xf32>
    %1291 = arith.mulf %1290, %1288 : vector<8x32xf32>
    %1292 = arith.mulf %1283, %1226 : vector<8x32xf32>
    %1293 = arith.addf %1291, %1292 : vector<8x32xf32>
    %1294 = vector.broadcast %c7_i32_252 : i32 to vector<8x1xi32>
    %1295 = arith.cmpi sgt, %0, %1294 : vector<8x1xi32>
    %1296 = vector.shape_cast %1295 : vector<8x1xi1> to vector<8x1xi1>
    %1297 = vector.broadcast %1296 : vector<8x1xi1> to vector<8x32xi1>
    %1298 = arith.select %1297, %1267, %1221 : vector<8x32xi1>, vector<8x32xf32>
    %1299 = vector.broadcast %1227 : i32 to vector<8x1xi32>
    %1300 = arith.cmpi sgt, %0, %1299 : vector<8x1xi32>
    %1301 = vector.shape_cast %1300 : vector<8x1xi1> to vector<8x1xi1>
    %1302 = vector.broadcast %1301 : vector<8x1xi1> to vector<8x32xi1>
    %1303 = arith.select %1302, %1293, %1226 : vector<8x32xi1>, vector<8x32xf32>
    %c8_i32_265 = arith.constant 8 : i32
    %c0_266 = arith.constant 0 : index
    %c0_267 = arith.constant 0 : index
    %1304 = vector.load %arg14[%c0_266, %c0_267] : memref<32x4xf32, #tpu.memory_space<vmem>>, vector<32x4xf32>
    %cst_268 = arith.constant dense<0.000000e+00> : vector<8x4xf32>
    %1305 = tpu.matmul %1298, %1304, %cst_268 {dimension_numbers = #tpu.dot_dimension_numbers<[1], [0], [0], [1], [0, 0, 1, 1], [], []>} : vector<8x32xf32>, vector<32x4xf32>, vector<8x4xf32> -> vector<8x4xf32>
    %c0_269 = arith.constant 0 : index
    %c0_270 = arith.constant 0 : index
    %1306 = vector.load %arg15[%c0_269, %c0_270] : memref<32x4xf32, #tpu.memory_space<vmem>>, vector<32x4xf32>
    %cst_271 = arith.constant dense<0.000000e+00> : vector<8x4xf32>
    %1307 = tpu.matmul %1303, %1306, %cst_271 {dimension_numbers = #tpu.dot_dimension_numbers<[1], [0], [0], [1], [0, 0, 1, 1], [], []>} : vector<8x32xf32>, vector<32x4xf32>, vector<8x4xf32> -> vector<8x4xf32>
    %1308 = arith.addf %1305, %1307 : vector<8x4xf32>
    %c0_272 = arith.constant 0 : index
    %c0_273 = arith.constant 0 : index
    %1309 = vector.load %arg16[%c0_272, %c0_273] : memref<1x4xf32, #tpu.memory_space<vmem>>, vector<1x4xf32>
    %1310 = vector.broadcast %1309 : vector<1x4xf32> to vector<8x4xf32>
    %1311 = arith.addf %1308, %1310 : vector<8x4xf32>
    %c0_274 = arith.constant 0 : index
    %c0_275 = arith.constant 0 : index
    %1312 = vector.load %arg17[%c0_274, %c0_275] : memref<8x4xf32, #tpu.memory_space<vmem>>, vector<8x4xf32>
    tpu.vector_store %arg17[%c0_274, %c0_275], %1311 {strides = array<i32>} : memref<8x4xf32, #tpu.memory_space<vmem>>, vector<8x4xf32>,
    return
  }
}

</mosaic_0001>

<llo_original>
// kernel: gru_net_forward.1
$region0: #{gru_net_forward.1}
  #allocation0 [shape = 'u32[]', space=smem, size = 0x4, offset = 0x4, fixed_abs, tag = 'smem constant byte address 0x4 - core index']
  #allocation1 [shape = 'u32[144,128]{1,0:T(1,128)}', space=vmem, size = 0x12000, scoped, tag = 'internal scratch']
  #allocation2 [shape = 'f32[64,96]{1,0:T(8,128)}', space=vmem, size = 0x8000, scoped, tag = 'scratch operand']
  #allocation3 [shape = 'f32[64,96]{1,0:T(8,128)}', space=vmem, size = 0x8000, scoped, tag = 'scratch operand']
  #allocation4 [shape = 'f32[64,32]{1,0:T(8,128)}', space=vmem, size = 0x8000, scoped, tag = 'scratch operand']
  #allocation5 [shape = 'f32[64,32]{1,0:T(8,128)}', space=vmem, size = 0x8000, scoped, tag = 'scratch operand']
  %s0 = inlined_call_operand.vmem [shape: s32[8,1], index: 0, kind: input, shape index: {}]
  %s1 = inlined_call_operand.vmem [shape: f32[64,32], index: 1, kind: input, shape index: {}]
  %s2 = inlined_call_operand.vmem [shape: f32[32,96], index: 2, kind: input, shape index: {}]
  %s3 = inlined_call_operand.vmem [shape: f32[32,96], index: 3, kind: input, shape index: {}]
  %s4 = inlined_call_operand.vmem [shape: f32[64,256], index: 4, kind: input, shape index: {}]
  %s5 = inlined_call_operand.vmem [shape: f32[1,96], index: 5, kind: input, shape index: {}]
  %s6 = inlined_call_operand.vmem [shape: f32[1,96], index: 6, kind: input, shape index: {}]
  %s7 = inlined_call_operand.vmem [shape: f32[1,256], index: 7, kind: input, shape index: {}]
  %s8 = inlined_call_operand.vmem [shape: f32[64,96], index: 8, kind: input, shape index: {}]
  %s9 = inlined_call_operand.vmem [shape: f32[64,96], index: 9, kind: input, shape index: {}]
  %s10 = inlined_call_operand.vmem [shape: f32[64,256], index: 10, kind: input, shape index: {}]
  %s11 = inlined_call_operand.vmem [shape: f32[1,96], index: 11, kind: input, shape index: {}]
  %s12 = inlined_call_operand.vmem [shape: f32[1,96], index: 12, kind: input, shape index: {}]
  %s13 = inlined_call_operand.vmem [shape: f32[1,256], index: 13, kind: input, shape index: {}]
  %s14 = inlined_call_operand.vmem [shape: f32[32,4], index: 14, kind: input, shape index: {}]
  %s15 = inlined_call_operand.vmem [shape: f32[32,4], index: 15, kind: input, shape index: {}]
  %s16 = inlined_call_operand.vmem [shape: f32[1,4], index: 16, kind: input, shape index: {}]
  %s17 = inlined_call_operand.vmem [shape: f32[8,4], index: 17, kind: output, shape index: {}]
  %s18 = sld [smem:[#allocation0]]
  $region78: #{gru_net_forward.1} parent=0
    _
  %s20 = ssub.s32 1, %s18
  %s21 = scalar_select 0, %s20, %s18
  // Predicated region
  $region2: #{gru_net_forward.1} parent=0 // pred_check
    _
  $region3: #{gru_net_forward.1} parent=0 // pred_check_branch
    %23 = sbr.rel (0) target = $region5
  $region4: #{gru_net_forward.1} parent=0 // pred_region
    _
  $region5: #{gru_net_forward.1} parent=0 // pred_fallthru
    _
  // Predicated region
  $region6: #{gru_net_forward.1} parent=0 // pred_check
    _
  $region7: #{gru_net_forward.1} parent=0 // pred_check_branch
    %25 = sbr.rel (0) target = $region9
  $region8: #{gru_net_forward.1} parent=0 // pred_region
    _
  $region9: #{gru_net_forward.1} parent=0 // pred_fallthru
    _
  // Predicated region
  $region10: #{gru_net_forward.1} parent=0 // pred_check
    _
  $region11: #{gru_net_forward.1} parent=0 // pred_check_branch
    %27 = sbr.rel (0) target = $region13
  $region12: #{gru_net_forward.1} parent=0 // pred_region
    _
  $region13: #{gru_net_forward.1} parent=0 // pred_fallthru
    _
  // Predicated region
  $region14: #{gru_net_forward.1} parent=0 // pred_check
    _
  $region15: #{gru_net_forward.1} parent=0 // pred_check_branch
    %29 = sbr.rel (0) target = $region17
  $region16: #{gru_net_forward.1} parent=0 // pred_region
    _
  $region17: #{gru_net_forward.1} parent=0 // pred_fallthru
    _
  // Predicated region
  $region18: #{gru_net_forward.1} parent=0 // pred_check
    _
  $region19: #{gru_net_forward.1} parent=0 // pred_check_branch
    %31 = sbr.rel (0) target = $region21
  $region20: #{gru_net_forward.1} parent=0 // pred_region
    _
  $region21: #{gru_net_forward.1} parent=0 // pred_fallthru
    _
  // Predicated region
  $region22: #{gru_net_forward.1} parent=0 // pred_check
    _
  $region23: #{gru_net_forward.1} parent=0 // pred_check_branch
    %33 = sbr.rel (0) target = $region25
  $region24: #{gru_net_forward.1} parent=0 // pred_region
    _
  $region25: #{gru_net_forward.1} parent=0 // pred_fallthru
    _
  // Predicated region
  $region26: #{gru_net_forward.1} parent=0 // pred_check
    _
  $region27: #{gru_net_forward.1} parent=0 // pred_check_branch
    %35 = sbr.rel (0) target = $region29
  $region28: #{gru_net_forward.1} parent=0 // pred_region
    _
  $region29: #{gru_net_forward.1} parent=0 // pred_fallthru
    _
  // Predicated region
  $region30: #{gru_net_forward.1} parent=0 // pred_check
    _
  $region31: #{gru_net_forward.1} parent=0 // pred_check_branch
    %37 = sbr.rel (0) target = $region33
  $region32: #{gru_net_forward.1} parent=0 // pred_region
    _
  $region33: #{gru_net_forward.1} parent=0 // pred_fallthru
    _
  // Predicated region
  $region34: #{gru_net_forward.1} parent=0 // pred_check
    _
  $region35: #{gru_net_forward.1} parent=0 // pred_check_branch
    %39 = sbr.rel (0) target = $region37
  $region36: #{gru_net_forward.1} parent=0 // pred_region
    _
  $region37: #{gru_net_forward.1} parent=0 // pred_fallthru
    _
  // Predicated region
  $region38: #{gru_net_forward.1} parent=0 // pred_check
    _
  $region39: #{gru_net_forward.1} parent=0 // pred_check_branch
    %41 = sbr.rel (0) target = $region41
  $region40: #{gru_net_forward.1} parent=0 // pred_region
    _
  $region41: #{gru_net_forward.1} parent=0 // pred_fallthru
    _
  // Predicated region
  $region42: #{gru_net_forward.1} parent=0 // pred_check
    _
  $region43: #{gru_net_forward.1} parent=0 // pred_check_branch
    %43 = sbr.rel (0) target = $region45
  $region44: #{gru_net_forward.1} parent=0 // pred_region
    _
  $region45: #{gru_net_forward.1} parent=0 // pred_fallthru
    _
  // Predicated region
  $region46: #{gru_net_forward.1} parent=0 // pred_check
    _
  $region47: #{gru_net_forward.1} parent=0 // pred_check_branch
    %45 = sbr.rel (0) target = $region49
  $region48: #{gru_net_forward.1} parent=0 // pred_region
    _
  $region49: #{gru_net_forward.1} parent=0 // pred_fallthru
    _
  // Predicated region
  $region50: #{gru_net_forward.1} parent=0 // pred_check
    _
  $region51: #{gru_net_forward.1} parent=0 // pred_check_branch
    %47 = sbr.rel (0) target = $region53
  $region52: #{gru_net_forward.1} parent=0 // pred_region
    _
  $region53: #{gru_net_forward.1} parent=0 // pred_fallthru
    _
  // Predicated region
  $region54: #{gru_net_forward.1} parent=0 // pred_check
    _
  $region55: #{gru_net_forward.1} parent=0 // pred_check_branch
    %49 = sbr.rel (0) target = $region57
  $region56: #{gru_net_forward.1} parent=0 // pred_region
    _
  $region57: #{gru_net_forward.1} parent=0 // pred_fallthru
    _
  // Predicated region
  $region58: #{gru_net_forward.1} parent=0 // pred_check
    _
  $region59: #{gru_net_forward.1} parent=0 // pred_check_branch
    %51 = sbr.rel (0) target = $region61
  $region60: #{gru_net_forward.1} parent=0 // pred_region
    _
  $region61: #{gru_net_forward.1} parent=0 // pred_fallthru
    _
  // Predicated region
  $region62: #{gru_net_forward.1} parent=0 // pred_check
    _
  $region63: #{gru_net_forward.1} parent=0 // pred_check_branch
    %53 = sbr.rel (0) target = $region65
  $region64: #{gru_net_forward.1} parent=0 // pred_region
    _
  $region65: #{gru_net_forward.1} parent=0 // pred_fallthru
    _
  // Predicated region
  $region66: #{gru_net_forward.1} parent=0 // pred_check
    _
  $region67: #{gru_net_forward.1} parent=0 // pred_check_branch
    %55 = sbr.rel (0) target = $region69
  $region68: #{gru_net_forward.1} parent=0 // pred_region
    _
  $region69: #{gru_net_forward.1} parent=0 // pred_fallthru
    _
  %v56 = vld [vmem:[%s0] sm:$0xff]
  %v57 = vld [vmem:[%s1] sm:$0xff]
  %v58 = vld [vmem:[%s1 + $0x8] sm:$0xff]
  %v59 = vld [vmem:[%s1 + $0x10] sm:$0xff]
  %v60 = vld [vmem:[%s1 + $0x18] sm:$0xff]
  %v61 = vld [vmem:[%s1 + $0x20] sm:$0xff]
  %v62 = vld [vmem:[%s1 + $0x28] sm:$0xff]
  %v63 = vld [vmem:[%s1 + $0x30] sm:$0xff]
  %v64 = vld [vmem:[%s1 + $0x38] sm:$0xff]
  %v65 = vld [vmem:[%s2] sm:$0xff]
  %v66 = vld [vmem:[%s2 + $0x8] sm:$0xff]
  %v67 = vld [vmem:[%s2 + $0x10] sm:$0xff]
  %v68 = vld [vmem:[%s2 + $0x18] sm:$0xff]
  %v69 = vld [vmem:[%s5] sm:$0x1]
  %v71 = vlaneseq
  %v72 = vshrl.u32 %v71, 7
  %v73 = vsub.s32 0, %v72
  %v74 = vrot.slane %v69, %v73
  %vm76 = vcmask 261120
  %v78 = vsel %vm76, %v57, 0
  %v81 = vsel %vm76, %v58, 0
  %v84 = vsel %vm76, %v59, 0
  %v87 = vsel %vm76, %v60, 0
  %v90 = vsel %vm76, %v61, 0
  %v93 = vsel %vm76, %v62, 0
  %v96 = vsel %vm76, %v63, 0
  %v99 = vsel %vm76, %v64, 0
  %101 = vmatprep.subr.mxu0 0.0
  %102 = vmatpush1.msra.mxu0 0.0
  %103 = vmatprep.subr.mxu0 0.0
  %104 = vmatpush1.msra.mxu0 0.0
  %105 = vmatprep.subr.mxu0 0.0
  %106 = vmatpush1.msra.mxu0 0.0
  %107 = vmatprep.subr.mxu0 0.0
  %108 = vmatpush1.msra.mxu0 0.0
  %109 = vmatprep.subr.mxu0 0.0
  %110 = vmatpush1.msra.mxu0 0.0
  %111 = vmatprep.subr.mxu0 0.0
  %112 = vmatpush1.msra.mxu0 0.0
  %113 = vmatprep.subr.mxu0 0.0
  %114 = vmatpush1.msra.mxu0 0.0
  %115 = vmatprep.subr.mxu0 0.0
  %116 = vmatpush1.msra.mxu0 0.0
  %117 = vmatprep.subr.mxu0 0.0
  %118 = vmatpush1.msra.mxu0 0.0
  %119 = vmatprep.subr.mxu0 0.0
  %120 = vmatpush1.msra.mxu0 0.0
  %121 = vmatprep.subr.mxu0 0.0
  %122 = vmatpush1.msra.mxu0 0.0
  %123 = vmatprep.subr.mxu0 0.0
  %124 = vmatpush1.msra.mxu0 0.0
  %125 = vmatprep.subr.mxu0 0.0
  %126 = vmatpush1.msra.mxu0 %v68
  %127 = vmatprep.subr.mxu0 0.0
  %128 = vmatpush1.msra.mxu0 %v67
  %129 = vmatprep.subr.mxu0 0.0
  %130 = vmatpush1.msra.mxu0 %v66
  %131 = vmatprep.subr.mxu0 0.0
  %132 = vmatpush1.msra.mxu0 %v65
  %133 = vmatprep.subr.mxu0 0.0
  %134 = vmatpush2.msra.mxu0 0.0
  %135 = vmatprep.subr.mxu0 0.0
  %136 = vmatpush2.msra.mxu0 0.0
  %137 = vmatprep.subr.mxu0 0.0
  %138 = vmatpush2.msra.mxu0 0.0
  %139 = vmatprep.subr.mxu0 0.0
  %140 = vmatpush2.msra.mxu0 0.0
  %141 = vmatprep.subr.mxu0 0.0
  %142 = vmatpush2.msra.mxu0 0.0
  %143 = vmatprep.subr.mxu0 0.0
  %144 = vmatpush2.msra.mxu0 0.0
  %145 = vmatprep.subr.mxu0 0.0
  %146 = vmatpush2.msra.mxu0 0.0
  %147 = vmatprep.subr.mxu0 0.0
  %148 = vmatpush2.msra.mxu0 0.0
  %149 = vmatprep.subr.mxu0 0.0
  %150 = vmatpush2.msra.mxu0 0.0
  %151 = vmatprep.subr.mxu0 0.0
  %152 = vmatpush2.msra.mxu0 0.0
  %153 = vmatprep.subr.mxu0 0.0
  %154 = vmatpush2.msra.mxu0 0.0
  %155 = vmatprep.subr.mxu0 0.0
  %156 = vmatpush2.msra.mxu0 0.0
  %157 = vmatprep.subr.mxu0 0.0
  %158 = vmatpush2.msra.mxu0 0.0
  %159 = vmatprep.subr.mxu0 0.0
  %160 = vmatpush2.msra.mxu0 0.0
  %161 = vmatprep.subr.mxu0 0.0
  %162 = vmatpush2.msra.mxu0 0.0
  %163 = vmatprep.subr.mxu0 0.0
  %164 = vmatpush2.msra.mxu0 0.0
  %165 = vmatprep.mubr.f32.mxu0 0.0
  %166 = vmatmul.mubr.f32.gmra.mxu0 %v78
  %v167 = vpop.f32.mrf.mxu0
  %v168 = vadd.f32 %v74, %v167
  %v169 = vpop.f32.mrf.mxu0
  %170 = vmatprep.mubr.f32.mxu0 0.0
  %171 = vmatmul.mubr.f32.gmra.mxu0 %v81
  %v172 = vpop.f32.mrf.mxu0
  %v173 = vadd.f32 %v74, %v172
  %v174 = vpop.f32.mrf.mxu0
  %175 = vmatprep.mubr.f32.mxu0 0.0
  %176 = vmatmul.mubr.f32.gmra.mxu0 %v84
  %v177 = vpop.f32.mrf.mxu0
  %v178 = vadd.f32 %v74, %v177
  %v179 = vpop.f32.mrf.mxu0
  %180 = vmatprep.mubr.f32.mxu0 0.0
  %181 = vmatmul.mubr.f32.gmra.mxu0 %v87
  %v182 = vpop.f32.mrf.mxu0
  %v183 = vadd.f32 %v74, %v182
  %v184 = vpop.f32.mrf.mxu0
  %185 = vmatprep.mubr.f32.mxu0 0.0
  %186 = vmatmul.mubr.f32.gmra.mxu0 %v90
  %v187 = vpop.f32.mrf.mxu0
  %v188 = vadd.f32 %v74, %v187
  %v189 = vpop.f32.mrf.mxu0
  %190 = vmatprep.mubr.f32.mxu0 0.0
  %191 = vmatmul.mubr.f32.gmra.mxu0 %v93
  %v192 = vpop.f32.mrf.mxu0
  %v193 = vadd.f32 %v74, %v192
  %v194 = vpop.f32.mrf.mxu0
  %195 = vmatprep.mubr.f32.mxu0 0.0
  %196 = vmatmul.mubr.f32.gmra.mxu0 %v96
  %v197 = vpop.f32.mrf.mxu0
  %v198 = vadd.f32 %v74, %v197
  %v199 = vpop.f32.mrf.mxu0
  %200 = vmatprep.mubr.f32.mxu0 0.0
  %201 = vmatmul.mubr.f32.gmra.mxu0 %v99
  %v202 = vpop.f32.mrf.mxu0
  %v203 = vadd.f32 %v74, %v202
  %v204 = vpop.f32.mrf.mxu0
  %205 = vdwg.mxu0
  %vm206 = vcmask 785408
  %207 = vst.msk [vmem:[#allocation2] sm:$0xff] %vm206, %v168
  %208 = vst.msk [vmem:[#allocation2 + $0x8] sm:$0xff] %vm206, %v173
  %209 = vst.msk [vmem:[#allocation2 + $0x10] sm:$0xff] %vm206, %v178
  %210 = vst.msk [vmem:[#allocation2 + $0x18] sm:$0xff] %vm206, %v183
  %211 = vst.msk [vmem:[#allocation2 + $0x20] sm:$0xff] %vm206, %v188
  %212 = vst.msk [vmem:[#allocation2 + $0x28] sm:$0xff] %vm206, %v193
  %213 = vst.msk [vmem:[#allocation2 + $0x30] sm:$0xff] %vm206, %v198
  %214 = vst.msk [vmem:[#allocation2 + $0x38] sm:$0xff] %vm206, %v203
  %v215 = vld [vmem:[%s3] sm:$0xff]
  %v216 = vld [vmem:[%s3 + $0x8] sm:$0xff]
  %v217 = vld [vmem:[%s3 + $0x10] sm:$0xff]
  %v218 = vld [vmem:[%s3 + $0x18] sm:$0xff]
  %v219 = vld [vmem:[%s6] sm:$0x1]
  %v221 = vlaneseq
  %v222 = vshrl.u32 %v221, 7
  %v223 = vsub.s32 0, %v222
  %v224 = vrot.slane %v219, %v223
  %226 = vmatprep.subr.mxu0 0.0
  %227 = vmatpush1.msra.mxu0 0.0
  %228 = vmatprep.subr.mxu0 0.0
  %229 = vmatpush1.msra.mxu0 0.0
  %230 = vmatprep.subr.mxu0 0.0
  %231 = vmatpush1.msra.mxu0 0.0
  %232 = vmatprep.subr.mxu0 0.0
  %233 = vmatpush1.msra.mxu0 0.0
  %234 = vmatprep.subr.mxu0 0.0
  %235 = vmatpush1.msra.mxu0 0.0
  %236 = vmatprep.subr.mxu0 0.0
  %237 = vmatpush1.msra.mxu0 0.0
  %238 = vmatprep.subr.mxu0 0.0
  %239 = vmatpush1.msra.mxu0 0.0
  %240 = vmatprep.subr.mxu0 0.0
  %241 = vmatpush1.msra.mxu0 0.0
  %242 = vmatprep.subr.mxu0 0.0
  %243 = vmatpush1.msra.mxu0 0.0
  %244 = vmatprep.subr.mxu0 0.0
  %245 = vmatpush1.msra.mxu0 0.0
  %246 = vmatprep.subr.mxu0 0.0
  %247 = vmatpush1.msra.mxu0 0.0
  %248 = vmatprep.subr.mxu0 0.0
  %249 = vmatpush1.msra.mxu0 0.0
  %250 = vmatprep.subr.mxu0 0.0
  %251 = vmatpush1.msra.mxu0 %v218
  %252 = vmatprep.subr.mxu0 0.0
  %253 = vmatpush1.msra.mxu0 %v217
  %254 = vmatprep.subr.mxu0 0.0
  %255 = vmatpush1.msra.mxu0 %v216
  %256 = vmatprep.subr.mxu0 0.0
  %257 = vmatpush1.msra.mxu0 %v215
  %258 = vmatprep.subr.mxu0 0.0
  %259 = vmatpush2.msra.mxu0 0.0
  %260 = vmatprep.subr.mxu0 0.0
  %261 = vmatpush2.msra.mxu0 0.0
  %262 = vmatprep.subr.mxu0 0.0
  %263 = vmatpush2.msra.mxu0 0.0
  %264 = vmatprep.subr.mxu0 0.0
  %265 = vmatpush2.msra.mxu0 0.0
  %266 = vmatprep.subr.mxu0 0.0
  %267 = vmatpush2.msra.mxu0 0.0
  %268 = vmatprep.subr.mxu0 0.0
  %269 = vmatpush2.msra.mxu0 0.0
  %270 = vmatprep.subr.mxu0 0.0
  %271 = vmatpush2.msra.mxu0 0.0
  %272 = vmatprep.subr.mxu0 0.0
  %273 = vmatpush2.msra.mxu0 0.0
  %274 = vmatprep.subr.mxu0 0.0
  %275 = vmatpush2.msra.mxu0 0.0
  %276 = vmatprep.subr.mxu0 0.0
  %277 = vmatpush2.msra.mxu0 0.0
  %278 = vmatprep.subr.mxu0 0.0
  %279 = vmatpush2.msra.mxu0 0.0
  %280 = vmatprep.subr.mxu0 0.0
  %281 = vmatpush2.msra.mxu0 0.0
  %282 = vmatprep.subr.mxu0 0.0
  %283 = vmatpush2.msra.mxu0 0.0
  %284 = vmatprep.subr.mxu0 0.0
  %285 = vmatpush2.msra.mxu0 0.0
  %286 = vmatprep.subr.mxu0 0.0
  %287 = vmatpush2.msra.mxu0 0.0
  %288 = vmatprep.subr.mxu0 0.0
  %289 = vmatpush2.msra.mxu0 0.0
  %290 = vmatprep.mubr.f32.mxu0 0.0
  %291 = vmatmul.mubr.f32.gmra.mxu0 %v78
  %v292 = vpop.f32.mrf.mxu0
  %v293 = vadd.f32 %v224, %v292
  %v294 = vpop.f32.mrf.mxu0
  %295 = vmatprep.mubr.f32.mxu0 0.0
  %296 = vmatmul.mubr.f32.gmra.mxu0 %v81
  %v297 = vpop.f32.mrf.mxu0
  %v298 = vadd.f32 %v224, %v297
  %v299 = vpop.f32.mrf.mxu0
  %300 = vmatprep.mubr.f32.mxu0 0.0
  %301 = vmatmul.mubr.f32.gmra.mxu0 %v84
  %v302 = vpop.f32.mrf.mxu0
  %v303 = vadd.f32 %v224, %v302
  %v304 = vpop.f32.mrf.mxu0
  %305 = vmatprep.mubr.f32.mxu0 0.0
  %306 = vmatmul.mubr.f32.gmra.mxu0 %v87
  %v307 = vpop.f32.mrf.mxu0
  %v308 = vadd.f32 %v224, %v307
  %v309 = vpop.f32.mrf.mxu0
  %310 = vmatprep.mubr.f32.mxu0 0.0
  %311 = vmatmul.mubr.f32.gmra.mxu0 %v90
  %v312 = vpop.f32.mrf.mxu0
  %v313 = vadd.f32 %v224, %v312
  %v314 = vpop.f32.mrf.mxu0
  %315 = vmatprep.mubr.f32.mxu0 0.0
  %316 = vmatmul.mubr.f32.gmra.mxu0 %v93
  %v317 = vpop.f32.mrf.mxu0
  %v318 = vadd.f32 %v224, %v317
  %v319 = vpop.f32.mrf.mxu0
  %320 = vmatprep.mubr.f32.mxu0 0.0
  %321 = vmatmul.mubr.f32.gmra.mxu0 %v96
  %v322 = vpop.f32.mrf.mxu0
  %v323 = vadd.f32 %v224, %v322
  %v324 = vpop.f32.mrf.mxu0
  %325 = vmatprep.mubr.f32.mxu0 0.0
  %326 = vmatmul.mubr.f32.gmra.mxu0 %v99
  %v327 = vpop.f32.mrf.mxu0
  %v328 = vadd.f32 %v224, %v327
  %v329 = vpop.f32.mrf.mxu0
  %330 = vdwg.mxu0
  %331 = vst.msk [vmem:[#allocation3] sm:$0xff] %vm206, %v293
  %332 = vst.msk [vmem:[#allocation3 + $0x8] sm:$0xff] %vm206, %v298
  %333 = vst.msk [vmem:[#allocation3 + $0x10] sm:$0xff] %vm206, %v303
  %334 = vst.msk [vmem:[#allocation3 + $0x18] sm:$0xff] %vm206, %v308
  %335 = vst.msk [vmem:[#allocation3 + $0x20] sm:$0xff] %vm206, %v313
  %336 = vst.msk [vmem:[#allocation3 + $0x28] sm:$0xff] %vm206, %v318
  %337 = vst.msk [vmem:[#allocation3 + $0x30] sm:$0xff] %vm206, %v323
  %338 = vst.msk [vmem:[#allocation3 + $0x38] sm:$0xff] %vm206, %v328
  %v339 = vld [vmem:[%s4] sm:$0xff]
  %v340 = vld [vmem:[%s4 + $0x8] sm:$0xff]
  %v341 = vld [vmem:[%s4 + $0x10] sm:$0xff]
  %v342 = vld [vmem:[%s4 + $0x18] sm:$0xff]
  %v343 = vld [vmem:[%s4 + $0x20] sm:$0xff]
  %v344 = vld [vmem:[%s4 + $0x28] sm:$0xff]
  %v345 = vld [vmem:[%s4 + $0x30] sm:$0xff]
  %v346 = vld [vmem:[%s4 + $0x38] sm:$0xff]
  %v347 = vld [vmem:[%s4 + $0x40] sm:$0xff]
  %v348 = vld [vmem:[%s4 + $0x48] sm:$0xff]
  %v349 = vld [vmem:[%s4 + $0x50] sm:$0xff]
  %v350 = vld [vmem:[%s4 + $0x58] sm:$0xff]
  %v351 = vld [vmem:[%s4 + $0x60] sm:$0xff]
  %v352 = vld [vmem:[%s4 + $0x68] sm:$0xff]
  %v353 = vld [vmem:[%s4 + $0x70] sm:$0xff]
  %v354 = vld [vmem:[%s4 + $0x78] sm:$0xff]
  %v355 = vld [vmem:[%s7] sm:$0x3]
  %v356 = vld [vmem:[#allocation2] sm:$0xff]
  %s357 = scalar_lea.vmem [#allocation3], 56
  %v358 = vld [vmem:[%s357] sm:$0xff]
  %v360 = vlaneseq
  %v361 = vshrl.u32 %v360, 7
  %v362 = vsub.s32 0, %v361
  %v363 = vrot.slane %v355, %v362
  %v364 = vlaneseq
  %v365 = vshrl.u32 %v364, 7
  %v366 = vsub.s32 1, %v365
  %v367 = vrot.slane %v355, %v366
  %vm370 = vcmask 523264
  %v372 = vsel %vm370, 0.0, 0
  %374 = vmatprep.subr.mxu0 0.0
  %375 = vmatpush1.msra.mxu0 0.0
  %376 = vmatprep.subr.mxu0 0.0
  %377 = vmatpush1.msra.mxu0 0.0
  %378 = vmatprep.subr.mxu0 0.0
  %379 = vmatpush1.msra.mxu0 0.0
  %380 = vmatprep.subr.mxu0 0.0
  %381 = vmatpush1.msra.mxu0 0.0
  %382 = vmatprep.subr.mxu0 0.0
  %383 = vmatpush1.msra.mxu0 0.0
  %384 = vmatprep.subr.mxu0 0.0
  %385 = vmatpush1.msra.mxu0 0.0
  %386 = vmatprep.subr.mxu0 0.0
  %387 = vmatpush1.msra.mxu0 0.0
  %388 = vmatprep.subr.mxu0 0.0
  %389 = vmatpush1.msra.mxu0 0.0
  %390 = vmatprep.subr.mxu0 %v354
  %391 = vmatpush1.msra.mxu0 %v353
  %392 = vmatprep.subr.mxu0 %v352
  %393 = vmatpush1.msra.mxu0 %v351
  %394 = vmatprep.subr.mxu0 %v350
  %395 = vmatpush1.msra.mxu0 %v349
  %396 = vmatprep.subr.mxu0 %v348
  %397 = vmatpush1.msra.mxu0 %v347
  %398 = vmatprep.subr.mxu0 %v346
  %399 = vmatpush1.msra.mxu0 %v345
  %400 = vmatprep.subr.mxu0 %v344
  %401 = vmatpush1.msra.mxu0 %v343
  %402 = vmatprep.subr.mxu0 %v342
  %403 = vmatpush1.msra.mxu0 %v341
  %404 = vmatprep.subr.mxu0 %v340
  %405 = vmatpush1.msra.mxu0 %v339
  %406 = vmatprep.subr.mxu0 0.0
  %407 = vmatpush2.msra.mxu0 0.0
  %408 = vmatprep.subr.mxu0 0.0
  %409 = vmatpush2.msra.mxu0 0.0
  %410 = vmatprep.subr.mxu0 0.0
  %411 = vmatpush2.msra.mxu0 0.0
  %412 = vmatprep.subr.mxu0 0.0
  %413 = vmatpush2.msra.mxu0 0.0
  %414 = vmatprep.subr.mxu0 0.0
  %415 = vmatpush2.msra.mxu0 0.0
  %416 = vmatprep.subr.mxu0 0.0
  %417 = vmatpush2.msra.mxu0 0.0
  %418 = vmatprep.subr.mxu0 0.0
  %419 = vmatpush2.msra.mxu0 0.0
  %420 = vmatprep.subr.mxu0 0.0
  %421 = vmatpush2.msra.mxu0 0.0
  %422 = vmatprep.subr.mxu0 0.0
  %423 = vmatpush2.msra.mxu0 0.0
  %424 = vmatprep.subr.mxu0 0.0
  %425 = vmatpush2.msra.mxu0 0.0
  %426 = vmatprep.subr.mxu0 0.0
  %427 = vmatpush2.msra.mxu0 0.0
  %428 = vmatprep.subr.mxu0 0.0
  %429 = vmatpush2.msra.mxu0 0.0
  %430 = vmatprep.subr.mxu0 0.0
  %431 = vmatpush2.msra.mxu0 0.0
  %432 = vmatprep.subr.mxu0 0.0
  %433 = vmatpush2.msra.mxu0 0.0
  %434 = vmatprep.subr.mxu0 0.0
  %435 = vmatpush2.msra.mxu0 0.0
  %436 = vmatprep.subr.mxu0 0.0
  %437 = vmatpush2.msra.mxu0 0.0
  %438 = vmatprep.mubr.f32.mxu0 0.0
  %439 = vmatmul.mubr.f32.gmra.mxu0 %v372
  %v440 = vpop.f32.mrf.mxu0
  %v441 = vadd.f32 %v363, %v440
  %v442 = vpop.f32.mrf.mxu0
  %v443 = vadd.f32 %v367, %v442
  %444 = vdwg.mxu0
  %v445 = vadd.f32 %v356, %v441
  %v446 = vxor.u32 %v445, 2147483648
  %v447 = vmul.f32 %v446, 1.442695
  %v448 = vpow.pop %v447
  %v449 = vadd.f32 %v448, 1.0
  %v450 = vrcp.pop %v449
  %v451 = vmul.f32 1.0, %v450
  %453 = vrot.lane.b32.xlu0 %v441, 64
  %v454 = vpop.permute.xlu0 %453
  %v456 = vmul.f32 %v451, %v454
  %458 = vrot.lane.b32.xlu0 %v456, 64
  %v459 = vpop.permute.xlu0 %458
  %v461 = vadd.f32 %v356, %v459
  %v462 = vtanh.pop %v461
  %v463 = vsub.f32 1.0, %v451
  %465 = vrot.lane.b32.xlu0 %v462, 96
  %v466 = vpop.permute.xlu0 %465
  %v468 = vmul.f32 %v463, %v466
  %v469 = vmul.f32 %v451, 0.0
  %v470 = vadd.f32 %v468, %v469
  %v471 = vadd.f32 %v358, %v443
  %v472 = vxor.u32 %v471, 2147483648
  %v473 = vmul.f32 %v472, 1.442695
  %v474 = vpow.pop %v473
  %v475 = vadd.f32 %v474, 1.0
  %v476 = vrcp.pop %v475
  %v477 = vmul.f32 1.0, %v476
  %479 = vrot.lane.b32.xlu0 %v443, 64
  %v480 = vpop.permute.xlu0 %479
  %v482 = vmul.f32 %v477, %v480
  %484 = vrot.lane.b32.xlu0 %v482, 64
  %v485 = vpop.permute.xlu0 %484
  %v487 = vadd.f32 %v358, %v485
  %v488 = vtanh.pop %v487
  %v489 = vsub.f32 1.0, %v477
  %491 = vrot.lane.b32.xlu0 %v488, 96
  %v492 = vpop.permute.xlu0 %491
  %v494 = vmul.f32 %v489, %v492
  %v495 = vmul.f32 %v477, 0.0
  %v496 = vadd.f32 %v494, %v495
  %vm497 = vcmp.gt.s32.totalorder %v56, 0
  %v498 = vsel %vm497, 1, 0
  %499 = vset.pattern.permute.xlu0 0
  %500 = vperm.xlu0 %499, %v498
  %v501 = vpop.permute.xlu0 %500
  %vm502 = vcmp.eq.s32.totalorder %v501, 1
  %v503 = vsel %vm502, %v470, 0.0
  %vm504 = vcmp.gt.s32.totalorder %v56, 7
  %v505 = vsel %vm504, 1, 0
  %506 = vset.pattern.permute.xlu0 0
  %507 = vperm.xlu0 %506, %v505
  %v508 = vpop.permute.xlu0 %507
  %vm509 = vcmp.eq.s32.totalorder %v508, 1
  %v510 = vsel %vm509, %v496, 0.0
  %512 = vrot.lane.b32.xlu0 %v503, 96
  %v513 = vpop.permute.xlu0 %512
  %515 = vst.msk [vmem:[#allocation4] sm:$0xff] %vm76, %v513
  %517 = vrot.lane.b32.xlu0 %v510, 96
  %v518 = vpop.permute.xlu0 %517
  %s520 = scalar_lea.vmem [#allocation5], 56
  %521 = vst.msk [vmem:[%s520] sm:$0xff] %vm76, %v518
  %s522 = scalar_lea.vmem [#allocation2], 8
  %v523 = vld [vmem:[%s522] sm:$0xff]
  %s524 = scalar_lea.vmem [#allocation3], 48
  %v525 = vld [vmem:[%s524] sm:$0xff]
  %v526 = vsel %vm76, %v513, %v510
  %v528 = vsel %vm370, %v526, 0
  %530 = vmatprep.subr.mxu0 0.0
  %531 = vmatpush1.msra.mxu0 0.0
  %532 = vmatprep.subr.mxu0 0.0
  %533 = vmatpush1.msra.mxu0 0.0
  %534 = vmatprep.subr.mxu0 0.0
  %535 = vmatpush1.msra.mxu0 0.0
  %536 = vmatprep.subr.mxu0 0.0
  %537 = vmatpush1.msra.mxu0 0.0
  %538 = vmatprep.subr.mxu0 0.0
  %539 = vmatpush1.msra.mxu0 0.0
  %540 = vmatprep.subr.mxu0 0.0
  %541 = vmatpush1.msra.mxu0 0.0
  %542 = vmatprep.subr.mxu0 0.0
  %543 = vmatpush1.msra.mxu0 0.0
  %544 = vmatprep.subr.mxu0 0.0
  %545 = vmatpush1.msra.mxu0 0.0
  %546 = vmatprep.subr.mxu0 %v354
  %547 = vmatpush1.msra.mxu0 %v353
  %548 = vmatprep.subr.mxu0 %v352
  %549 = vmatpush1.msra.mxu0 %v351
  %550 = vmatprep.subr.mxu0 %v350
  %551 = vmatpush1.msra.mxu0 %v349
  %552 = vmatprep.subr.mxu0 %v348
  %553 = vmatpush1.msra.mxu0 %v347
  %554 = vmatprep.subr.mxu0 %v346
  %555 = vmatpush1.msra.mxu0 %v345
  %556 = vmatprep.subr.mxu0 %v344
  %557 = vmatpush1.msra.mxu0 %v343
  %558 = vmatprep.subr.mxu0 %v342
  %559 = vmatpush1.msra.mxu0 %v341
  %560 = vmatprep.subr.mxu0 %v340
  %561 = vmatpush1.msra.mxu0 %v339
  %562 = vmatprep.subr.mxu0 0.0
  %563 = vmatpush2.msra.mxu0 0.0
  %564 = vmatprep.subr.mxu0 0.0
  %565 = vmatpush2.msra.mxu0 0.0
  %566 = vmatprep.subr.mxu0 0.0
  %567 = vmatpush2.msra.mxu0 0.0
  %568 = vmatprep.subr.mxu0 0.0
  %569 = vmatpush2.msra.mxu0 0.0
  %570 = vmatprep.subr.mxu0 0.0
  %571 = vmatpush2.msra.mxu0 0.0
  %572 = vmatprep.subr.mxu0 0.0
  %573 = vmatpush2.msra.mxu0 0.0
  %574 = vmatprep.subr.mxu0 0.0
  %575 = vmatpush2.msra.mxu0 0.0
  %576 = vmatprep.subr.mxu0 0.0
  %577 = vmatpush2.msra.mxu0 0.0
  %578 = vmatprep.subr.mxu0 0.0
  %579 = vmatpush2.msra.mxu0 0.0
  %580 = vmatprep.subr.mxu0 0.0
  %581 = vmatpush2.msra.mxu0 0.0
  %582 = vmatprep.subr.mxu0 0.0
  %583 = vmatpush2.msra.mxu0 0.0
  %584 = vmatprep.subr.mxu0 0.0
  %585 = vmatpush2.msra.mxu0 0.0
  %586 = vmatprep.subr.mxu0 0.0
  %587 = vmatpush2.msra.mxu0 0.0
  %588 = vmatprep.subr.mxu0 0.0
  %589 = vmatpush2.msra.mxu0 0.0
  %590 = vmatprep.subr.mxu0 0.0
  %591 = vmatpush2.msra.mxu0 0.0
  %592 = vmatprep.subr.mxu0 0.0
  %593 = vmatpush2.msra.mxu0 0.0
  %594 = vmatprep.mubr.f32.mxu0 0.0
  %595 = vmatmul.mubr.f32.gmra.mxu0 %v528
  %v596 = vpop.f32.mrf.mxu0
  %v597 = vadd.f32 %v363, %v596
  %v598 = vpop.f32.mrf.mxu0
  %v599 = vadd.f32 %v367, %v598
  %600 = vdwg.mxu0
  %v601 = vadd.f32 %v523, %v597
  %v602 = vxor.u32 %v601, 2147483648
  %v603 = vmul.f32 %v602, 1.442695
  %v604 = vpow.pop %v603
  %v605 = vadd.f32 %v604, 1.0
  %v606 = vrcp.pop %v605
  %v607 = vmul.f32 1.0, %v606
  %609 = vrot.lane.b32.xlu0 %v597, 64
  %v610 = vpop.permute.xlu0 %609
  %v612 = vmul.f32 %v607, %v610
  %614 = vrot.lane.b32.xlu0 %v612, 64
  %v615 = vpop.permute.xlu0 %614
  %v617 = vadd.f32 %v523, %v615
  %v618 = vtanh.pop %v617
  %v619 = vsub.f32 1.0, %v607
  %621 = vrot.lane.b32.xlu0 %v618, 96
  %v622 = vpop.permute.xlu0 %621
  %v624 = vmul.f32 %v619, %v622
  %v625 = vmul.f32 %v607, %v503
  %v626 = vadd.f32 %v624, %v625
  %v627 = vadd.f32 %v525, %v599
  %v628 = vxor.u32 %v627, 2147483648
  %v629 = vmul.f32 %v628, 1.442695
  %v630 = vpow.pop %v629
  %v631 = vadd.f32 %v630, 1.0
  %v632 = vrcp.pop %v631
  %v633 = vmul.f32 1.0, %v632
  %635 = vrot.lane.b32.xlu0 %v599, 64
  %v636 = vpop.permute.xlu0 %635
  %v638 = vmul.f32 %v633, %v636
  %640 = vrot.lane.b32.xlu0 %v638, 64
  %v641 = vpop.permute.xlu0 %640
  %v643 = vadd.f32 %v525, %v641
  %v644 = vtanh.pop %v643
  %v645 = vsub.f32 1.0, %v633
  %647 = vrot.lane.b32.xlu0 %v644, 96
  %v648 = vpop.permute.xlu0 %647
  %v650 = vmul.f32 %v645, %v648
  %v651 = vmul.f32 %v633, %v510
  %v652 = vadd.f32 %v650, %v651
  %vm653 = vcmp.gt.s32.totalorder %v56, 1
  %v654 = vsel %vm653, 1, 0
  %655 = vset.pattern.permute.xlu0 0
  %656 = vperm.xlu0 %655, %v654
  %v657 = vpop.permute.xlu0 %656
  %vm658 = vcmp.eq.s32.totalorder %v657, 1
  %v659 = vsel %vm658, %v626, %v503
  %vm660 = vcmp.gt.s32.totalorder %v56, 6
  %v661 = vsel %vm660, 1, 0
  %662 = vset.pattern.permute.xlu0 0
  %663 = vperm.xlu0 %662, %v661
  %v664 = vpop.permute.xlu0 %663
  %vm665 = vcmp.eq.s32.totalorder %v664, 1
  %v666 = vsel %vm665, %v652, %v510
  %668 = vrot.lane.b32.xlu0 %v659, 96
  %v669 = vpop.permute.xlu0 %668
  %s671 = scalar_lea.vmem [#allocation4], 8
  %672 = vst.msk [vmem:[%s671] sm:$0xff] %vm76, %v669
  %674 = vrot.lane.b32.xlu0 %v666, 96
  %v675 = vpop.permute.xlu0 %674
  %s677 = scalar_lea.vmem [#allocation5], 48
  %678 = vst.msk [vmem:[%s677] sm:$0xff] %vm76, %v675
  %s679 = scalar_lea.vmem [#allocation2], 16
  %v680 = vld [vmem:[%s679] sm:$0xff]
  %s681 = scalar_lea.vmem [#allocation3], 40
  %v682 = vld [vmem:[%s681] sm:$0xff]
  %v683 = vsel %vm76, %v669, %v666
  %v685 = vsel %vm370, %v683, 0
  %687 = vmatprep.subr.mxu0 0.0
  %688 = vmatpush1.msra.mxu0 0.0
  %689 = vmatprep.subr.mxu0 0.0
  %690 = vmatpush1.msra.mxu0 0.0
  %691 = vmatprep.subr.mxu0 0.0
  %692 = vmatpush1.msra.mxu0 0.0
  %693 = vmatprep.subr.mxu0 0.0
  %694 = vmatpush1.msra.mxu0 0.0
  %695 = vmatprep.subr.mxu0 0.0
  %696 = vmatpush1.msra.mxu0 0.0
  %697 = vmatprep.subr.mxu0 0.0
  %698 = vmatpush1.msra.mxu0 0.0
  %699 = vmatprep.subr.mxu0 0.0
  %700 = vmatpush1.msra.mxu0 0.0
  %701 = vmatprep.subr.mxu0 0.0
  %702 = vmatpush1.msra.mxu0 0.0
  %703 = vmatprep.subr.mxu0 %v354
  %704 = vmatpush1.msra.mxu0 %v353
  %705 = vmatprep.subr.mxu0 %v352
  %706 = vmatpush1.msra.mxu0 %v351
  %707 = vmatprep.subr.mxu0 %v350
  %708 = vmatpush1.msra.mxu0 %v349
  %709 = vmatprep.subr.mxu0 %v348
  %710 = vmatpush1.msra.mxu0 %v347
  %711 = vmatprep.subr.mxu0 %v346
  %712 = vmatpush1.msra.mxu0 %v345
  %713 = vmatprep.subr.mxu0 %v344
  %714 = vmatpush1.msra.mxu0 %v343
  %715 = vmatprep.subr.mxu0 %v342
  %716 = vmatpush1.msra.mxu0 %v341
  %717 = vmatprep.subr.mxu0 %v340
  %718 = vmatpush1.msra.mxu0 %v339
  %719 = vmatprep.subr.mxu0 0.0
  %720 = vmatpush2.msra.mxu0 0.0
  %721 = vmatprep.subr.mxu0 0.0
  %722 = vmatpush2.msra.mxu0 0.0
  %723 = vmatprep.subr.mxu0 0.0
  %724 = vmatpush2.msra.mxu0 0.0
  %725 = vmatprep.subr.mxu0 0.0
  %726 = vmatpush2.msra.mxu0 0.0
  %727 = vmatprep.subr.mxu0 0.0
  %728 = vmatpush2.msra.mxu0 0.0
  %729 = vmatprep.subr.mxu0 0.0
  %730 = vmatpush2.msra.mxu0 0.0
  %731 = vmatprep.subr.mxu0 0.0
  %732 = vmatpush2.msra.mxu0 0.0
  %733 = vmatprep.subr.mxu0 0.0
  %734 = vmatpush2.msra.mxu0 0.0
  %735 = vmatprep.subr.mxu0 0.0
  %736 = vmatpush2.msra.mxu0 0.0
  %737 = vmatprep.subr.mxu0 0.0
  %738 = vmatpush2.msra.mxu0 0.0
  %739 = vmatprep.subr.mxu0 0.0
  %740 = vmatpush2.msra.mxu0 0.0
  %741 = vmatprep.subr.mxu0 0.0
  %742 = vmatpush2.msra.mxu0 0.0
  %743 = vmatprep.subr.mxu0 0.0
  %744 = vmatpush2.msra.mxu0 0.0
  %745 = vmatprep.subr.mxu0 0.0
  %746 = vmatpush2.msra.mxu0 0.0
  %747 = vmatprep.subr.mxu0 0.0
  %748 = vmatpush2.msra.mxu0 0.0
  %749 = vmatprep.subr.mxu0 0.0
  %750 = vmatpush2.msra.mxu0 0.0
  %751 = vmatprep.mubr.f32.mxu0 0.0
  %752 = vmatmul.mubr.f32.gmra.mxu0 %v685
  %v753 = vpop.f32.mrf.mxu0
  %v754 = vadd.f32 %v363, %v753
  %v755 = vpop.f32.mrf.mxu0
  %v756 = vadd.f32 %v367, %v755
  %757 = vdwg.mxu0
  %v758 = vadd.f32 %v680, %v754
  %v759 = vxor.u32 %v758, 2147483648
  %v760 = vmul.f32 %v759, 1.442695
  %v761 = vpow.pop %v760
  %v762 = vadd.f32 %v761, 1.0
  %v763 = vrcp.pop %v762
  %v764 = vmul.f32 1.0, %v763
  %766 = vrot.lane.b32.xlu0 %v754, 64
  %v767 = vpop.permute.xlu0 %766
  %v769 = vmul.f32 %v764, %v767
  %771 = vrot.lane.b32.xlu0 %v769, 64
  %v772 = vpop.permute.xlu0 %771
  %v774 = vadd.f32 %v680, %v772
  %v775 = vtanh.pop %v774
  %v776 = vsub.f32 1.0, %v764
  %778 = vrot.lane.b32.xlu0 %v775, 96
  %v779 = vpop.permute.xlu0 %778
  %v781 = vmul.f32 %v776, %v779
  %v782 = vmul.f32 %v764, %v659
  %v783 = vadd.f32 %v781, %v782
  %v784 = vadd.f32 %v682, %v756
  %v785 = vxor.u32 %v784, 2147483648
  %v786 = vmul.f32 %v785, 1.442695
  %v787 = vpow.pop %v786
  %v788 = vadd.f32 %v787, 1.0
  %v789 = vrcp.pop %v788
  %v790 = vmul.f32 1.0, %v789
  %792 = vrot.lane.b32.xlu0 %v756, 64
  %v793 = vpop.permute.xlu0 %792
  %v795 = vmul.f32 %v790, %v793
  %797 = vrot.lane.b32.xlu0 %v795, 64
  %v798 = vpop.permute.xlu0 %797
  %v800 = vadd.f32 %v682, %v798
  %v801 = vtanh.pop %v800
  %v802 = vsub.f32 1.0, %v790
  %804 = vrot.lane.b32.xlu0 %v801, 96
  %v805 = vpop.permute.xlu0 %804
  %v807 = vmul.f32 %v802, %v805
  %v808 = vmul.f32 %v790, %v666
  %v809 = vadd.f32 %v807, %v808
  %vm810 = vcmp.gt.s32.totalorder %v56, 2
  %v811 = vsel %vm810, 1, 0
  %812 = vset.pattern.permute.xlu0 0
  %813 = vperm.xlu0 %812, %v811
  %v814 = vpop.permute.xlu0 %813
  %vm815 = vcmp.eq.s32.totalorder %v814, 1
  %v816 = vsel %vm815, %v783, %v659
  %vm817 = vcmp.gt.s32.totalorder %v56, 5
  %v818 = vsel %vm817, 1, 0
  %819 = vset.pattern.permute.xlu0 0
  %820 = vperm.xlu0 %819, %v818
  %v821 = vpop.permute.xlu0 %820
  %vm822 = vcmp.eq.s32.totalorder %v821, 1
  %v823 = vsel %vm822, %v809, %v666
  %825 = vrot.lane.b32.xlu0 %v816, 96
  %v826 = vpop.permute.xlu0 %825
  %s828 = scalar_lea.vmem [#allocation4], 16
  %829 = vst.msk [vmem:[%s828] sm:$0xff] %vm76, %v826
  %831 = vrot.lane.b32.xlu0 %v823, 96
  %v832 = vpop.permute.xlu0 %831
  %s834 = scalar_lea.vmem [#allocation5], 40
  %835 = vst.msk [vmem:[%s834] sm:$0xff] %vm76, %v832
  %s836 = scalar_lea.vmem [#allocation2], 24
  %v837 = vld [vmem:[%s836] sm:$0xff]
  %s838 = scalar_lea.vmem [#allocation3], 32
  %v839 = vld [vmem:[%s838] sm:$0xff]
  %v840 = vsel %vm76, %v826, %v823
  %v842 = vsel %vm370, %v840, 0
  %844 = vmatprep.subr.mxu0 0.0
  %845 = vmatpush1.msra.mxu0 0.0
  %846 = vmatprep.subr.mxu0 0.0
  %847 = vmatpush1.msra.mxu0 0.0
  %848 = vmatprep.subr.mxu0 0.0
  %849 = vmatpush1.msra.mxu0 0.0
  %850 = vmatprep.subr.mxu0 0.0
  %851 = vmatpush1.msra.mxu0 0.0
  %852 = vmatprep.subr.mxu0 0.0
  %853 = vmatpush1.msra.mxu0 0.0
  %854 = vmatprep.subr.mxu0 0.0
  %855 = vmatpush1.msra.mxu0 0.0
  %856 = vmatprep.subr.mxu0 0.0
  %857 = vmatpush1.msra.mxu0 0.0
  %858 = vmatprep.subr.mxu0 0.0
  %859 = vmatpush1.msra.mxu0 0.0
  %860 = vmatprep.subr.mxu0 %v354
  %861 = vmatpush1.msra.mxu0 %v353
  %862 = vmatprep.subr.mxu0 %v352
  %863 = vmatpush1.msra.mxu0 %v351
  %864 = vmatprep.subr.mxu0 %v350
  %865 = vmatpush1.msra.mxu0 %v349
  %866 = vmatprep.subr.mxu0 %v348
  %867 = vmatpush1.msra.mxu0 %v347
  %868 = vmatprep.subr.mxu0 %v346
  %869 = vmatpush1.msra.mxu0 %v345
  %870 = vmatprep.subr.mxu0 %v344
  %871 = vmatpush1.msra.mxu0 %v343
  %872 = vmatprep.subr.mxu0 %v342
  %873 = vmatpush1.msra.mxu0 %v341
  %874 = vmatprep.subr.mxu0 %v340
  %875 = vmatpush1.msra.mxu0 %v339
  %876 = vmatprep.subr.mxu0 0.0
  %877 = vmatpush2.msra.mxu0 0.0
  %878 = vmatprep.subr.mxu0 0.0
  %879 = vmatpush2.msra.mxu0 0.0
  %880 = vmatprep.subr.mxu0 0.0
  %881 = vmatpush2.msra.mxu0 0.0
  %882 = vmatprep.subr.mxu0 0.0
  %883 = vmatpush2.msra.mxu0 0.0
  %884 = vmatprep.subr.mxu0 0.0
  %885 = vmatpush2.msra.mxu0 0.0
  %886 = vmatprep.subr.mxu0 0.0
  %887 = vmatpush2.msra.mxu0 0.0
  %888 = vmatprep.subr.mxu0 0.0
  %889 = vmatpush2.msra.mxu0 0.0
  %890 = vmatprep.subr.mxu0 0.0
  %891 = vmatpush2.msra.mxu0 0.0
  %892 = vmatprep.subr.mxu0 0.0
  %893 = vmatpush2.msra.mxu0 0.0
  %894 = vmatprep.subr.mxu0 0.0
  %895 = vmatpush2.msra.mxu0 0.0
  %896 = vmatprep.subr.mxu0 0.0
  %897 = vmatpush2.msra.mxu0 0.0
  %898 = vmatprep.subr.mxu0 0.0
  %899 = vmatpush2.msra.mxu0 0.0
  %900 = vmatprep.subr.mxu0 0.0
  %901 = vmatpush2.msra.mxu0 0.0
  %902 = vmatprep.subr.mxu0 0.0
  %903 = vmatpush2.msra.mxu0 0.0
  %904 = vmatprep.subr.mxu0 0.0
  %905 = vmatpush2.msra.mxu0 0.0
  %906 = vmatprep.subr.mxu0 0.0
  %907 = vmatpush2.msra.mxu0 0.0
  %908 = vmatprep.mubr.f32.mxu0 0.0
  %909 = vmatmul.mubr.f32.gmra.mxu0 %v842
  %v910 = vpop.f32.mrf.mxu0
  %v911 = vadd.f32 %v363, %v910
  %v912 = vpop.f32.mrf.mxu0
  %v913 = vadd.f32 %v367, %v912
  %914 = vdwg.mxu0
  %v915 = vadd.f32 %v837, %v911
  %v916 = vxor.u32 %v915, 2147483648
  %v917 = vmul.f32 %v916, 1.442695
  %v918 = vpow.pop %v917
  %v919 = vadd.f32 %v918, 1.0
  %v920 = vrcp.pop %v919
  %v921 = vmul.f32 1.0, %v920
  %923 = vrot.lane.b32.xlu0 %v911, 64
  %v924 = vpop.permute.xlu0 %923
  %v926 = vmul.f32 %v921, %v924
  %928 = vrot.lane.b32.xlu0 %v926, 64
  %v929 = vpop.permute.xlu0 %928
  %v931 = vadd.f32 %v837, %v929
  %v932 = vtanh.pop %v931
  %v933 = vsub.f32 1.0, %v921
  %935 = vrot.lane.b32.xlu0 %v932, 96
  %v936 = vpop.permute.xlu0 %935
  %v938 = vmul.f32 %v933, %v936
  %v939 = vmul.f32 %v921, %v816
  %v940 = vadd.f32 %v938, %v939
  %v941 = vadd.f32 %v839, %v913
  %v942 = vxor.u32 %v941, 2147483648
  %v943 = vmul.f32 %v942, 1.442695
  %v944 = vpow.pop %v943
  %v945 = vadd.f32 %v944, 1.0
  %v946 = vrcp.pop %v945
  %v947 = vmul.f32 1.0, %v946
  %949 = vrot.lane.b32.xlu0 %v913, 64
  %v950 = vpop.permute.xlu0 %949
  %v952 = vmul.f32 %v947, %v950
  %954 = vrot.lane.b32.xlu0 %v952, 64
  %v955 = vpop.permute.xlu0 %954
  %v957 = vadd.f32 %v839, %v955
  %v958 = vtanh.pop %v957
  %v959 = vsub.f32 1.0, %v947
  %961 = vrot.lane.b32.xlu0 %v958, 96
  %v962 = vpop.permute.xlu0 %961
  %v964 = vmul.f32 %v959, %v962
  %v965 = vmul.f32 %v947, %v823
  %v966 = vadd.f32 %v964, %v965
  %vm967 = vcmp.gt.s32.totalorder %v56, 3
  %v968 = vsel %vm967, 1, 0
  %969 = vset.pattern.permute.xlu0 0
  %970 = vperm.xlu0 %969, %v968
  %v971 = vpop.permute.xlu0 %970
  %vm972 = vcmp.eq.s32.totalorder %v971, 1
  %v973 = vsel %vm972, %v940, %v816
  %vm974 = vcmp.gt.s32.totalorder %v56, 4
  %v975 = vsel %vm974, 1, 0
  %976 = vset.pattern.permute.xlu0 0
  %977 = vperm.xlu0 %976, %v975
  %v978 = vpop.permute.xlu0 %977
  %vm979 = vcmp.eq.s32.totalorder %v978, 1
  %v980 = vsel %vm979, %v966, %v823
  %982 = vrot.lane.b32.xlu0 %v973, 96
  %v983 = vpop.permute.xlu0 %982
  %s985 = scalar_lea.vmem [#allocation4], 24
  %986 = vst.msk [vmem:[%s985] sm:$0xff] %vm76, %v983
  %988 = vrot.lane.b32.xlu0 %v980, 96
  %v989 = vpop.permute.xlu0 %988
  %s991 = scalar_lea.vmem [#allocation5], 32
  %992 = vst.msk [vmem:[%s991] sm:$0xff] %vm76, %v989
  %s993 = scalar_lea.vmem [#allocation2], 32
  %v994 = vld [vmem:[%s993] sm:$0xff]
  %s995 = scalar_lea.vmem [#allocation3], 24
  %v996 = vld [vmem:[%s995] sm:$0xff]
  %v997 = vsel %vm76, %v983, %v980
  %v999 = vsel %vm370, %v997, 0
  %1001 = vmatprep.subr.mxu0 0.0
  %1002 = vmatpush1.msra.mxu0 0.0
  %1003 = vmatprep.subr.mxu0 0.0
  %1004 = vmatpush1.msra.mxu0 0.0
  %1005 = vmatprep.subr.mxu0 0.0
  %1006 = vmatpush1.msra.mxu0 0.0
  %1007 = vmatprep.subr.mxu0 0.0
  %1008 = vmatpush1.msra.mxu0 0.0
  %1009 = vmatprep.subr.mxu0 0.0
  %1010 = vmatpush1.msra.mxu0 0.0
  %1011 = vmatprep.subr.mxu0 0.0
  %1012 = vmatpush1.msra.mxu0 0.0
  %1013 = vmatprep.subr.mxu0 0.0
  %1014 = vmatpush1.msra.mxu0 0.0
  %1015 = vmatprep.subr.mxu0 0.0
  %1016 = vmatpush1.msra.mxu0 0.0
  %1017 = vmatprep.subr.mxu0 %v354
  %1018 = vmatpush1.msra.mxu0 %v353
  %1019 = vmatprep.subr.mxu0 %v352
  %1020 = vmatpush1.msra.mxu0 %v351
  %1021 = vmatprep.subr.mxu0 %v350
  %1022 = vmatpush1.msra.mxu0 %v349
  %1023 = vmatprep.subr.mxu0 %v348
  %1024 = vmatpush1.msra.mxu0 %v347
  %1025 = vmatprep.subr.mxu0 %v346
  %1026 = vmatpush1.msra.mxu0 %v345
  %1027 = vmatprep.subr.mxu0 %v344
  %1028 = vmatpush1.msra.mxu0 %v343
  %1029 = vmatprep.subr.mxu0 %v342
  %1030 = vmatpush1.msra.mxu0 %v341
  %1031 = vmatprep.subr.mxu0 %v340
  %1032 = vmatpush1.msra.mxu0 %v339
  %1033 = vmatprep.subr.mxu0 0.0
  %1034 = vmatpush2.msra.mxu0 0.0
  %1035 = vmatprep.subr.mxu0 0.0
  %1036 = vmatpush2.msra.mxu0 0.0
  %1037 = vmatprep.subr.mxu0 0.0
  %1038 = vmatpush2.msra.mxu0 0.0
  %1039 = vmatprep.subr.mxu0 0.0
  %1040 = vmatpush2.msra.mxu0 0.0
  %1041 = vmatprep.subr.mxu0 0.0
  %1042 = vmatpush2.msra.mxu0 0.0
  %1043 = vmatprep.subr.mxu0 0.0
  %1044 = vmatpush2.msra.mxu0 0.0
  %1045 = vmatprep.subr.mxu0 0.0
  %1046 = vmatpush2.msra.mxu0 0.0
  %1047 = vmatprep.subr.mxu0 0.0
  %1048 = vmatpush2.msra.mxu0 0.0
  %1049 = vmatprep.subr.mxu0 0.0
  %1050 = vmatpush2.msra.mxu0 0.0
  %1051 = vmatprep.subr.mxu0 0.0
  %1052 = vmatpush2.msra.mxu0 0.0
  %1053 = vmatprep.subr.mxu0 0.0
  %1054 = vmatpush2.msra.mxu0 0.0
  %1055 = vmatprep.subr.mxu0 0.0
  %1056 = vmatpush2.msra.mxu0 0.0
  %1057 = vmatprep.subr.mxu0 0.0
  %1058 = vmatpush2.msra.mxu0 0.0
  %1059 = vmatprep.subr.mxu0 0.0
  %1060 = vmatpush2.msra.mxu0 0.0
  %1061 = vmatprep.subr.mxu0 0.0
  %1062 = vmatpush2.msra.mxu0 0.0
  %1063 = vmatprep.subr.mxu0 0.0
  %1064 = vmatpush2.msra.mxu0 0.0
  %1065 = vmatprep.mubr.f32.mxu0 0.0
  %1066 = vmatmul.mubr.f32.gmra.mxu0 %v999
  %v1067 = vpop.f32.mrf.mxu0
  %v1068 = vadd.f32 %v363, %v1067
  %v1069 = vpop.f32.mrf.mxu0
  %v1070 = vadd.f32 %v367, %v1069
  %1071 = vdwg.mxu0
  %v1072 = vadd.f32 %v994, %v1068
  %v1073 = vxor.u32 %v1072, 2147483648
  %v1074 = vmul.f32 %v1073, 1.442695
  %v1075 = vpow.pop %v1074
  %v1076 = vadd.f32 %v1075, 1.0
  %v1077 = vrcp.pop %v1076
  %v1078 = vmul.f32 1.0, %v1077
  %1080 = vrot.lane.b32.xlu0 %v1068, 64
  %v1081 = vpop.permute.xlu0 %1080
  %v1083 = vmul.f32 %v1078, %v1081
  %1085 = vrot.lane.b32.xlu0 %v1083, 64
  %v1086 = vpop.permute.xlu0 %1085
  %v1088 = vadd.f32 %v994, %v1086
  %v1089 = vtanh.pop %v1088
  %v1090 = vsub.f32 1.0, %v1078
  %1092 = vrot.lane.b32.xlu0 %v1089, 96
  %v1093 = vpop.permute.xlu0 %1092
  %v1095 = vmul.f32 %v1090, %v1093
  %v1096 = vmul.f32 %v1078, %v973
  %v1097 = vadd.f32 %v1095, %v1096
  %v1098 = vadd.f32 %v996, %v1070
  %v1099 = vxor.u32 %v1098, 2147483648
  %v1100 = vmul.f32 %v1099, 1.442695
  %v1101 = vpow.pop %v1100
  %v1102 = vadd.f32 %v1101, 1.0
  %v1103 = vrcp.pop %v1102
  %v1104 = vmul.f32 1.0, %v1103
  %1106 = vrot.lane.b32.xlu0 %v1070, 64
  %v1107 = vpop.permute.xlu0 %1106
  %v1109 = vmul.f32 %v1104, %v1107
  %1111 = vrot.lane.b32.xlu0 %v1109, 64
  %v1112 = vpop.permute.xlu0 %1111
  %v1114 = vadd.f32 %v996, %v1112
  %v1115 = vtanh.pop %v1114
  %v1116 = vsub.f32 1.0, %v1104
  %1118 = vrot.lane.b32.xlu0 %v1115, 96
  %v1119 = vpop.permute.xlu0 %1118
  %v1121 = vmul.f32 %v1116, %v1119
  %v1122 = vmul.f32 %v1104, %v980
  %v1123 = vadd.f32 %v1121, %v1122
  %v1124 = vsel %vm979, %v1097, %v973
  %v1125 = vsel %vm972, %v1123, %v980
  %1127 = vrot.lane.b32.xlu0 %v1124, 96
  %v1128 = vpop.permute.xlu0 %1127
  %s1130 = scalar_lea.vmem [#allocation4], 32
  %1131 = vst.msk [vmem:[%s1130] sm:$0xff] %vm76, %v1128
  %1133 = vrot.lane.b32.xlu0 %v1125, 96
  %v1134 = vpop.permute.xlu0 %1133
  %s1136 = scalar_lea.vmem [#allocation5], 24
  %1137 = vst.msk [vmem:[%s1136] sm:$0xff] %vm76, %v1134
  %s1138 = scalar_lea.vmem [#allocation2], 40
  %v1139 = vld [vmem:[%s1138] sm:$0xff]
  %s1140 = scalar_lea.vmem [#allocation3], 16
  %v1141 = vld [vmem:[%s1140] sm:$0xff]
  %v1142 = vsel %vm76, %v1128, %v1125
  %v1144 = vsel %vm370, %v1142, 0
  %1146 = vmatprep.subr.mxu0 0.0
  %1147 = vmatpush1.msra.mxu0 0.0
  %1148 = vmatprep.subr.mxu0 0.0
  %1149 = vmatpush1.msra.mxu0 0.0
  %1150 = vmatprep.subr.mxu0 0.0
  %1151 = vmatpush1.msra.mxu0 0.0
  %1152 = vmatprep.subr.mxu0 0.0
  %1153 = vmatpush1.msra.mxu0 0.0
  %1154 = vmatprep.subr.mxu0 0.0
  %1155 = vmatpush1.msra.mxu0 0.0
  %1156 = vmatprep.subr.mxu0 0.0
  %1157 = vmatpush1.msra.mxu0 0.0
  %1158 = vmatprep.subr.mxu0 0.0
  %1159 = vmatpush1.msra.mxu0 0.0
  %1160 = vmatprep.subr.mxu0 0.0
  %1161 = vmatpush1.msra.mxu0 0.0
  %1162 = vmatprep.subr.mxu0 %v354
  %1163 = vmatpush1.msra.mxu0 %v353
  %1164 = vmatprep.subr.mxu0 %v352
  %1165 = vmatpush1.msra.mxu0 %v351
  %1166 = vmatprep.subr.mxu0 %v350
  %1167 = vmatpush1.msra.mxu0 %v349
  %1168 = vmatprep.subr.mxu0 %v348
  %1169 = vmatpush1.msra.mxu0 %v347
  %1170 = vmatprep.subr.mxu0 %v346
  %1171 = vmatpush1.msra.mxu0 %v345
  %1172 = vmatprep.subr.mxu0 %v344
  %1173 = vmatpush1.msra.mxu0 %v343
  %1174 = vmatprep.subr.mxu0 %v342
  %1175 = vmatpush1.msra.mxu0 %v341
  %1176 = vmatprep.subr.mxu0 %v340
  %1177 = vmatpush1.msra.mxu0 %v339
  %1178 = vmatprep.subr.mxu0 0.0
  %1179 = vmatpush2.msra.mxu0 0.0
  %1180 = vmatprep.subr.mxu0 0.0
  %1181 = vmatpush2.msra.mxu0 0.0
  %1182 = vmatprep.subr.mxu0 0.0
  %1183 = vmatpush2.msra.mxu0 0.0
  %1184 = vmatprep.subr.mxu0 0.0
  %1185 = vmatpush2.msra.mxu0 0.0
  %1186 = vmatprep.subr.mxu0 0.0
  %1187 = vmatpush2.msra.mxu0 0.0
  %1188 = vmatprep.subr.mxu0 0.0
  %1189 = vmatpush2.msra.mxu0 0.0
  %1190 = vmatprep.subr.mxu0 0.0
  %1191 = vmatpush2.msra.mxu0 0.0
  %1192 = vmatprep.subr.mxu0 0.0
  %1193 = vmatpush2.msra.mxu0 0.0
  %1194 = vmatprep.subr.mxu0 0.0
  %1195 = vmatpush2.msra.mxu0 0.0
  %1196 = vmatprep.subr.mxu0 0.0
  %1197 = vmatpush2.msra.mxu0 0.0
  %1198 = vmatprep.subr.mxu0 0.0
  %1199 = vmatpush2.msra.mxu0 0.0
  %1200 = vmatprep.subr.mxu0 0.0
  %1201 = vmatpush2.msra.mxu0 0.0
  %1202 = vmatprep.subr.mxu0 0.0
  %1203 = vmatpush2.msra.mxu0 0.0
  %1204 = vmatprep.subr.mxu0 0.0
  %1205 = vmatpush2.msra.mxu0 0.0
  %1206 = vmatprep.subr.mxu0 0.0
  %1207 = vmatpush2.msra.mxu0 0.0
  %1208 = vmatprep.subr.mxu0 0.0
  %1209 = vmatpush2.msra.mxu0 0.0
  %1210 = vmatprep.mubr.f32.mxu0 0.0
  %1211 = vmatmul.mubr.f32.gmra.mxu0 %v1144
  %v1212 = vpop.f32.mrf.mxu0
  %v1213 = vadd.f32 %v363, %v1212
  %v1214 = vpop.f32.mrf.mxu0
  %v1215 = vadd.f32 %v367, %v1214
  %1216 = vdwg.mxu0
  %v1217 = vadd.f32 %v1139, %v1213
  %v1218 = vxor.u32 %v1217, 2147483648
  %v1219 = vmul.f32 %v1218, 1.442695
  %v1220 = vpow.pop %v1219
  %v1221 = vadd.f32 %v1220, 1.0
  %v1222 = vrcp.pop %v1221
  %v1223 = vmul.f32 1.0, %v1222
  %1225 = vrot.lane.b32.xlu0 %v1213, 64
  %v1226 = vpop.permute.xlu0 %1225
  %v1228 = vmul.f32 %v1223, %v1226
  %1230 = vrot.lane.b32.xlu0 %v1228, 64
  %v1231 = vpop.permute.xlu0 %1230
  %v1233 = vadd.f32 %v1139, %v1231
  %v1234 = vtanh.pop %v1233
  %v1235 = vsub.f32 1.0, %v1223
  %1237 = vrot.lane.b32.xlu0 %v1234, 96
  %v1238 = vpop.permute.xlu0 %1237
  %v1240 = vmul.f32 %v1235, %v1238
  %v1241 = vmul.f32 %v1223, %v1124
  %v1242 = vadd.f32 %v1240, %v1241
  %v1243 = vadd.f32 %v1141, %v1215
  %v1244 = vxor.u32 %v1243, 2147483648
  %v1245 = vmul.f32 %v1244, 1.442695
  %v1246 = vpow.pop %v1245
  %v1247 = vadd.f32 %v1246, 1.0
  %v1248 = vrcp.pop %v1247
  %v1249 = vmul.f32 1.0, %v1248
  %1251 = vrot.lane.b32.xlu0 %v1215, 64
  %v1252 = vpop.permute.xlu0 %1251
  %v1254 = vmul.f32 %v1249, %v1252
  %1256 = vrot.lane.b32.xlu0 %v1254, 64
  %v1257 = vpop.permute.xlu0 %1256
  %v1259 = vadd.f32 %v1141, %v1257
  %v1260 = vtanh.pop %v1259
  %v1261 = vsub.f32 1.0, %v1249
  %1263 = vrot.lane.b32.xlu0 %v1260, 96
  %v1264 = vpop.permute.xlu0 %1263
  %v1266 = vmul.f32 %v1261, %v1264
  %v1267 = vmul.f32 %v1249, %v1125
  %v1268 = vadd.f32 %v1266, %v1267
  %v1269 = vsel %vm822, %v1242, %v1124
  %v1270 = vsel %vm815, %v1268, %v1125
  %1272 = vrot.lane.b32.xlu0 %v1269, 96
  %v1273 = vpop.permute.xlu0 %1272
  %s1275 = scalar_lea.vmem [#allocation4], 40
  %1276 = vst.msk [vmem:[%s1275] sm:$0xff] %vm76, %v1273
  %1278 = vrot.lane.b32.xlu0 %v1270, 96
  %v1279 = vpop.permute.xlu0 %1278
  %s1281 = scalar_lea.vmem [#allocation5], 16
  %1282 = vst.msk [vmem:[%s1281] sm:$0xff] %vm76, %v1279
  %s1283 = scalar_lea.vmem [#allocation2], 48
  %v1284 = vld [vmem:[%s1283] sm:$0xff]
  %s1285 = scalar_lea.vmem [#allocation3], 8
  %v1286 = vld [vmem:[%s1285] sm:$0xff]
  %v1287 = vsel %vm76, %v1273, %v1270
  %v1289 = vsel %vm370, %v1287, 0
  %1291 = vmatprep.subr.mxu0 0.0
  %1292 = vmatpush1.msra.mxu0 0.0
  %1293 = vmatprep.subr.mxu0 0.0
  %1294 = vmatpush1.msra.mxu0 0.0
  %1295 = vmatprep.subr.mxu0 0.0
  %1296 = vmatpush1.msra.mxu0 0.0
  %1297 = vmatprep.subr.mxu0 0.0
  %1298 = vmatpush1.msra.mxu0 0.0
  %1299 = vmatprep.subr.mxu0 0.0
  %1300 = vmatpush1.msra.mxu0 0.0
  %1301 = vmatprep.subr.mxu0 0.0
  %1302 = vmatpush1.msra.mxu0 0.0
  %1303 = vmatprep.subr.mxu0 0.0
  %1304 = vmatpush1.msra.mxu0 0.0
  %1305 = vmatprep.subr.mxu0 0.0
  %1306 = vmatpush1.msra.mxu0 0.0
  %1307 = vmatprep.subr.mxu0 %v354
  %1308 = vmatpush1.msra.mxu0 %v353
  %1309 = vmatprep.subr.mxu0 %v352
  %1310 = vmatpush1.msra.mxu0 %v351
  %1311 = vmatprep.subr.mxu0 %v350
  %1312 = vmatpush1.msra.mxu0 %v349
  %1313 = vmatprep.subr.mxu0 %v348
  %1314 = vmatpush1.msra.mxu0 %v347
  %1315 = vmatprep.subr.mxu0 %v346
  %1316 = vmatpush1.msra.mxu0 %v345
  %1317 = vmatprep.subr.mxu0 %v344
  %1318 = vmatpush1.msra.mxu0 %v343
  %1319 = vmatprep.subr.mxu0 %v342
  %1320 = vmatpush1.msra.mxu0 %v341
  %1321 = vmatprep.subr.mxu0 %v340
  %1322 = vmatpush1.msra.mxu0 %v339
  %1323 = vmatprep.subr.mxu0 0.0
  %1324 = vmatpush2.msra.mxu0 0.0
  %1325 = vmatprep.subr.mxu0 0.0
  %1326 = vmatpush2.msra.mxu0 0.0
  %1327 = vmatprep.subr.mxu0 0.0
  %1328 = vmatpush2.msra.mxu0 0.0
  %1329 = vmatprep.subr.mxu0 0.0
  %1330 = vmatpush2.msra.mxu0 0.0
  %1331 = vmatprep.subr.mxu0 0.0
  %1332 = vmatpush2.msra.mxu0 0.0
  %1333 = vmatprep.subr.mxu0 0.0
  %1334 = vmatpush2.msra.mxu0 0.0
  %1335 = vmatprep.subr.mxu0 0.0
  %1336 = vmatpush2.msra.mxu0 0.0
  %1337 = vmatprep.subr.mxu0 0.0
  %1338 = vmatpush2.msra.mxu0 0.0
  %1339 = vmatprep.subr.mxu0 0.0
  %1340 = vmatpush2.msra.mxu0 0.0
  %1341 = vmatprep.subr.mxu0 0.0
  %1342 = vmatpush2.msra.mxu0 0.0
  %1343 = vmatprep.subr.mxu0 0.0
  %1344 = vmatpush2.msra.mxu0 0.0
  %1345 = vmatprep.subr.mxu0 0.0
  %1346 = vmatpush2.msra.mxu0 0.0
  %1347 = vmatprep.subr.mxu0 0.0
  %1348 = vmatpush2.msra.mxu0 0.0
  %1349 = vmatprep.subr.mxu0 0.0
  %1350 = vmatpush2.msra.mxu0 0.0
  %1351 = vmatprep.subr.mxu0 0.0
  %1352 = vmatpush2.msra.mxu0 0.0
  %1353 = vmatprep.subr.mxu0 0.0
  %1354 = vmatpush2.msra.mxu0 0.0
  %1355 = vmatprep.mubr.f32.mxu0 0.0
  %1356 = vmatmul.mubr.f32.gmra.mxu0 %v1289
  %v1357 = vpop.f32.mrf.mxu0
  %v1358 = vadd.f32 %v363, %v1357
  %v1359 = vpop.f32.mrf.mxu0
  %v1360 = vadd.f32 %v367, %v1359
  %1361 = vdwg.mxu0
  %v1362 = vadd.f32 %v1284, %v1358
  %v1363 = vxor.u32 %v1362, 2147483648
  %v1364 = vmul.f32 %v1363, 1.442695
  %v1365 = vpow.pop %v1364
  %v1366 = vadd.f32 %v1365, 1.0
  %v1367 = vrcp.pop %v1366
  %v1368 = vmul.f32 1.0, %v1367
  %1370 = vrot.lane.b32.xlu0 %v1358, 64
  %v1371 = vpop.permute.xlu0 %1370
  %v1373 = vmul.f32 %v1368, %v1371
  %1375 = vrot.lane.b32.xlu0 %v1373, 64
  %v1376 = vpop.permute.xlu0 %1375
  %v1378 = vadd.f32 %v1284, %v1376
  %v1379 = vtanh.pop %v1378
  %v1380 = vsub.f32 1.0, %v1368
  %1382 = vrot.lane.b32.xlu0 %v1379, 96
  %v1383 = vpop.permute.xlu0 %1382
  %v1385 = vmul.f32 %v1380, %v1383
  %v1386 = vmul.f32 %v1368, %v1269
  %v1387 = vadd.f32 %v1385, %v1386
  %v1388 = vadd.f32 %v1286, %v1360
  %v1389 = vxor.u32 %v1388, 2147483648
  %v1390 = vmul.f32 %v1389, 1.442695
  %v1391 = vpow.pop %v1390
  %v1392 = vadd.f32 %v1391, 1.0
  %v1393 = vrcp.pop %v1392
  %v1394 = vmul.f32 1.0, %v1393
  %1396 = vrot.lane.b32.xlu0 %v1360, 64
  %v1397 = vpop.permute.xlu0 %1396
  %v1399 = vmul.f32 %v1394, %v1397
  %1401 = vrot.lane.b32.xlu0 %v1399, 64
  %v1402 = vpop.permute.xlu0 %1401
  %v1404 = vadd.f32 %v1286, %v1402
  %v1405 = vtanh.pop %v1404
  %v1406 = vsub.f32 1.0, %v1394
  %1408 = vrot.lane.b32.xlu0 %v1405, 96
  %v1409 = vpop.permute.xlu0 %1408
  %v1411 = vmul.f32 %v1406, %v1409
  %v1412 = vmul.f32 %v1394, %v1270
  %v1413 = vadd.f32 %v1411, %v1412
  %v1414 = vsel %vm665, %v1387, %v1269
  %v1415 = vsel %vm658, %v1413, %v1270
  %1417 = vrot.lane.b32.xlu0 %v1414, 96
  %v1418 = vpop.permute.xlu0 %1417
  %s1420 = scalar_lea.vmem [#allocation4], 48
  %1421 = vst.msk [vmem:[%s1420] sm:$0xff] %vm76, %v1418
  %1423 = vrot.lane.b32.xlu0 %v1415, 96
  %v1424 = vpop.permute.xlu0 %1423
  %s1426 = scalar_lea.vmem [#allocation5], 8
  %1427 = vst.msk [vmem:[%s1426] sm:$0xff] %vm76, %v1424
  %s1428 = scalar_lea.vmem [#allocation2], 56
  %v1429 = vld [vmem:[%s1428] sm:$0xff]
  %v1430 = vld [vmem:[#allocation3] sm:$0xff]
  %v1431 = vsel %vm76, %v1418, %v1415
  %v1433 = vsel %vm370, %v1431, 0
  %1435 = vmatprep.subr.mxu0 0.0
  %1436 = vmatpush1.msra.mxu0 0.0
  %1437 = vmatprep.subr.mxu0 0.0
  %1438 = vmatpush1.msra.mxu0 0.0
  %1439 = vmatprep.subr.mxu0 0.0
  %1440 = vmatpush1.msra.mxu0 0.0
  %1441 = vmatprep.subr.mxu0 0.0
  %1442 = vmatpush1.msra.mxu0 0.0
  %1443 = vmatprep.subr.mxu0 0.0
  %1444 = vmatpush1.msra.mxu0 0.0
  %1445 = vmatprep.subr.mxu0 0.0
  %1446 = vmatpush1.msra.mxu0 0.0
  %1447 = vmatprep.subr.mxu0 0.0
  %1448 = vmatpush1.msra.mxu0 0.0
  %1449 = vmatprep.subr.mxu0 0.0
  %1450 = vmatpush1.msra.mxu0 0.0
  %1451 = vmatprep.subr.mxu0 %v354
  %1452 = vmatpush1.msra.mxu0 %v353
  %1453 = vmatprep.subr.mxu0 %v352
  %1454 = vmatpush1.msra.mxu0 %v351
  %1455 = vmatprep.subr.mxu0 %v350
  %1456 = vmatpush1.msra.mxu0 %v349
  %1457 = vmatprep.subr.mxu0 %v348
  %1458 = vmatpush1.msra.mxu0 %v347
  %1459 = vmatprep.subr.mxu0 %v346
  %1460 = vmatpush1.msra.mxu0 %v345
  %1461 = vmatprep.subr.mxu0 %v344
  %1462 = vmatpush1.msra.mxu0 %v343
  %1463 = vmatprep.subr.mxu0 %v342
  %1464 = vmatpush1.msra.mxu0 %v341
  %1465 = vmatprep.subr.mxu0 %v340
  %1466 = vmatpush1.msra.mxu0 %v339
  %1467 = vmatprep.subr.mxu0 0.0
  %1468 = vmatpush2.msra.mxu0 0.0
  %1469 = vmatprep.subr.mxu0 0.0
  %1470 = vmatpush2.msra.mxu0 0.0
  %1471 = vmatprep.subr.mxu0 0.0
  %1472 = vmatpush2.msra.mxu0 0.0
  %1473 = vmatprep.subr.mxu0 0.0
  %1474 = vmatpush2.msra.mxu0 0.0
  %1475 = vmatprep.subr.mxu0 0.0
  %1476 = vmatpush2.msra.mxu0 0.0
  %1477 = vmatprep.subr.mxu0 0.0
  %1478 = vmatpush2.msra.mxu0 0.0
  %1479 = vmatprep.subr.mxu0 0.0
  %1480 = vmatpush2.msra.mxu0 0.0
  %1481 = vmatprep.subr.mxu0 0.0
  %1482 = vmatpush2.msra.mxu0 0.0
  %1483 = vmatprep.subr.mxu0 0.0
  %1484 = vmatpush2.msra.mxu0 0.0
  %1485 = vmatprep.subr.mxu0 0.0
  %1486 = vmatpush2.msra.mxu0 0.0
  %1487 = vmatprep.subr.mxu0 0.0
  %1488 = vmatpush2.msra.mxu0 0.0
  %1489 = vmatprep.subr.mxu0 0.0
  %1490 = vmatpush2.msra.mxu0 0.0
  %1491 = vmatprep.subr.mxu0 0.0
  %1492 = vmatpush2.msra.mxu0 0.0
  %1493 = vmatprep.subr.mxu0 0.0
  %1494 = vmatpush2.msra.mxu0 0.0
  %1495 = vmatprep.subr.mxu0 0.0
  %1496 = vmatpush2.msra.mxu0 0.0
  %1497 = vmatprep.subr.mxu0 0.0
  %1498 = vmatpush2.msra.mxu0 0.0
  %1499 = vmatprep.mubr.f32.mxu0 0.0
  %1500 = vmatmul.mubr.f32.gmra.mxu0 %v1433
  %v1501 = vpop.f32.mrf.mxu0
  %v1502 = vadd.f32 %v363, %v1501
  %v1503 = vpop.f32.mrf.mxu0
  %v1504 = vadd.f32 %v367, %v1503
  %1505 = vdwg.mxu0
  %v1506 = vadd.f32 %v1429, %v1502
  %v1507 = vxor.u32 %v1506, 2147483648
  %v1508 = vmul.f32 %v1507, 1.442695
  %v1509 = vpow.pop %v1508
  %v1510 = vadd.f32 %v1509, 1.0
  %v1511 = vrcp.pop %v1510
  %v1512 = vmul.f32 1.0, %v1511
  %1514 = vrot.lane.b32.xlu0 %v1502, 64
  %v1515 = vpop.permute.xlu0 %1514
  %v1517 = vmul.f32 %v1512, %v1515
  %1519 = vrot.lane.b32.xlu0 %v1517, 64
  %v1520 = vpop.permute.xlu0 %1519
  %v1522 = vadd.f32 %v1429, %v1520
  %v1523 = vtanh.pop %v1522
  %v1524 = vsub.f32 1.0, %v1512
  %1526 = vrot.lane.b32.xlu0 %v1523, 96
  %v1527 = vpop.permute.xlu0 %1526
  %v1529 = vmul.f32 %v1524, %v1527
  %v1530 = vmul.f32 %v1512, %v1414
  %v1531 = vadd.f32 %v1529, %v1530
  %v1532 = vadd.f32 %v1430, %v1504
  %v1533 = vxor.u32 %v1532, 2147483648
  %v1534 = vmul.f32 %v1533, 1.442695
  %v1535 = vpow.pop %v1534
  %v1536 = vadd.f32 %v1535, 1.0
  %v1537 = vrcp.pop %v1536
  %v1538 = vmul.f32 1.0, %v1537
  %1540 = vrot.lane.b32.xlu0 %v1504, 64
  %v1541 = vpop.permute.xlu0 %1540
  %v1543 = vmul.f32 %v1538, %v1541
  %1545 = vrot.lane.b32.xlu0 %v1543, 64
  %v1546 = vpop.permute.xlu0 %1545
  %v1548 = vadd.f32 %v1430, %v1546
  %v1549 = vtanh.pop %v1548
  %v1550 = vsub.f32 1.0, %v1538
  %1552 = vrot.lane.b32.xlu0 %v1549, 96
  %v1553 = vpop.permute.xlu0 %1552
  %v1555 = vmul.f32 %v1550, %v1553
  %v1556 = vmul.f32 %v1538, %v1415
  %v1557 = vadd.f32 %v1555, %v1556
  %v1558 = vsel %vm509, %v1531, %v1414
  %v1559 = vsel %vm502, %v1557, %v1415
  %1561 = vrot.lane.b32.xlu0 %v1558, 96
  %v1562 = vpop.permute.xlu0 %1561
  %s1564 = scalar_lea.vmem [#allocation4], 56
  %1565 = vst.msk [vmem:[%s1564] sm:$0xff] %vm76, %v1562
  %1567 = vrot.lane.b32.xlu0 %v1559, 96
  %v1568 = vpop.permute.xlu0 %1567
  %1570 = vst.msk [vmem:[#allocation5] sm:$0xff] %vm76, %v1568
  %v1571 = vld [vmem:[#allocation4] sm:$0xff]
  %v1572 = vld [vmem:[#allocation4 + $0x8] sm:$0xff]
  %v1573 = vld [vmem:[#allocation4 + $0x10] sm:$0xff]
  %v1574 = vld [vmem:[#allocation4 + $0x18] sm:$0xff]
  %v1575 = vld [vmem:[#allocation4 + $0x20] sm:$0xff]
  %v1576 = vld [vmem:[#allocation4 + $0x28] sm:$0xff]
  %v1577 = vld [vmem:[#allocation4 + $0x30] sm:$0xff]
  %v1578 = vld [vmem:[#allocation4 + $0x38] sm:$0xff]
  %v1579 = vld [vmem:[#allocation5] sm:$0xff]
  %v1580 = vld [vmem:[#allocation5 + $0x8] sm:$0xff]
  %v1581 = vld [vmem:[#allocation5 + $0x10] sm:$0xff]
  %v1582 = vld [vmem:[#allocation5 + $0x18] sm:$0xff]
  %v1583 = vld [vmem:[#allocation5 + $0x20] sm:$0xff]
  %v1584 = vld [vmem:[#allocation5 + $0x28] sm:$0xff]
  %v1585 = vld [vmem:[#allocation5 + $0x30] sm:$0xff]
  %v1586 = vld [vmem:[#allocation5 + $0x38] sm:$0xff]
  %v1587 = vld [vmem:[%s8] sm:$0xff]
  %v1588 = vld [vmem:[%s8 + $0x8] sm:$0xff]
  %v1589 = vld [vmem:[%s8 + $0x10] sm:$0xff]
  %v1590 = vld [vmem:[%s8 + $0x18] sm:$0xff]
  %v1591 = vld [vmem:[%s8 + $0x20] sm:$0xff]
  %v1592 = vld [vmem:[%s8 + $0x28] sm:$0xff]
  %v1593 = vld [vmem:[%s8 + $0x30] sm:$0xff]
  %v1594 = vld [vmem:[%s8 + $0x38] sm:$0xff]
  %v1596 = vsel %vm76, %v1579, 0
  %v1599 = vsel %vm76, %v1580, 0
  %v1602 = vsel %vm76, %v1581, 0
  %v1605 = vsel %vm76, %v1582, 0
  %v1608 = vsel %vm76, %v1583, 0
  %v1611 = vsel %vm76, %v1584, 0
  %v1614 = vsel %vm76, %v1585, 0
  %v1617 = vsel %vm76, %v1586, 0
  %1619 = vmatprep.subr.mxu0 0.0
  %1620 = vmatpush1.msra.mxu0 0.0
  %1621 = vmatprep.subr.mxu0 0.0
  %1622 = vmatpush1.msra.mxu0 0.0
  %1623 = vmatprep.subr.mxu0 0.0
  %1624 = vmatpush1.msra.mxu0 0.0
  %1625 = vmatprep.subr.mxu0 0.0
  %1626 = vmatpush1.msra.mxu0 0.0
  %1627 = vmatprep.subr.mxu0 0.0
  %1628 = vmatpush1.msra.mxu0 0.0
  %1629 = vmatprep.subr.mxu0 0.0
  %1630 = vmatpush1.msra.mxu0 0.0
  %1631 = vmatprep.subr.mxu0 0.0
  %1632 = vmatpush1.msra.mxu0 0.0
  %1633 = vmatprep.subr.mxu0 0.0
  %1634 = vmatpush1.msra.mxu0 0.0
  %1635 = vmatprep.subr.mxu0 0.0
  %1636 = vmatpush1.msra.mxu0 0.0
  %1637 = vmatprep.subr.mxu0 0.0
  %1638 = vmatpush1.msra.mxu0 0.0
  %1639 = vmatprep.subr.mxu0 0.0
  %1640 = vmatpush1.msra.mxu0 0.0
  %1641 = vmatprep.subr.mxu0 0.0
  %1642 = vmatpush1.msra.mxu0 0.0
  %1643 = vmatprep.subr.mxu0 0.0
  %1644 = vmatpush1.msra.mxu0 %v1594
  %1645 = vmatprep.subr.mxu0 0.0
  %1646 = vmatpush1.msra.mxu0 %v1593
  %1647 = vmatprep.subr.mxu0 0.0
  %1648 = vmatpush1.msra.mxu0 %v1592
  %1649 = vmatprep.subr.mxu0 0.0
  %1650 = vmatpush1.msra.mxu0 %v1591
  %1651 = vmatprep.subr.mxu0 0.0
  %1652 = vmatpush2.msra.mxu0 0.0
  %1653 = vmatprep.subr.mxu0 0.0
  %1654 = vmatpush2.msra.mxu0 0.0
  %1655 = vmatprep.subr.mxu0 0.0
  %1656 = vmatpush2.msra.mxu0 0.0
  %1657 = vmatprep.subr.mxu0 0.0
  %1658 = vmatpush2.msra.mxu0 0.0
  %1659 = vmatprep.subr.mxu0 0.0
  %1660 = vmatpush2.msra.mxu0 0.0
  %1661 = vmatprep.subr.mxu0 0.0
  %1662 = vmatpush2.msra.mxu0 0.0
  %1663 = vmatprep.subr.mxu0 0.0
  %1664 = vmatpush2.msra.mxu0 0.0
  %1665 = vmatprep.subr.mxu0 0.0
  %1666 = vmatpush2.msra.mxu0 0.0
  %1667 = vmatprep.subr.mxu0 0.0
  %1668 = vmatpush2.msra.mxu0 0.0
  %1669 = vmatprep.subr.mxu0 0.0
  %1670 = vmatpush2.msra.mxu0 0.0
  %1671 = vmatprep.subr.mxu0 0.0
  %1672 = vmatpush2.msra.mxu0 0.0
  %1673 = vmatprep.subr.mxu0 0.0
  %1674 = vmatpush2.msra.mxu0 0.0
  %1675 = vmatprep.subr.mxu0 0.0
  %1676 = vmatpush2.msra.mxu0 0.0
  %1677 = vmatprep.subr.mxu0 0.0
  %1678 = vmatpush2.msra.mxu0 0.0
  %1679 = vmatprep.subr.mxu0 0.0
  %1680 = vmatpush2.msra.mxu0 0.0
  %1681 = vmatprep.subr.mxu0 0.0
  %1682 = vmatpush2.msra.mxu0 0.0
  %1683 = vmatprep.mubr.f32.mxu0 0.0
  %1684 = vmatmul.mubr.f32.gmra.mxu0 %v1596
  %v1685 = vpop.f32.mrf.mxu0
  %v1686 = vadd.f32 0.0, %v1685
  %v1687 = vpop.f32.mrf.mxu0
  %1688 = vmatprep.mubr.f32.mxu0 0.0
  %1689 = vmatmul.mubr.f32.gmra.mxu0 %v1599
  %v1690 = vpop.f32.mrf.mxu0
  %v1691 = vadd.f32 0.0, %v1690
  %v1692 = vpop.f32.mrf.mxu0
  %1693 = vmatprep.mubr.f32.mxu0 0.0
  %1694 = vmatmul.mubr.f32.gmra.mxu0 %v1602
  %v1695 = vpop.f32.mrf.mxu0
  %v1696 = vadd.f32 0.0, %v1695
  %v1697 = vpop.f32.mrf.mxu0
  %1698 = vmatprep.mubr.f32.mxu0 0.0
  %1699 = vmatmul.mubr.f32.gmra.mxu0 %v1605
  %v1700 = vpop.f32.mrf.mxu0
  %v1701 = vadd.f32 0.0, %v1700
  %v1702 = vpop.f32.mrf.mxu0
  %1703 = vmatprep.mubr.f32.mxu0 0.0
  %1704 = vmatmul.mubr.f32.gmra.mxu0 %v1608
  %v1705 = vpop.f32.mrf.mxu0
  %v1706 = vadd.f32 0.0, %v1705
  %v1707 = vpop.f32.mrf.mxu0
  %1708 = vmatprep.mubr.f32.mxu0 0.0
  %1709 = vmatmul.mubr.f32.gmra.mxu0 %v1611
  %v1710 = vpop.f32.mrf.mxu0
  %v1711 = vadd.f32 0.0, %v1710
  %v1712 = vpop.f32.mrf.mxu0
  %1713 = vmatprep.mubr.f32.mxu0 0.0
  %1714 = vmatmul.mubr.f32.gmra.mxu0 %v1614
  %v1715 = vpop.f32.mrf.mxu0
  %v1716 = vadd.f32 0.0, %v1715
  %v1717 = vpop.f32.mrf.mxu0
  %1718 = vmatprep.mubr.f32.mxu0 0.0
  %1719 = vmatmul.mubr.f32.gmra.mxu0 %v1617
  %v1720 = vpop.f32.mrf.mxu0
  %v1721 = vadd.f32 0.0, %v1720
  %v1722 = vpop.f32.mrf.mxu0
  %1723 = vdwg.mxu0
  %v1725 = vsel %vm76, %v1571, 0
  %v1728 = vsel %vm76, %v1572, 0
  %v1731 = vsel %vm76, %v1573, 0
  %v1734 = vsel %vm76, %v1574, 0
  %v1737 = vsel %vm76, %v1575, 0
  %v1740 = vsel %vm76, %v1576, 0
  %v1743 = vsel %vm76, %v1577, 0
  %v1746 = vsel %vm76, %v1578, 0
  %1748 = vmatprep.subr.mxu0 0.0
  %1749 = vmatpush1.msra.mxu0 0.0
  %1750 = vmatprep.subr.mxu0 0.0
  %1751 = vmatpush1.msra.mxu0 0.0
  %1752 = vmatprep.subr.mxu0 0.0
  %1753 = vmatpush1.msra.mxu0 0.0
  %1754 = vmatprep.subr.mxu0 0.0
  %1755 = vmatpush1.msra.mxu0 0.0
  %1756 = vmatprep.subr.mxu0 0.0
  %1757 = vmatpush1.msra.mxu0 0.0
  %1758 = vmatprep.subr.mxu0 0.0
  %1759 = vmatpush1.msra.mxu0 0.0
  %1760 = vmatprep.subr.mxu0 0.0
  %1761 = vmatpush1.msra.mxu0 0.0
  %1762 = vmatprep.subr.mxu0 0.0
  %1763 = vmatpush1.msra.mxu0 0.0
  %1764 = vmatprep.subr.mxu0 0.0
  %1765 = vmatpush1.msra.mxu0 0.0
  %1766 = vmatprep.subr.mxu0 0.0
  %1767 = vmatpush1.msra.mxu0 0.0
  %1768 = vmatprep.subr.mxu0 0.0
  %1769 = vmatpush1.msra.mxu0 0.0
  %1770 = vmatprep.subr.mxu0 0.0
  %1771 = vmatpush1.msra.mxu0 0.0
  %1772 = vmatprep.subr.mxu0 0.0
  %1773 = vmatpush1.msra.mxu0 %v1590
  %1774 = vmatprep.subr.mxu0 0.0
  %1775 = vmatpush1.msra.mxu0 %v1589
  %1776 = vmatprep.subr.mxu0 0.0
  %1777 = vmatpush1.msra.mxu0 %v1588
  %1778 = vmatprep.subr.mxu0 0.0
  %1779 = vmatpush1.msra.mxu0 %v1587
  %1780 = vmatprep.subr.mxu0 0.0
  %1781 = vmatpush2.msra.mxu0 0.0
  %1782 = vmatprep.subr.mxu0 0.0
  %1783 = vmatpush2.msra.mxu0 0.0
  %1784 = vmatprep.subr.mxu0 0.0
  %1785 = vmatpush2.msra.mxu0 0.0
  %1786 = vmatprep.subr.mxu0 0.0
  %1787 = vmatpush2.msra.mxu0 0.0
  %1788 = vmatprep.subr.mxu0 0.0
  %1789 = vmatpush2.msra.mxu0 0.0
  %1790 = vmatprep.subr.mxu0 0.0
  %1791 = vmatpush2.msra.mxu0 0.0
  %1792 = vmatprep.subr.mxu0 0.0
  %1793 = vmatpush2.msra.mxu0 0.0
  %1794 = vmatprep.subr.mxu0 0.0
  %1795 = vmatpush2.msra.mxu0 0.0
  %1796 = vmatprep.subr.mxu0 0.0
  %1797 = vmatpush2.msra.mxu0 0.0
  %1798 = vmatprep.subr.mxu0 0.0
  %1799 = vmatpush2.msra.mxu0 0.0
  %1800 = vmatprep.subr.mxu0 0.0
  %1801 = vmatpush2.msra.mxu0 0.0
  %1802 = vmatprep.subr.mxu0 0.0
  %1803 = vmatpush2.msra.mxu0 0.0
  %1804 = vmatprep.subr.mxu0 0.0
  %1805 = vmatpush2.msra.mxu0 0.0
  %1806 = vmatprep.subr.mxu0 0.0
  %1807 = vmatpush2.msra.mxu0 0.0
  %1808 = vmatprep.subr.mxu0 0.0
  %1809 = vmatpush2.msra.mxu0 0.0
  %1810 = vmatprep.subr.mxu0 0.0
  %1811 = vmatpush2.msra.mxu0 0.0
  %1812 = vmatprep.mubr.f32.mxu0 0.0
  %1813 = vmatmul.mubr.f32.gmra.mxu0 %v1725
  %v1814 = vpop.f32.mrf.mxu0
  %v1815 = vadd.f32 %v1686, %v1814
  %v1816 = vpop.f32.mrf.mxu0
  %1817 = vmatprep.mubr.f32.mxu0 0.0
  %1818 = vmatmul.mubr.f32.gmra.mxu0 %v1728
  %v1819 = vpop.f32.mrf.mxu0
  %v1820 = vadd.f32 %v1691, %v1819
  %v1821 = vpop.f32.mrf.mxu0
  %1822 = vmatprep.mubr.f32.mxu0 0.0
  %1823 = vmatmul.mubr.f32.gmra.mxu0 %v1731
  %v1824 = vpop.f32.mrf.mxu0
  %v1825 = vadd.f32 %v1696, %v1824
  %v1826 = vpop.f32.mrf.mxu0
  %1827 = vmatprep.mubr.f32.mxu0 0.0
  %1828 = vmatmul.mubr.f32.gmra.mxu0 %v1734
  %v1829 = vpop.f32.mrf.mxu0
  %v1830 = vadd.f32 %v1701, %v1829
  %v1831 = vpop.f32.mrf.mxu0
  %1832 = vmatprep.mubr.f32.mxu0 0.0
  %1833 = vmatmul.mubr.f32.gmra.mxu0 %v1737
  %v1834 = vpop.f32.mrf.mxu0
  %v1835 = vadd.f32 %v1706, %v1834
  %v1836 = vpop.f32.mrf.mxu0
  %1837 = vmatprep.mubr.f32.mxu0 0.0
  %1838 = vmatmul.mubr.f32.gmra.mxu0 %v1740
  %v1839 = vpop.f32.mrf.mxu0
  %v1840 = vadd.f32 %v1711, %v1839
  %v1841 = vpop.f32.mrf.mxu0
  %1842 = vmatprep.mubr.f32.mxu0 0.0
  %1843 = vmatmul.mubr.f32.gmra.mxu0 %v1743
  %v1844 = vpop.f32.mrf.mxu0
  %v1845 = vadd.f32 %v1716, %v1844
  %v1846 = vpop.f32.mrf.mxu0
  %1847 = vmatprep.mubr.f32.mxu0 0.0
  %1848 = vmatmul.mubr.f32.gmra.mxu0 %v1746
  %v1849 = vpop.f32.mrf.mxu0
  %v1850 = vadd.f32 %v1721, %v1849
  %v1851 = vpop.f32.mrf.mxu0
  %1852 = vdwg.mxu0
  %v1853 = vld [vmem:[%s11] sm:$0x1]
  %v1855 = vlaneseq
  %v1856 = vshrl.u32 %v1855, 7
  %v1857 = vsub.s32 0, %v1856
  %v1858 = vrot.slane %v1853, %v1857
  %v1860 = vadd.f32 %v1815, %v1858
  %v1861 = vadd.f32 %v1820, %v1858
  %v1862 = vadd.f32 %v1825, %v1858
  %v1863 = vadd.f32 %v1830, %v1858
  %v1864 = vadd.f32 %v1835, %v1858
  %v1865 = vadd.f32 %v1840, %v1858
  %v1866 = vadd.f32 %v1845, %v1858
  %v1867 = vadd.f32 %v1850, %v1858
  %1868 = vst.msk [vmem:[#allocation2] sm:$0xff] %vm206, %v1860
  %1869 = vst.msk [vmem:[#allocation2 + $0x8] sm:$0xff] %vm206, %v1861
  %1870 = vst.msk [vmem:[#allocation2 + $0x10] sm:$0xff] %vm206, %v1862
  %1871 = vst.msk [vmem:[#allocation2 + $0x18] sm:$0xff] %vm206, %v1863
  %1872 = vst.msk [vmem:[#allocation2 + $0x20] sm:$0xff] %vm206, %v1864
  %1873 = vst.msk [vmem:[#allocation2 + $0x28] sm:$0xff] %vm206, %v1865
  %1874 = vst.msk [vmem:[#allocation2 + $0x30] sm:$0xff] %vm206, %v1866
  %1875 = vst.msk [vmem:[#allocation2 + $0x38] sm:$0xff] %vm206, %v1867
  %v1876 = vld [vmem:[%s9] sm:$0xff]
  %v1877 = vld [vmem:[%s9 + $0x8] sm:$0xff]
  %v1878 = vld [vmem:[%s9 + $0x10] sm:$0xff]
  %v1879 = vld [vmem:[%s9 + $0x18] sm:$0xff]
  %v1880 = vld [vmem:[%s9 + $0x20] sm:$0xff]
  %v1881 = vld [vmem:[%s9 + $0x28] sm:$0xff]
  %v1882 = vld [vmem:[%s9 + $0x30] sm:$0xff]
  %v1883 = vld [vmem:[%s9 + $0x38] sm:$0xff]
  %1884 = vmatprep.subr.mxu0 0.0
  %1885 = vmatpush1.msra.mxu0 0.0
  %1886 = vmatprep.subr.mxu0 0.0
  %1887 = vmatpush1.msra.mxu0 0.0
  %1888 = vmatprep.subr.mxu0 0.0
  %1889 = vmatpush1.msra.mxu0 0.0
  %1890 = vmatprep.subr.mxu0 0.0
  %1891 = vmatpush1.msra.mxu0 0.0
  %1892 = vmatprep.subr.mxu0 0.0
  %1893 = vmatpush1.msra.mxu0 0.0
  %1894 = vmatprep.subr.mxu0 0.0
  %1895 = vmatpush1.msra.mxu0 0.0
  %1896 = vmatprep.subr.mxu0 0.0
  %1897 = vmatpush1.msra.mxu0 0.0
  %1898 = vmatprep.subr.mxu0 0.0
  %1899 = vmatpush1.msra.mxu0 0.0
  %1900 = vmatprep.subr.mxu0 0.0
  %1901 = vmatpush1.msra.mxu0 0.0
  %1902 = vmatprep.subr.mxu0 0.0
  %1903 = vmatpush1.msra.mxu0 0.0
  %1904 = vmatprep.subr.mxu0 0.0
  %1905 = vmatpush1.msra.mxu0 0.0
  %1906 = vmatprep.subr.mxu0 0.0
  %1907 = vmatpush1.msra.mxu0 0.0
  %1908 = vmatprep.subr.mxu0 0.0
  %1909 = vmatpush1.msra.mxu0 %v1883
  %1910 = vmatprep.subr.mxu0 0.0
  %1911 = vmatpush1.msra.mxu0 %v1882
  %1912 = vmatprep.subr.mxu0 0.0
  %1913 = vmatpush1.msra.mxu0 %v1881
  %1914 = vmatprep.subr.mxu0 0.0
  %1915 = vmatpush1.msra.mxu0 %v1880
  %1916 = vmatprep.subr.mxu0 0.0
  %1917 = vmatpush2.msra.mxu0 0.0
  %1918 = vmatprep.subr.mxu0 0.0
  %1919 = vmatpush2.msra.mxu0 0.0
  %1920 = vmatprep.subr.mxu0 0.0
  %1921 = vmatpush2.msra.mxu0 0.0
  %1922 = vmatprep.subr.mxu0 0.0
  %1923 = vmatpush2.msra.mxu0 0.0
  %1924 = vmatprep.subr.mxu0 0.0
  %1925 = vmatpush2.msra.mxu0 0.0
  %1926 = vmatprep.subr.mxu0 0.0
  %1927 = vmatpush2.msra.mxu0 0.0
  %1928 = vmatprep.subr.mxu0 0.0
  %1929 = vmatpush2.msra.mxu0 0.0
  %1930 = vmatprep.subr.mxu0 0.0
  %1931 = vmatpush2.msra.mxu0 0.0
  %1932 = vmatprep.subr.mxu0 0.0
  %1933 = vmatpush2.msra.mxu0 0.0
  %1934 = vmatprep.subr.mxu0 0.0
  %1935 = vmatpush2.msra.mxu0 0.0
  %1936 = vmatprep.subr.mxu0 0.0
  %1937 = vmatpush2.msra.mxu0 0.0
  %1938 = vmatprep.subr.mxu0 0.0
  %1939 = vmatpush2.msra.mxu0 0.0
  %1940 = vmatprep.subr.mxu0 0.0
  %1941 = vmatpush2.msra.mxu0 0.0
  %1942 = vmatprep.subr.mxu0 0.0
  %1943 = vmatpush2.msra.mxu0 0.0
  %1944 = vmatprep.subr.mxu0 0.0
  %1945 = vmatpush2.msra.mxu0 0.0
  %1946 = vmatprep.subr.mxu0 0.0
  %1947 = vmatpush2.msra.mxu0 0.0
  %1948 = vmatprep.mubr.f32.mxu0 0.0
  %1949 = vmatmul.mubr.f32.gmra.mxu0 %v1596
  %v1950 = vpop.f32.mrf.mxu0
  %v1951 = vadd.f32 0.0, %v1950
  %v1952 = vpop.f32.mrf.mxu0
  %1953 = vmatprep.mubr.f32.mxu0 0.0
  %1954 = vmatmul.mubr.f32.gmra.mxu0 %v1599
  %v1955 = vpop.f32.mrf.mxu0
  %v1956 = vadd.f32 0.0, %v1955
  %v1957 = vpop.f32.mrf.mxu0
  %1958 = vmatprep.mubr.f32.mxu0 0.0
  %1959 = vmatmul.mubr.f32.gmra.mxu0 %v1602
  %v1960 = vpop.f32.mrf.mxu0
  %v1961 = vadd.f32 0.0, %v1960
  %v1962 = vpop.f32.mrf.mxu0
  %1963 = vmatprep.mubr.f32.mxu0 0.0
  %1964 = vmatmul.mubr.f32.gmra.mxu0 %v1605
  %v1965 = vpop.f32.mrf.mxu0
  %v1966 = vadd.f32 0.0, %v1965
  %v1967 = vpop.f32.mrf.mxu0
  %1968 = vmatprep.mubr.f32.mxu0 0.0
  %1969 = vmatmul.mubr.f32.gmra.mxu0 %v1608
  %v1970 = vpop.f32.mrf.mxu0
  %v1971 = vadd.f32 0.0, %v1970
  %v1972 = vpop.f32.mrf.mxu0
  %1973 = vmatprep.mubr.f32.mxu0 0.0
  %1974 = vmatmul.mubr.f32.gmra.mxu0 %v1611
  %v1975 = vpop.f32.mrf.mxu0
  %v1976 = vadd.f32 0.0, %v1975
  %v1977 = vpop.f32.mrf.mxu0
  %1978 = vmatprep.mubr.f32.mxu0 0.0
  %1979 = vmatmul.mubr.f32.gmra.mxu0 %v1614
  %v1980 = vpop.f32.mrf.mxu0
  %v1981 = vadd.f32 0.0, %v1980
  %v1982 = vpop.f32.mrf.mxu0
  %1983 = vmatprep.mubr.f32.mxu0 0.0
  %1984 = vmatmul.mubr.f32.gmra.mxu0 %v1617
  %v1985 = vpop.f32.mrf.mxu0
  %v1986 = vadd.f32 0.0, %v1985
  %v1987 = vpop.f32.mrf.mxu0
  %1988 = vdwg.mxu0
  %1989 = vmatprep.subr.mxu0 0.0
  %1990 = vmatpush1.msra.mxu0 0.0
  %1991 = vmatprep.subr.mxu0 0.0
  %1992 = vmatpush1.msra.mxu0 0.0
  %1993 = vmatprep.subr.mxu0 0.0
  %1994 = vmatpush1.msra.mxu0 0.0
  %1995 = vmatprep.subr.mxu0 0.0
  %1996 = vmatpush1.msra.mxu0 0.0
  %1997 = vmatprep.subr.mxu0 0.0
  %1998 = vmatpush1.msra.mxu0 0.0
  %1999 = vmatprep.subr.mxu0 0.0
  %2000 = vmatpush1.msra.mxu0 0.0
  %2001 = vmatprep.subr.mxu0 0.0
  %2002 = vmatpush1.msra.mxu0 0.0
  %2003 = vmatprep.subr.mxu0 0.0
  %2004 = vmatpush1.msra.mxu0 0.0
  %2005 = vmatprep.subr.mxu0 0.0
  %2006 = vmatpush1.msra.mxu0 0.0
  %2007 = vmatprep.subr.mxu0 0.0
  %2008 = vmatpush1.msra.mxu0 0.0
  %2009 = vmatprep.subr.mxu0 0.0
  %2010 = vmatpush1.msra.mxu0 0.0
  %2011 = vmatprep.subr.mxu0 0.0
  %2012 = vmatpush1.msra.mxu0 0.0
  %2013 = vmatprep.subr.mxu0 0.0
  %2014 = vmatpush1.msra.mxu0 %v1879
  %2015 = vmatprep.subr.mxu0 0.0
  %2016 = vmatpush1.msra.mxu0 %v1878
  %2017 = vmatprep.subr.mxu0 0.0
  %2018 = vmatpush1.msra.mxu0 %v1877
  %2019 = vmatprep.subr.mxu0 0.0
  %2020 = vmatpush1.msra.mxu0 %v1876
  %2021 = vmatprep.subr.mxu0 0.0
  %2022 = vmatpush2.msra.mxu0 0.0
  %2023 = vmatprep.subr.mxu0 0.0
  %2024 = vmatpush2.msra.mxu0 0.0
  %2025 = vmatprep.subr.mxu0 0.0
  %2026 = vmatpush2.msra.mxu0 0.0
  %2027 = vmatprep.subr.mxu0 0.0
  %2028 = vmatpush2.msra.mxu0 0.0
  %2029 = vmatprep.subr.mxu0 0.0
  %2030 = vmatpush2.msra.mxu0 0.0
  %2031 = vmatprep.subr.mxu0 0.0
  %2032 = vmatpush2.msra.mxu0 0.0
  %2033 = vmatprep.subr.mxu0 0.0
  %2034 = vmatpush2.msra.mxu0 0.0
  %2035 = vmatprep.subr.mxu0 0.0
  %2036 = vmatpush2.msra.mxu0 0.0
  %2037 = vmatprep.subr.mxu0 0.0
  %2038 = vmatpush2.msra.mxu0 0.0
  %2039 = vmatprep.subr.mxu0 0.0
  %2040 = vmatpush2.msra.mxu0 0.0
  %2041 = vmatprep.subr.mxu0 0.0
  %2042 = vmatpush2.msra.mxu0 0.0
  %2043 = vmatprep.subr.mxu0 0.0
  %2044 = vmatpush2.msra.mxu0 0.0
  %2045 = vmatprep.subr.mxu0 0.0
  %2046 = vmatpush2.msra.mxu0 0.0
  %2047 = vmatprep.subr.mxu0 0.0
  %2048 = vmatpush2.msra.mxu0 0.0
  %2049 = vmatprep.subr.mxu0 0.0
  %2050 = vmatpush2.msra.mxu0 0.0
  %2051 = vmatprep.subr.mxu0 0.0
  %2052 = vmatpush2.msra.mxu0 0.0
  %2053 = vmatprep.mubr.f32.mxu0 0.0
  %2054 = vmatmul.mubr.f32.gmra.mxu0 %v1725
  %v2055 = vpop.f32.mrf.mxu0
  %v2056 = vadd.f32 %v1951, %v2055
  %v2057 = vpop.f32.mrf.mxu0
  %2058 = vmatprep.mubr.f32.mxu0 0.0
  %2059 = vmatmul.mubr.f32.gmra.mxu0 %v1728
  %v2060 = vpop.f32.mrf.mxu0
  %v2061 = vadd.f32 %v1956, %v2060
  %v2062 = vpop.f32.mrf.mxu0
  %2063 = vmatprep.mubr.f32.mxu0 0.0
  %2064 = vmatmul.mubr.f32.gmra.mxu0 %v1731
  %v2065 = vpop.f32.mrf.mxu0
  %v2066 = vadd.f32 %v1961, %v2065
  %v2067 = vpop.f32.mrf.mxu0
  %2068 = vmatprep.mubr.f32.mxu0 0.0
  %2069 = vmatmul.mubr.f32.gmra.mxu0 %v1734
  %v2070 = vpop.f32.mrf.mxu0
  %v2071 = vadd.f32 %v1966, %v2070
  %v2072 = vpop.f32.mrf.mxu0
  %2073 = vmatprep.mubr.f32.mxu0 0.0
  %2074 = vmatmul.mubr.f32.gmra.mxu0 %v1737
  %v2075 = vpop.f32.mrf.mxu0
  %v2076 = vadd.f32 %v1971, %v2075
  %v2077 = vpop.f32.mrf.mxu0
  %2078 = vmatprep.mubr.f32.mxu0 0.0
  %2079 = vmatmul.mubr.f32.gmra.mxu0 %v1740
  %v2080 = vpop.f32.mrf.mxu0
  %v2081 = vadd.f32 %v1976, %v2080
  %v2082 = vpop.f32.mrf.mxu0
  %2083 = vmatprep.mubr.f32.mxu0 0.0
  %2084 = vmatmul.mubr.f32.gmra.mxu0 %v1743
  %v2085 = vpop.f32.mrf.mxu0
  %v2086 = vadd.f32 %v1981, %v2085
  %v2087 = vpop.f32.mrf.mxu0
  %2088 = vmatprep.mubr.f32.mxu0 0.0
  %2089 = vmatmul.mubr.f32.gmra.mxu0 %v1746
  %v2090 = vpop.f32.mrf.mxu0
  %v2091 = vadd.f32 %v1986, %v2090
  %v2092 = vpop.f32.mrf.mxu0
  %2093 = vdwg.mxu0
  %v2094 = vld [vmem:[%s12] sm:$0x1]
  %v2096 = vlaneseq
  %v2097 = vshrl.u32 %v2096, 7
  %v2098 = vsub.s32 0, %v2097
  %v2099 = vrot.slane %v2094, %v2098
  %v2101 = vadd.f32 %v2056, %v2099
  %v2102 = vadd.f32 %v2061, %v2099
  %v2103 = vadd.f32 %v2066, %v2099
  %v2104 = vadd.f32 %v2071, %v2099
  %v2105 = vadd.f32 %v2076, %v2099
  %v2106 = vadd.f32 %v2081, %v2099
  %v2107 = vadd.f32 %v2086, %v2099
  %v2108 = vadd.f32 %v2091, %v2099
  %2109 = vst.msk [vmem:[#allocation3] sm:$0xff] %vm206, %v2101
  %2110 = vst.msk [vmem:[#allocation3 + $0x8] sm:$0xff] %vm206, %v2102
  %2111 = vst.msk [vmem:[#allocation3 + $0x10] sm:$0xff] %vm206, %v2103
  %2112 = vst.msk [vmem:[#allocation3 + $0x18] sm:$0xff] %vm206, %v2104
  %2113 = vst.msk [vmem:[#allocation3 + $0x20] sm:$0xff] %vm206, %v2105
  %2114 = vst.msk [vmem:[#allocation3 + $0x28] sm:$0xff] %vm206, %v2106
  %2115 = vst.msk [vmem:[#allocation3 + $0x30] sm:$0xff] %vm206, %v2107
  %2116 = vst.msk [vmem:[#allocation3 + $0x38] sm:$0xff] %vm206, %v2108
  %v2117 = vld [vmem:[%s10] sm:$0xff]
  %v2118 = vld [vmem:[%s10 + $0x8] sm:$0xff]
  %v2119 = vld [vmem:[%s10 + $0x10] sm:$0xff]
  %v2120 = vld [vmem:[%s10 + $0x18] sm:$0xff]
  %v2121 = vld [vmem:[%s10 + $0x20] sm:$0xff]
  %v2122 = vld [vmem:[%s10 + $0x28] sm:$0xff]
  %v2123 = vld [vmem:[%s10 + $0x30] sm:$0xff]
  %v2124 = vld [vmem:[%s10 + $0x38] sm:$0xff]
  %v2125 = vld [vmem:[%s10 + $0x40] sm:$0xff]
  %v2126 = vld [vmem:[%s10 + $0x48] sm:$0xff]
  %v2127 = vld [vmem:[%s10 + $0x50] sm:$0xff]
  %v2128 = vld [vmem:[%s10 + $0x58] sm:$0xff]
  %v2129 = vld [vmem:[%s10 + $0x60] sm:$0xff]
  %v2130 = vld [vmem:[%s10 + $0x68] sm:$0xff]
  %v2131 = vld [vmem:[%s10 + $0x70] sm:$0xff]
  %v2132 = vld [vmem:[%s10 + $0x78] sm:$0xff]
  %v2133 = vld [vmem:[%s13] sm:$0x3]
  %v2134 = vld [vmem:[#allocation2] sm:$0xff]
  %v2135 = vld [vmem:[%s357] sm:$0xff]
  %v2137 = vlaneseq
  %v2138 = vshrl.u32 %v2137, 7
  %v2139 = vsub.s32 0, %v2138
  %v2140 = vrot.slane %v2133, %v2139
  %v2141 = vlaneseq
  %v2142 = vshrl.u32 %v2141, 7
  %v2143 = vsub.s32 1, %v2142
  %v2144 = vrot.slane %v2133, %v2143
  %2147 = vmatprep.subr.mxu0 0.0
  %2148 = vmatpush1.msra.mxu0 0.0
  %2149 = vmatprep.subr.mxu0 0.0
  %2150 = vmatpush1.msra.mxu0 0.0
  %2151 = vmatprep.subr.mxu0 0.0
  %2152 = vmatpush1.msra.mxu0 0.0
  %2153 = vmatprep.subr.mxu0 0.0
  %2154 = vmatpush1.msra.mxu0 0.0
  %2155 = vmatprep.subr.mxu0 0.0
  %2156 = vmatpush1.msra.mxu0 0.0
  %2157 = vmatprep.subr.mxu0 0.0
  %2158 = vmatpush1.msra.mxu0 0.0
  %2159 = vmatprep.subr.mxu0 0.0
  %2160 = vmatpush1.msra.mxu0 0.0
  %2161 = vmatprep.subr.mxu0 0.0
  %2162 = vmatpush1.msra.mxu0 0.0
  %2163 = vmatprep.subr.mxu0 %v2132
  %2164 = vmatpush1.msra.mxu0 %v2131
  %2165 = vmatprep.subr.mxu0 %v2130
  %2166 = vmatpush1.msra.mxu0 %v2129
  %2167 = vmatprep.subr.mxu0 %v2128
  %2168 = vmatpush1.msra.mxu0 %v2127
  %2169 = vmatprep.subr.mxu0 %v2126
  %2170 = vmatpush1.msra.mxu0 %v2125
  %2171 = vmatprep.subr.mxu0 %v2124
  %2172 = vmatpush1.msra.mxu0 %v2123
  %2173 = vmatprep.subr.mxu0 %v2122
  %2174 = vmatpush1.msra.mxu0 %v2121
  %2175 = vmatprep.subr.mxu0 %v2120
  %2176 = vmatpush1.msra.mxu0 %v2119
  %2177 = vmatprep.subr.mxu0 %v2118
  %2178 = vmatpush1.msra.mxu0 %v2117
  %2179 = vmatprep.subr.mxu0 0.0
  %2180 = vmatpush2.msra.mxu0 0.0
  %2181 = vmatprep.subr.mxu0 0.0
  %2182 = vmatpush2.msra.mxu0 0.0
  %2183 = vmatprep.subr.mxu0 0.0
  %2184 = vmatpush2.msra.mxu0 0.0
  %2185 = vmatprep.subr.mxu0 0.0
  %2186 = vmatpush2.msra.mxu0 0.0
  %2187 = vmatprep.subr.mxu0 0.0
  %2188 = vmatpush2.msra.mxu0 0.0
  %2189 = vmatprep.subr.mxu0 0.0
  %2190 = vmatpush2.msra.mxu0 0.0
  %2191 = vmatprep.subr.mxu0 0.0
  %2192 = vmatpush2.msra.mxu0 0.0
  %2193 = vmatprep.subr.mxu0 0.0
  %2194 = vmatpush2.msra.mxu0 0.0
  %2195 = vmatprep.subr.mxu0 0.0
  %2196 = vmatpush2.msra.mxu0 0.0
  %2197 = vmatprep.subr.mxu0 0.0
  %2198 = vmatpush2.msra.mxu0 0.0
  %2199 = vmatprep.subr.mxu0 0.0
  %2200 = vmatpush2.msra.mxu0 0.0
  %2201 = vmatprep.subr.mxu0 0.0
  %2202 = vmatpush2.msra.mxu0 0.0
  %2203 = vmatprep.subr.mxu0 0.0
  %2204 = vmatpush2.msra.mxu0 0.0
  %2205 = vmatprep.subr.mxu0 0.0
  %2206 = vmatpush2.msra.mxu0 0.0
  %2207 = vmatprep.subr.mxu0 0.0
  %2208 = vmatpush2.msra.mxu0 0.0
  %2209 = vmatprep.subr.mxu0 0.0
  %2210 = vmatpush2.msra.mxu0 0.0
  %2211 = vmatprep.mubr.f32.mxu0 0.0
  %2212 = vmatmul.mubr.f32.gmra.mxu0 %v372
  %v2213 = vpop.f32.mrf.mxu0
  %v2214 = vadd.f32 %v2140, %v2213
  %v2215 = vpop.f32.mrf.mxu0
  %v2216 = vadd.f32 %v2144, %v2215
  %2217 = vdwg.mxu0
  %v2218 = vadd.f32 %v2134, %v2214
  %v2219 = vxor.u32 %v2218, 2147483648
  %v2220 = vmul.f32 %v2219, 1.442695
  %v2221 = vpow.pop %v2220
  %v2222 = vadd.f32 %v2221, 1.0
  %v2223 = vrcp.pop %v2222
  %v2224 = vmul.f32 1.0, %v2223
  %2226 = vrot.lane.b32.xlu0 %v2214, 64
  %v2227 = vpop.permute.xlu0 %2226
  %v2229 = vmul.f32 %v2224, %v2227
  %2231 = vrot.lane.b32.xlu0 %v2229, 64
  %v2232 = vpop.permute.xlu0 %2231
  %v2234 = vadd.f32 %v2134, %v2232
  %v2235 = vtanh.pop %v2234
  %v2236 = vsub.f32 1.0, %v2224
  %2238 = vrot.lane.b32.xlu0 %v2235, 96
  %v2239 = vpop.permute.xlu0 %2238
  %v2241 = vmul.f32 %v2236, %v2239
  %v2242 = vmul.f32 %v2224, 0.0
  %v2243 = vadd.f32 %v2241, %v2242
  %v2244 = vadd.f32 %v2135, %v2216
  %v2245 = vxor.u32 %v2244, 2147483648
  %v2246 = vmul.f32 %v2245, 1.442695
  %v2247 = vpow.pop %v2246
  %v2248 = vadd.f32 %v2247, 1.0
  %v2249 = vrcp.pop %v2248
  %v2250 = vmul.f32 1.0, %v2249
  %2252 = vrot.lane.b32.xlu0 %v2216, 64
  %v2253 = vpop.permute.xlu0 %2252
  %v2255 = vmul.f32 %v2250, %v2253
  %2257 = vrot.lane.b32.xlu0 %v2255, 64
  %v2258 = vpop.permute.xlu0 %2257
  %v2260 = vadd.f32 %v2135, %v2258
  %v2261 = vtanh.pop %v2260
  %v2262 = vsub.f32 1.0, %v2250
  %2264 = vrot.lane.b32.xlu0 %v2261, 96
  %v2265 = vpop.permute.xlu0 %2264
  %v2267 = vmul.f32 %v2262, %v2265
  %v2268 = vmul.f32 %v2250, 0.0
  %v2269 = vadd.f32 %v2267, %v2268
  %v2270 = vsel %vm502, %v2243, 0.0
  %v2271 = vsel %vm509, %v2269, 0.0
  %v2272 = vld [vmem:[%s522] sm:$0xff]
  %v2273 = vld [vmem:[%s524] sm:$0xff]
  %2275 = vrot.lane.b32.xlu0 %v2270, 96
  %v2276 = vpop.permute.xlu0 %2275
  %v2278 = vsel %vm76, %v2276, %v2271
  %v2280 = vsel %vm370, %v2278, 0
  %2282 = vmatprep.subr.mxu0 0.0
  %2283 = vmatpush1.msra.mxu0 0.0
  %2284 = vmatprep.subr.mxu0 0.0
  %2285 = vmatpush1.msra.mxu0 0.0
  %2286 = vmatprep.subr.mxu0 0.0
  %2287 = vmatpush1.msra.mxu0 0.0
  %2288 = vmatprep.subr.mxu0 0.0
  %2289 = vmatpush1.msra.mxu0 0.0
  %2290 = vmatprep.subr.mxu0 0.0
  %2291 = vmatpush1.msra.mxu0 0.0
  %2292 = vmatprep.subr.mxu0 0.0
  %2293 = vmatpush1.msra.mxu0 0.0
  %2294 = vmatprep.subr.mxu0 0.0
  %2295 = vmatpush1.msra.mxu0 0.0
  %2296 = vmatprep.subr.mxu0 0.0
  %2297 = vmatpush1.msra.mxu0 0.0
  %2298 = vmatprep.subr.mxu0 %v2132
  %2299 = vmatpush1.msra.mxu0 %v2131
  %2300 = vmatprep.subr.mxu0 %v2130
  %2301 = vmatpush1.msra.mxu0 %v2129
  %2302 = vmatprep.subr.mxu0 %v2128
  %2303 = vmatpush1.msra.mxu0 %v2127
  %2304 = vmatprep.subr.mxu0 %v2126
  %2305 = vmatpush1.msra.mxu0 %v2125
  %2306 = vmatprep.subr.mxu0 %v2124
  %2307 = vmatpush1.msra.mxu0 %v2123
  %2308 = vmatprep.subr.mxu0 %v2122
  %2309 = vmatpush1.msra.mxu0 %v2121
  %2310 = vmatprep.subr.mxu0 %v2120
  %2311 = vmatpush1.msra.mxu0 %v2119
  %2312 = vmatprep.subr.mxu0 %v2118
  %2313 = vmatpush1.msra.mxu0 %v2117
  %2314 = vmatprep.subr.mxu0 0.0
  %2315 = vmatpush2.msra.mxu0 0.0
  %2316 = vmatprep.subr.mxu0 0.0
  %2317 = vmatpush2.msra.mxu0 0.0
  %2318 = vmatprep.subr.mxu0 0.0
  %2319 = vmatpush2.msra.mxu0 0.0
  %2320 = vmatprep.subr.mxu0 0.0
  %2321 = vmatpush2.msra.mxu0 0.0
  %2322 = vmatprep.subr.mxu0 0.0
  %2323 = vmatpush2.msra.mxu0 0.0
  %2324 = vmatprep.subr.mxu0 0.0
  %2325 = vmatpush2.msra.mxu0 0.0
  %2326 = vmatprep.subr.mxu0 0.0
  %2327 = vmatpush2.msra.mxu0 0.0
  %2328 = vmatprep.subr.mxu0 0.0
  %2329 = vmatpush2.msra.mxu0 0.0
  %2330 = vmatprep.subr.mxu0 0.0
  %2331 = vmatpush2.msra.mxu0 0.0
  %2332 = vmatprep.subr.mxu0 0.0
  %2333 = vmatpush2.msra.mxu0 0.0
  %2334 = vmatprep.subr.mxu0 0.0
  %2335 = vmatpush2.msra.mxu0 0.0
  %2336 = vmatprep.subr.mxu0 0.0
  %2337 = vmatpush2.msra.mxu0 0.0
  %2338 = vmatprep.subr.mxu0 0.0
  %2339 = vmatpush2.msra.mxu0 0.0
  %2340 = vmatprep.subr.mxu0 0.0
  %2341 = vmatpush2.msra.mxu0 0.0
  %2342 = vmatprep.subr.mxu0 0.0
  %2343 = vmatpush2.msra.mxu0 0.0
  %2344 = vmatprep.subr.mxu0 0.0
  %2345 = vmatpush2.msra.mxu0 0.0
  %2346 = vmatprep.mubr.f32.mxu0 0.0
  %2347 = vmatmul.mubr.f32.gmra.mxu0 %v2280
  %v2348 = vpop.f32.mrf.mxu0
  %v2349 = vadd.f32 %v2140, %v2348
  %v2350 = vpop.f32.mrf.mxu0
  %v2351 = vadd.f32 %v2144, %v2350
  %2352 = vdwg.mxu0
  %v2353 = vadd.f32 %v2272, %v2349
  %v2354 = vxor.u32 %v2353, 2147483648
  %v2355 = vmul.f32 %v2354, 1.442695
  %v2356 = vpow.pop %v2355
  %v2357 = vadd.f32 %v2356, 1.0
  %v2358 = vrcp.pop %v2357
  %v2359 = vmul.f32 1.0, %v2358
  %2361 = vrot.lane.b32.xlu0 %v2349, 64
  %v2362 = vpop.permute.xlu0 %2361
  %v2364 = vmul.f32 %v2359, %v2362
  %2366 = vrot.lane.b32.xlu0 %v2364, 64
  %v2367 = vpop.permute.xlu0 %2366
  %v2369 = vadd.f32 %v2272, %v2367
  %v2370 = vtanh.pop %v2369
  %v2371 = vsub.f32 1.0, %v2359
  %2373 = vrot.lane.b32.xlu0 %v2370, 96
  %v2374 = vpop.permute.xlu0 %2373
  %v2376 = vmul.f32 %v2371, %v2374
  %v2377 = vmul.f32 %v2359, %v2270
  %v2378 = vadd.f32 %v2376, %v2377
  %v2379 = vadd.f32 %v2273, %v2351
  %v2380 = vxor.u32 %v2379, 2147483648
  %v2381 = vmul.f32 %v2380, 1.442695
  %v2382 = vpow.pop %v2381
  %v2383 = vadd.f32 %v2382, 1.0
  %v2384 = vrcp.pop %v2383
  %v2385 = vmul.f32 1.0, %v2384
  %2387 = vrot.lane.b32.xlu0 %v2351, 64
  %v2388 = vpop.permute.xlu0 %2387
  %v2390 = vmul.f32 %v2385, %v2388
  %2392 = vrot.lane.b32.xlu0 %v2390, 64
  %v2393 = vpop.permute.xlu0 %2392
  %v2395 = vadd.f32 %v2273, %v2393
  %v2396 = vtanh.pop %v2395
  %v2397 = vsub.f32 1.0, %v2385
  %2399 = vrot.lane.b32.xlu0 %v2396, 96
  %v2400 = vpop.permute.xlu0 %2399
  %v2402 = vmul.f32 %v2397, %v2400
  %v2403 = vmul.f32 %v2385, %v2271
  %v2404 = vadd.f32 %v2402, %v2403
  %v2405 = vsel %vm658, %v2378, %v2270
  %v2406 = vsel %vm665, %v2404, %v2271
  %v2407 = vld [vmem:[%s679] sm:$0xff]
  %v2408 = vld [vmem:[%s681] sm:$0xff]
  %2410 = vrot.lane.b32.xlu0 %v2405, 96
  %v2411 = vpop.permute.xlu0 %2410
  %v2413 = vsel %vm76, %v2411, %v2406
  %v2415 = vsel %vm370, %v2413, 0
  %2417 = vmatprep.subr.mxu0 0.0
  %2418 = vmatpush1.msra.mxu0 0.0
  %2419 = vmatprep.subr.mxu0 0.0
  %2420 = vmatpush1.msra.mxu0 0.0
  %2421 = vmatprep.subr.mxu0 0.0
  %2422 = vmatpush1.msra.mxu0 0.0
  %2423 = vmatprep.subr.mxu0 0.0
  %2424 = vmatpush1.msra.mxu0 0.0
  %2425 = vmatprep.subr.mxu0 0.0
  %2426 = vmatpush1.msra.mxu0 0.0
  %2427 = vmatprep.subr.mxu0 0.0
  %2428 = vmatpush1.msra.mxu0 0.0
  %2429 = vmatprep.subr.mxu0 0.0
  %2430 = vmatpush1.msra.mxu0 0.0
  %2431 = vmatprep.subr.mxu0 0.0
  %2432 = vmatpush1.msra.mxu0 0.0
  %2433 = vmatprep.subr.mxu0 %v2132
  %2434 = vmatpush1.msra.mxu0 %v2131
  %2435 = vmatprep.subr.mxu0 %v2130
  %2436 = vmatpush1.msra.mxu0 %v2129
  %2437 = vmatprep.subr.mxu0 %v2128
  %2438 = vmatpush1.msra.mxu0 %v2127
  %2439 = vmatprep.subr.mxu0 %v2126
  %2440 = vmatpush1.msra.mxu0 %v2125
  %2441 = vmatprep.subr.mxu0 %v2124
  %2442 = vmatpush1.msra.mxu0 %v2123
  %2443 = vmatprep.subr.mxu0 %v2122
  %2444 = vmatpush1.msra.mxu0 %v2121
  %2445 = vmatprep.subr.mxu0 %v2120
  %2446 = vmatpush1.msra.mxu0 %v2119
  %2447 = vmatprep.subr.mxu0 %v2118
  %2448 = vmatpush1.msra.mxu0 %v2117
  %2449 = vmatprep.subr.mxu0 0.0
  %2450 = vmatpush2.msra.mxu0 0.0
  %2451 = vmatprep.subr.mxu0 0.0
  %2452 = vmatpush2.msra.mxu0 0.0
  %2453 = vmatprep.subr.mxu0 0.0
  %2454 = vmatpush2.msra.mxu0 0.0
  %2455 = vmatprep.subr.mxu0 0.0
  %2456 = vmatpush2.msra.mxu0 0.0
  %2457 = vmatprep.subr.mxu0 0.0
  %2458 = vmatpush2.msra.mxu0 0.0
  %2459 = vmatprep.subr.mxu0 0.0
  %2460 = vmatpush2.msra.mxu0 0.0
  %2461 = vmatprep.subr.mxu0 0.0
  %2462 = vmatpush2.msra.mxu0 0.0
  %2463 = vmatprep.subr.mxu0 0.0
  %2464 = vmatpush2.msra.mxu0 0.0
  %2465 = vmatprep.subr.mxu0 0.0
  %2466 = vmatpush2.msra.mxu0 0.0
  %2467 = vmatprep.subr.mxu0 0.0
  %2468 = vmatpush2.msra.mxu0 0.0
  %2469 = vmatprep.subr.mxu0 0.0
  %2470 = vmatpush2.msra.mxu0 0.0
  %2471 = vmatprep.subr.mxu0 0.0
  %2472 = vmatpush2.msra.mxu0 0.0
  %2473 = vmatprep.subr.mxu0 0.0
  %2474 = vmatpush2.msra.mxu0 0.0
  %2475 = vmatprep.subr.mxu0 0.0
  %2476 = vmatpush2.msra.mxu0 0.0
  %2477 = vmatprep.subr.mxu0 0.0
  %2478 = vmatpush2.msra.mxu0 0.0
  %2479 = vmatprep.subr.mxu0 0.0
  %2480 = vmatpush2.msra.mxu0 0.0
  %2481 = vmatprep.mubr.f32.mxu0 0.0
  %2482 = vmatmul.mubr.f32.gmra.mxu0 %v2415
  %v2483 = vpop.f32.mrf.mxu0
  %v2484 = vadd.f32 %v2140, %v2483
  %v2485 = vpop.f32.mrf.mxu0
  %v2486 = vadd.f32 %v2144, %v2485
  %2487 = vdwg.mxu0
  %v2488 = vadd.f32 %v2407, %v2484
  %v2489 = vxor.u32 %v2488, 2147483648
  %v2490 = vmul.f32 %v2489, 1.442695
  %v2491 = vpow.pop %v2490
  %v2492 = vadd.f32 %v2491, 1.0
  %v2493 = vrcp.pop %v2492
  %v2494 = vmul.f32 1.0, %v2493
  %2496 = vrot.lane.b32.xlu0 %v2484, 64
  %v2497 = vpop.permute.xlu0 %2496
  %v2499 = vmul.f32 %v2494, %v2497
  %2501 = vrot.lane.b32.xlu0 %v2499, 64
  %v2502 = vpop.permute.xlu0 %2501
  %v2504 = vadd.f32 %v2407, %v2502
  %v2505 = vtanh.pop %v2504
  %v2506 = vsub.f32 1.0, %v2494
  %2508 = vrot.lane.b32.xlu0 %v2505, 96
  %v2509 = vpop.permute.xlu0 %2508
  %v2511 = vmul.f32 %v2506, %v2509
  %v2512 = vmul.f32 %v2494, %v2405
  %v2513 = vadd.f32 %v2511, %v2512
  %v2514 = vadd.f32 %v2408, %v2486
  %v2515 = vxor.u32 %v2514, 2147483648
  %v2516 = vmul.f32 %v2515, 1.442695
  %v2517 = vpow.pop %v2516
  %v2518 = vadd.f32 %v2517, 1.0
  %v2519 = vrcp.pop %v2518
  %v2520 = vmul.f32 1.0, %v2519
  %2522 = vrot.lane.b32.xlu0 %v2486, 64
  %v2523 = vpop.permute.xlu0 %2522
  %v2525 = vmul.f32 %v2520, %v2523
  %2527 = vrot.lane.b32.xlu0 %v2525, 64
  %v2528 = vpop.permute.xlu0 %2527
  %v2530 = vadd.f32 %v2408, %v2528
  %v2531 = vtanh.pop %v2530
  %v2532 = vsub.f32 1.0, %v2520
  %2534 = vrot.lane.b32.xlu0 %v2531, 96
  %v2535 = vpop.permute.xlu0 %2534
  %v2537 = vmul.f32 %v2532, %v2535
  %v2538 = vmul.f32 %v2520, %v2406
  %v2539 = vadd.f32 %v2537, %v2538
  %v2540 = vsel %vm815, %v2513, %v2405
  %v2541 = vsel %vm822, %v2539, %v2406
  %v2542 = vld [vmem:[%s836] sm:$0xff]
  %v2543 = vld [vmem:[%s838] sm:$0xff]
  %2545 = vrot.lane.b32.xlu0 %v2540, 96
  %v2546 = vpop.permute.xlu0 %2545
  %v2548 = vsel %vm76, %v2546, %v2541
  %v2550 = vsel %vm370, %v2548, 0
  %2552 = vmatprep.subr.mxu0 0.0
  %2553 = vmatpush1.msra.mxu0 0.0
  %2554 = vmatprep.subr.mxu0 0.0
  %2555 = vmatpush1.msra.mxu0 0.0
  %2556 = vmatprep.subr.mxu0 0.0
  %2557 = vmatpush1.msra.mxu0 0.0
  %2558 = vmatprep.subr.mxu0 0.0
  %2559 = vmatpush1.msra.mxu0 0.0
  %2560 = vmatprep.subr.mxu0 0.0
  %2561 = vmatpush1.msra.mxu0 0.0
  %2562 = vmatprep.subr.mxu0 0.0
  %2563 = vmatpush1.msra.mxu0 0.0
  %2564 = vmatprep.subr.mxu0 0.0
  %2565 = vmatpush1.msra.mxu0 0.0
  %2566 = vmatprep.subr.mxu0 0.0
  %2567 = vmatpush1.msra.mxu0 0.0
  %2568 = vmatprep.subr.mxu0 %v2132
  %2569 = vmatpush1.msra.mxu0 %v2131
  %2570 = vmatprep.subr.mxu0 %v2130
  %2571 = vmatpush1.msra.mxu0 %v2129
  %2572 = vmatprep.subr.mxu0 %v2128
  %2573 = vmatpush1.msra.mxu0 %v2127
  %2574 = vmatprep.subr.mxu0 %v2126
  %2575 = vmatpush1.msra.mxu0 %v2125
  %2576 = vmatprep.subr.mxu0 %v2124
  %2577 = vmatpush1.msra.mxu0 %v2123
  %2578 = vmatprep.subr.mxu0 %v2122
  %2579 = vmatpush1.msra.mxu0 %v2121
  %2580 = vmatprep.subr.mxu0 %v2120
  %2581 = vmatpush1.msra.mxu0 %v2119
  %2582 = vmatprep.subr.mxu0 %v2118
  %2583 = vmatpush1.msra.mxu0 %v2117
  %2584 = vmatprep.subr.mxu0 0.0
  %2585 = vmatpush2.msra.mxu0 0.0
  %2586 = vmatprep.subr.mxu0 0.0
  %2587 = vmatpush2.msra.mxu0 0.0
  %2588 = vmatprep.subr.mxu0 0.0
  %2589 = vmatpush2.msra.mxu0 0.0
  %2590 = vmatprep.subr.mxu0 0.0
  %2591 = vmatpush2.msra.mxu0 0.0
  %2592 = vmatprep.subr.mxu0 0.0
  %2593 = vmatpush2.msra.mxu0 0.0
  %2594 = vmatprep.subr.mxu0 0.0
  %2595 = vmatpush2.msra.mxu0 0.0
  %2596 = vmatprep.subr.mxu0 0.0
  %2597 = vmatpush2.msra.mxu0 0.0
  %2598 = vmatprep.subr.mxu0 0.0
  %2599 = vmatpush2.msra.mxu0 0.0
  %2600 = vmatprep.subr.mxu0 0.0
  %2601 = vmatpush2.msra.mxu0 0.0
  %2602 = vmatprep.subr.mxu0 0.0
  %2603 = vmatpush2.msra.mxu0 0.0
  %2604 = vmatprep.subr.mxu0 0.0
  %2605 = vmatpush2.msra.mxu0 0.0
  %2606 = vmatprep.subr.mxu0 0.0
  %2607 = vmatpush2.msra.mxu0 0.0
  %2608 = vmatprep.subr.mxu0 0.0
  %2609 = vmatpush2.msra.mxu0 0.0
  %2610 = vmatprep.subr.mxu0 0.0
  %2611 = vmatpush2.msra.mxu0 0.0
  %2612 = vmatprep.subr.mxu0 0.0
  %2613 = vmatpush2.msra.mxu0 0.0
  %2614 = vmatprep.subr.mxu0 0.0
  %2615 = vmatpush2.msra.mxu0 0.0
  %2616 = vmatprep.mubr.f32.mxu0 0.0
  %2617 = vmatmul.mubr.f32.gmra.mxu0 %v2550
  %v2618 = vpop.f32.mrf.mxu0
  %v2619 = vadd.f32 %v2140, %v2618
  %v2620 = vpop.f32.mrf.mxu0
  %v2621 = vadd.f32 %v2144, %v2620
  %2622 = vdwg.mxu0
  %v2623 = vadd.f32 %v2542, %v2619
  %v2624 = vxor.u32 %v2623, 2147483648
  %v2625 = vmul.f32 %v2624, 1.442695
  %v2626 = vpow.pop %v2625
  %v2627 = vadd.f32 %v2626, 1.0
  %v2628 = vrcp.pop %v2627
  %v2629 = vmul.f32 1.0, %v2628
  %2631 = vrot.lane.b32.xlu0 %v2619, 64
  %v2632 = vpop.permute.xlu0 %2631
  %v2634 = vmul.f32 %v2629, %v2632
  %2636 = vrot.lane.b32.xlu0 %v2634, 64
  %v2637 = vpop.permute.xlu0 %2636
  %v2639 = vadd.f32 %v2542, %v2637
  %v2640 = vtanh.pop %v2639
  %v2641 = vsub.f32 1.0, %v2629
  %2643 = vrot.lane.b32.xlu0 %v2640, 96
  %v2644 = vpop.permute.xlu0 %2643
  %v2646 = vmul.f32 %v2641, %v2644
  %v2647 = vmul.f32 %v2629, %v2540
  %v2648 = vadd.f32 %v2646, %v2647
  %v2649 = vadd.f32 %v2543, %v2621
  %v2650 = vxor.u32 %v2649, 2147483648
  %v2651 = vmul.f32 %v2650, 1.442695
  %v2652 = vpow.pop %v2651
  %v2653 = vadd.f32 %v2652, 1.0
  %v2654 = vrcp.pop %v2653
  %v2655 = vmul.f32 1.0, %v2654
  %2657 = vrot.lane.b32.xlu0 %v2621, 64
  %v2658 = vpop.permute.xlu0 %2657
  %v2660 = vmul.f32 %v2655, %v2658
  %2662 = vrot.lane.b32.xlu0 %v2660, 64
  %v2663 = vpop.permute.xlu0 %2662
  %v2665 = vadd.f32 %v2543, %v2663
  %v2666 = vtanh.pop %v2665
  %v2667 = vsub.f32 1.0, %v2655
  %2669 = vrot.lane.b32.xlu0 %v2666, 96
  %v2670 = vpop.permute.xlu0 %2669
  %v2672 = vmul.f32 %v2667, %v2670
  %v2673 = vmul.f32 %v2655, %v2541
  %v2674 = vadd.f32 %v2672, %v2673
  %v2675 = vsel %vm972, %v2648, %v2540
  %v2676 = vsel %vm979, %v2674, %v2541
  %v2677 = vld [vmem:[%s993] sm:$0xff]
  %v2678 = vld [vmem:[%s995] sm:$0xff]
  %2680 = vrot.lane.b32.xlu0 %v2675, 96
  %v2681 = vpop.permute.xlu0 %2680
  %v2683 = vsel %vm76, %v2681, %v2676
  %v2685 = vsel %vm370, %v2683, 0
  %2687 = vmatprep.subr.mxu0 0.0
  %2688 = vmatpush1.msra.mxu0 0.0
  %2689 = vmatprep.subr.mxu0 0.0
  %2690 = vmatpush1.msra.mxu0 0.0
  %2691 = vmatprep.subr.mxu0 0.0
  %2692 = vmatpush1.msra.mxu0 0.0
  %2693 = vmatprep.subr.mxu0 0.0
  %2694 = vmatpush1.msra.mxu0 0.0
  %2695 = vmatprep.subr.mxu0 0.0
  %2696 = vmatpush1.msra.mxu0 0.0
  %2697 = vmatprep.subr.mxu0 0.0
  %2698 = vmatpush1.msra.mxu0 0.0
  %2699 = vmatprep.subr.mxu0 0.0
  %2700 = vmatpush1.msra.mxu0 0.0
  %2701 = vmatprep.subr.mxu0 0.0
  %2702 = vmatpush1.msra.mxu0 0.0
  %2703 = vmatprep.subr.mxu0 %v2132
  %2704 = vmatpush1.msra.mxu0 %v2131
  %2705 = vmatprep.subr.mxu0 %v2130
  %2706 = vmatpush1.msra.mxu0 %v2129
  %2707 = vmatprep.subr.mxu0 %v2128
  %2708 = vmatpush1.msra.mxu0 %v2127
  %2709 = vmatprep.subr.mxu0 %v2126
  %2710 = vmatpush1.msra.mxu0 %v2125
  %2711 = vmatprep.subr.mxu0 %v2124
  %2712 = vmatpush1.msra.mxu0 %v2123
  %2713 = vmatprep.subr.mxu0 %v2122
  %2714 = vmatpush1.msra.mxu0 %v2121
  %2715 = vmatprep.subr.mxu0 %v2120
  %2716 = vmatpush1.msra.mxu0 %v2119
  %2717 = vmatprep.subr.mxu0 %v2118
  %2718 = vmatpush1.msra.mxu0 %v2117
  %2719 = vmatprep.subr.mxu0 0.0
  %2720 = vmatpush2.msra.mxu0 0.0
  %2721 = vmatprep.subr.mxu0 0.0
  %2722 = vmatpush2.msra.mxu0 0.0
  %2723 = vmatprep.subr.mxu0 0.0
  %2724 = vmatpush2.msra.mxu0 0.0
  %2725 = vmatprep.subr.mxu0 0.0
  %2726 = vmatpush2.msra.mxu0 0.0
  %2727 = vmatprep.subr.mxu0 0.0
  %2728 = vmatpush2.msra.mxu0 0.0
  %2729 = vmatprep.subr.mxu0 0.0
  %2730 = vmatpush2.msra.mxu0 0.0
  %2731 = vmatprep.subr.mxu0 0.0
  %2732 = vmatpush2.msra.mxu0 0.0
  %2733 = vmatprep.subr.mxu0 0.0
  %2734 = vmatpush2.msra.mxu0 0.0
  %2735 = vmatprep.subr.mxu0 0.0
  %2736 = vmatpush2.msra.mxu0 0.0
  %2737 = vmatprep.subr.mxu0 0.0
  %2738 = vmatpush2.msra.mxu0 0.0
  %2739 = vmatprep.subr.mxu0 0.0
  %2740 = vmatpush2.msra.mxu0 0.0
  %2741 = vmatprep.subr.mxu0 0.0
  %2742 = vmatpush2.msra.mxu0 0.0
  %2743 = vmatprep.subr.mxu0 0.0
  %2744 = vmatpush2.msra.mxu0 0.0
  %2745 = vmatprep.subr.mxu0 0.0
  %2746 = vmatpush2.msra.mxu0 0.0
  %2747 = vmatprep.subr.mxu0 0.0
  %2748 = vmatpush2.msra.mxu0 0.0
  %2749 = vmatprep.subr.mxu0 0.0
  %2750 = vmatpush2.msra.mxu0 0.0
  %2751 = vmatprep.mubr.f32.mxu0 0.0
  %2752 = vmatmul.mubr.f32.gmra.mxu0 %v2685
  %v2753 = vpop.f32.mrf.mxu0
  %v2754 = vadd.f32 %v2140, %v2753
  %v2755 = vpop.f32.mrf.mxu0
  %v2756 = vadd.f32 %v2144, %v2755
  %2757 = vdwg.mxu0
  %v2758 = vadd.f32 %v2677, %v2754
  %v2759 = vxor.u32 %v2758, 2147483648
  %v2760 = vmul.f32 %v2759, 1.442695
  %v2761 = vpow.pop %v2760
  %v2762 = vadd.f32 %v2761, 1.0
  %v2763 = vrcp.pop %v2762
  %v2764 = vmul.f32 1.0, %v2763
  %2766 = vrot.lane.b32.xlu0 %v2754, 64
  %v2767 = vpop.permute.xlu0 %2766
  %v2769 = vmul.f32 %v2764, %v2767
  %2771 = vrot.lane.b32.xlu0 %v2769, 64
  %v2772 = vpop.permute.xlu0 %2771
  %v2774 = vadd.f32 %v2677, %v2772
  %v2775 = vtanh.pop %v2774
  %v2776 = vsub.f32 1.0, %v2764
  %2778 = vrot.lane.b32.xlu0 %v2775, 96
  %v2779 = vpop.permute.xlu0 %2778
  %v2781 = vmul.f32 %v2776, %v2779
  %v2782 = vmul.f32 %v2764, %v2675
  %v2783 = vadd.f32 %v2781, %v2782
  %v2784 = vadd.f32 %v2678, %v2756
  %v2785 = vxor.u32 %v2784, 2147483648
  %v2786 = vmul.f32 %v2785, 1.442695
  %v2787 = vpow.pop %v2786
  %v2788 = vadd.f32 %v2787, 1.0
  %v2789 = vrcp.pop %v2788
  %v2790 = vmul.f32 1.0, %v2789
  %2792 = vrot.lane.b32.xlu0 %v2756, 64
  %v2793 = vpop.permute.xlu0 %2792
  %v2795 = vmul.f32 %v2790, %v2793
  %2797 = vrot.lane.b32.xlu0 %v2795, 64
  %v2798 = vpop.permute.xlu0 %2797
  %v2800 = vadd.f32 %v2678, %v2798
  %v2801 = vtanh.pop %v2800
  %v2802 = vsub.f32 1.0, %v2790
  %2804 = vrot.lane.b32.xlu0 %v2801, 96
  %v2805 = vpop.permute.xlu0 %2804
  %v2807 = vmul.f32 %v2802, %v2805
  %v2808 = vmul.f32 %v2790, %v2676
  %v2809 = vadd.f32 %v2807, %v2808
  %v2810 = vsel %vm979, %v2783, %v2675
  %v2811 = vsel %vm972, %v2809, %v2676
  %v2812 = vld [vmem:[%s1138] sm:$0xff]
  %v2813 = vld [vmem:[%s1140] sm:$0xff]
  %2815 = vrot.lane.b32.xlu0 %v2810, 96
  %v2816 = vpop.permute.xlu0 %2815
  %v2818 = vsel %vm76, %v2816, %v2811
  %v2820 = vsel %vm370, %v2818, 0
  %2822 = vmatprep.subr.mxu0 0.0
  %2823 = vmatpush1.msra.mxu0 0.0
  %2824 = vmatprep.subr.mxu0 0.0
  %2825 = vmatpush1.msra.mxu0 0.0
  %2826 = vmatprep.subr.mxu0 0.0
  %2827 = vmatpush1.msra.mxu0 0.0
  %2828 = vmatprep.subr.mxu0 0.0
  %2829 = vmatpush1.msra.mxu0 0.0
  %2830 = vmatprep.subr.mxu0 0.0
  %2831 = vmatpush1.msra.mxu0 0.0
  %2832 = vmatprep.subr.mxu0 0.0
  %2833 = vmatpush1.msra.mxu0 0.0
  %2834 = vmatprep.subr.mxu0 0.0
  %2835 = vmatpush1.msra.mxu0 0.0
  %2836 = vmatprep.subr.mxu0 0.0
  %2837 = vmatpush1.msra.mxu0 0.0
  %2838 = vmatprep.subr.mxu0 %v2132
  %2839 = vmatpush1.msra.mxu0 %v2131
  %2840 = vmatprep.subr.mxu0 %v2130
  %2841 = vmatpush1.msra.mxu0 %v2129
  %2842 = vmatprep.subr.mxu0 %v2128
  %2843 = vmatpush1.msra.mxu0 %v2127
  %2844 = vmatprep.subr.mxu0 %v2126
  %2845 = vmatpush1.msra.mxu0 %v2125
  %2846 = vmatprep.subr.mxu0 %v2124
  %2847 = vmatpush1.msra.mxu0 %v2123
  %2848 = vmatprep.subr.mxu0 %v2122
  %2849 = vmatpush1.msra.mxu0 %v2121
  %2850 = vmatprep.subr.mxu0 %v2120
  %2851 = vmatpush1.msra.mxu0 %v2119
  %2852 = vmatprep.subr.mxu0 %v2118
  %2853 = vmatpush1.msra.mxu0 %v2117
  %2854 = vmatprep.subr.mxu0 0.0
  %2855 = vmatpush2.msra.mxu0 0.0
  %2856 = vmatprep.subr.mxu0 0.0
  %2857 = vmatpush2.msra.mxu0 0.0
  %2858 = vmatprep.subr.mxu0 0.0
  %2859 = vmatpush2.msra.mxu0 0.0
  %2860 = vmatprep.subr.mxu0 0.0
  %2861 = vmatpush2.msra.mxu0 0.0
  %2862 = vmatprep.subr.mxu0 0.0
  %2863 = vmatpush2.msra.mxu0 0.0
  %2864 = vmatprep.subr.mxu0 0.0
  %2865 = vmatpush2.msra.mxu0 0.0
  %2866 = vmatprep.subr.mxu0 0.0
  %2867 = vmatpush2.msra.mxu0 0.0
  %2868 = vmatprep.subr.mxu0 0.0
  %2869 = vmatpush2.msra.mxu0 0.0
  %2870 = vmatprep.subr.mxu0 0.0
  %2871 = vmatpush2.msra.mxu0 0.0
  %2872 = vmatprep.subr.mxu0 0.0
  %2873 = vmatpush2.msra.mxu0 0.0
  %2874 = vmatprep.subr.mxu0 0.0
  %2875 = vmatpush2.msra.mxu0 0.0
  %2876 = vmatprep.subr.mxu0 0.0
  %2877 = vmatpush2.msra.mxu0 0.0
  %2878 = vmatprep.subr.mxu0 0.0
  %2879 = vmatpush2.msra.mxu0 0.0
  %2880 = vmatprep.subr.mxu0 0.0
  %2881 = vmatpush2.msra.mxu0 0.0
  %2882 = vmatprep.subr.mxu0 0.0
  %2883 = vmatpush2.msra.mxu0 0.0
  %2884 = vmatprep.subr.mxu0 0.0
  %2885 = vmatpush2.msra.mxu0 0.0
  %2886 = vmatprep.mubr.f32.mxu0 0.0
  %2887 = vmatmul.mubr.f32.gmra.mxu0 %v2820
  %v2888 = vpop.f32.mrf.mxu0
  %v2889 = vadd.f32 %v2140, %v2888
  %v2890 = vpop.f32.mrf.mxu0
  %v2891 = vadd.f32 %v2144, %v2890
  %2892 = vdwg.mxu0
  %v2893 = vadd.f32 %v2812, %v2889
  %v2894 = vxor.u32 %v2893, 2147483648
  %v2895 = vmul.f32 %v2894, 1.442695
  %v2896 = vpow.pop %v2895
  %v2897 = vadd.f32 %v2896, 1.0
  %v2898 = vrcp.pop %v2897
  %v2899 = vmul.f32 1.0, %v2898
  %2901 = vrot.lane.b32.xlu0 %v2889, 64
  %v2902 = vpop.permute.xlu0 %2901
  %v2904 = vmul.f32 %v2899, %v2902
  %2906 = vrot.lane.b32.xlu0 %v2904, 64
  %v2907 = vpop.permute.xlu0 %2906
  %v2909 = vadd.f32 %v2812, %v2907
  %v2910 = vtanh.pop %v2909
  %v2911 = vsub.f32 1.0, %v2899
  %2913 = vrot.lane.b32.xlu0 %v2910, 96
  %v2914 = vpop.permute.xlu0 %2913
  %v2916 = vmul.f32 %v2911, %v2914
  %v2917 = vmul.f32 %v2899, %v2810
  %v2918 = vadd.f32 %v2916, %v2917
  %v2919 = vadd.f32 %v2813, %v2891
  %v2920 = vxor.u32 %v2919, 2147483648
  %v2921 = vmul.f32 %v2920, 1.442695
  %v2922 = vpow.pop %v2921
  %v2923 = vadd.f32 %v2922, 1.0
  %v2924 = vrcp.pop %v2923
  %v2925 = vmul.f32 1.0, %v2924
  %2927 = vrot.lane.b32.xlu0 %v2891, 64
  %v2928 = vpop.permute.xlu0 %2927
  %v2930 = vmul.f32 %v2925, %v2928
  %2932 = vrot.lane.b32.xlu0 %v2930, 64
  %v2933 = vpop.permute.xlu0 %2932
  %v2935 = vadd.f32 %v2813, %v2933
  %v2936 = vtanh.pop %v2935
  %v2937 = vsub.f32 1.0, %v2925
  %2939 = vrot.lane.b32.xlu0 %v2936, 96
  %v2940 = vpop.permute.xlu0 %2939
  %v2942 = vmul.f32 %v2937, %v2940
  %v2943 = vmul.f32 %v2925, %v2811
  %v2944 = vadd.f32 %v2942, %v2943
  %v2945 = vsel %vm822, %v2918, %v2810
  %v2946 = vsel %vm815, %v2944, %v2811
  %v2947 = vld [vmem:[%s1283] sm:$0xff]
  %v2948 = vld [vmem:[%s1285] sm:$0xff]
  %2950 = vrot.lane.b32.xlu0 %v2945, 96
  %v2951 = vpop.permute.xlu0 %2950
  %v2953 = vsel %vm76, %v2951, %v2946
  %v2955 = vsel %vm370, %v2953, 0
  %2957 = vmatprep.subr.mxu0 0.0
  %2958 = vmatpush1.msra.mxu0 0.0
  %2959 = vmatprep.subr.mxu0 0.0
  %2960 = vmatpush1.msra.mxu0 0.0
  %2961 = vmatprep.subr.mxu0 0.0
  %2962 = vmatpush1.msra.mxu0 0.0
  %2963 = vmatprep.subr.mxu0 0.0
  %2964 = vmatpush1.msra.mxu0 0.0
  %2965 = vmatprep.subr.mxu0 0.0
  %2966 = vmatpush1.msra.mxu0 0.0
  %2967 = vmatprep.subr.mxu0 0.0
  %2968 = vmatpush1.msra.mxu0 0.0
  %2969 = vmatprep.subr.mxu0 0.0
  %2970 = vmatpush1.msra.mxu0 0.0
  %2971 = vmatprep.subr.mxu0 0.0
  %2972 = vmatpush1.msra.mxu0 0.0
  %2973 = vmatprep.subr.mxu0 %v2132
  %2974 = vmatpush1.msra.mxu0 %v2131
  %2975 = vmatprep.subr.mxu0 %v2130
  %2976 = vmatpush1.msra.mxu0 %v2129
  %2977 = vmatprep.subr.mxu0 %v2128
  %2978 = vmatpush1.msra.mxu0 %v2127
  %2979 = vmatprep.subr.mxu0 %v2126
  %2980 = vmatpush1.msra.mxu0 %v2125
  %2981 = vmatprep.subr.mxu0 %v2124
  %2982 = vmatpush1.msra.mxu0 %v2123
  %2983 = vmatprep.subr.mxu0 %v2122
  %2984 = vmatpush1.msra.mxu0 %v2121
  %2985 = vmatprep.subr.mxu0 %v2120
  %2986 = vmatpush1.msra.mxu0 %v2119
  %2987 = vmatprep.subr.mxu0 %v2118
  %2988 = vmatpush1.msra.mxu0 %v2117
  %2989 = vmatprep.subr.mxu0 0.0
  %2990 = vmatpush2.msra.mxu0 0.0
  %2991 = vmatprep.subr.mxu0 0.0
  %2992 = vmatpush2.msra.mxu0 0.0
  %2993 = vmatprep.subr.mxu0 0.0
  %2994 = vmatpush2.msra.mxu0 0.0
  %2995 = vmatprep.subr.mxu0 0.0
  %2996 = vmatpush2.msra.mxu0 0.0
  %2997 = vmatprep.subr.mxu0 0.0
  %2998 = vmatpush2.msra.mxu0 0.0
  %2999 = vmatprep.subr.mxu0 0.0
  %3000 = vmatpush2.msra.mxu0 0.0
  %3001 = vmatprep.subr.mxu0 0.0
  %3002 = vmatpush2.msra.mxu0 0.0
  %3003 = vmatprep.subr.mxu0 0.0
  %3004 = vmatpush2.msra.mxu0 0.0
  %3005 = vmatprep.subr.mxu0 0.0
  %3006 = vmatpush2.msra.mxu0 0.0
  %3007 = vmatprep.subr.mxu0 0.0
  %3008 = vmatpush2.msra.mxu0 0.0
  %3009 = vmatprep.subr.mxu0 0.0
  %3010 = vmatpush2.msra.mxu0 0.0
  %3011 = vmatprep.subr.mxu0 0.0
  %3012 = vmatpush2.msra.mxu0 0.0
  %3013 = vmatprep.subr.mxu0 0.0
  %3014 = vmatpush2.msra.mxu0 0.0
  %3015 = vmatprep.subr.mxu0 0.0
  %3016 = vmatpush2.msra.mxu0 0.0
  %3017 = vmatprep.subr.mxu0 0.0
  %3018 = vmatpush2.msra.mxu0 0.0
  %3019 = vmatprep.subr.mxu0 0.0
  %3020 = vmatpush2.msra.mxu0 0.0
  %3021 = vmatprep.mubr.f32.mxu0 0.0
  %3022 = vmatmul.mubr.f32.gmra.mxu0 %v2955
  %v3023 = vpop.f32.mrf.mxu0
  %v3024 = vadd.f32 %v2140, %v3023
  %v3025 = vpop.f32.mrf.mxu0
  %v3026 = vadd.f32 %v2144, %v3025
  %3027 = vdwg.mxu0
  %v3028 = vadd.f32 %v2947, %v3024
  %v3029 = vxor.u32 %v3028, 2147483648
  %v3030 = vmul.f32 %v3029, 1.442695
  %v3031 = vpow.pop %v3030
  %v3032 = vadd.f32 %v3031, 1.0
  %v3033 = vrcp.pop %v3032
  %v3034 = vmul.f32 1.0, %v3033
  %3036 = vrot.lane.b32.xlu0 %v3024, 64
  %v3037 = vpop.permute.xlu0 %3036
  %v3039 = vmul.f32 %v3034, %v3037
  %3041 = vrot.lane.b32.xlu0 %v3039, 64
  %v3042 = vpop.permute.xlu0 %3041
  %v3044 = vadd.f32 %v2947, %v3042
  %v3045 = vtanh.pop %v3044
  %v3046 = vsub.f32 1.0, %v3034
  %3048 = vrot.lane.b32.xlu0 %v3045, 96
  %v3049 = vpop.permute.xlu0 %3048
  %v3051 = vmul.f32 %v3046, %v3049
  %v3052 = vmul.f32 %v3034, %v2945
  %v3053 = vadd.f32 %v3051, %v3052
  %v3054 = vadd.f32 %v2948, %v3026
  %v3055 = vxor.u32 %v3054, 2147483648
  %v3056 = vmul.f32 %v3055, 1.442695
  %v3057 = vpow.pop %v3056
  %v3058 = vadd.f32 %v3057, 1.0
  %v3059 = vrcp.pop %v3058
  %v3060 = vmul.f32 1.0, %v3059
  %3062 = vrot.lane.b32.xlu0 %v3026, 64
  %v3063 = vpop.permute.xlu0 %3062
  %v3065 = vmul.f32 %v3060, %v3063
  %3067 = vrot.lane.b32.xlu0 %v3065, 64
  %v3068 = vpop.permute.xlu0 %3067
  %v3070 = vadd.f32 %v2948, %v3068
  %v3071 = vtanh.pop %v3070
  %v3072 = vsub.f32 1.0, %v3060
  %3074 = vrot.lane.b32.xlu0 %v3071, 96
  %v3075 = vpop.permute.xlu0 %3074
  %v3077 = vmul.f32 %v3072, %v3075
  %v3078 = vmul.f32 %v3060, %v2946
  %v3079 = vadd.f32 %v3077, %v3078
  %v3080 = vsel %vm665, %v3053, %v2945
  %v3081 = vsel %vm658, %v3079, %v2946
  %v3082 = vld [vmem:[%s1428] sm:$0xff]
  %v3083 = vld [vmem:[#allocation3] sm:$0xff]
  %3085 = vrot.lane.b32.xlu0 %v3080, 96
  %v3086 = vpop.permute.xlu0 %3085
  %v3088 = vsel %vm76, %v3086, %v3081
  %v3090 = vsel %vm370, %v3088, 0
  %3092 = vmatprep.subr.mxu0 0.0
  %3093 = vmatpush1.msra.mxu0 0.0
  %3094 = vmatprep.subr.mxu0 0.0
  %3095 = vmatpush1.msra.mxu0 0.0
  %3096 = vmatprep.subr.mxu0 0.0
  %3097 = vmatpush1.msra.mxu0 0.0
  %3098 = vmatprep.subr.mxu0 0.0
  %3099 = vmatpush1.msra.mxu0 0.0
  %3100 = vmatprep.subr.mxu0 0.0
  %3101 = vmatpush1.msra.mxu0 0.0
  %3102 = vmatprep.subr.mxu0 0.0
  %3103 = vmatpush1.msra.mxu0 0.0
  %3104 = vmatprep.subr.mxu0 0.0
  %3105 = vmatpush1.msra.mxu0 0.0
  %3106 = vmatprep.subr.mxu0 0.0
  %3107 = vmatpush1.msra.mxu0 0.0
  %3108 = vmatprep.subr.mxu0 %v2132
  %3109 = vmatpush1.msra.mxu0 %v2131
  %3110 = vmatprep.subr.mxu0 %v2130
  %3111 = vmatpush1.msra.mxu0 %v2129
  %3112 = vmatprep.subr.mxu0 %v2128
  %3113 = vmatpush1.msra.mxu0 %v2127
  %3114 = vmatprep.subr.mxu0 %v2126
  %3115 = vmatpush1.msra.mxu0 %v2125
  %3116 = vmatprep.subr.mxu0 %v2124
  %3117 = vmatpush1.msra.mxu0 %v2123
  %3118 = vmatprep.subr.mxu0 %v2122
  %3119 = vmatpush1.msra.mxu0 %v2121
  %3120 = vmatprep.subr.mxu0 %v2120
  %3121 = vmatpush1.msra.mxu0 %v2119
  %3122 = vmatprep.subr.mxu0 %v2118
  %3123 = vmatpush1.msra.mxu0 %v2117
  %3124 = vmatprep.subr.mxu0 0.0
  %3125 = vmatpush2.msra.mxu0 0.0
  %3126 = vmatprep.subr.mxu0 0.0
  %3127 = vmatpush2.msra.mxu0 0.0
  %3128 = vmatprep.subr.mxu0 0.0
  %3129 = vmatpush2.msra.mxu0 0.0
  %3130 = vmatprep.subr.mxu0 0.0
  %3131 = vmatpush2.msra.mxu0 0.0
  %3132 = vmatprep.subr.mxu0 0.0
  %3133 = vmatpush2.msra.mxu0 0.0
  %3134 = vmatprep.subr.mxu0 0.0
  %3135 = vmatpush2.msra.mxu0 0.0
  %3136 = vmatprep.subr.mxu0 0.0
  %3137 = vmatpush2.msra.mxu0 0.0
  %3138 = vmatprep.subr.mxu0 0.0
  %3139 = vmatpush2.msra.mxu0 0.0
  %3140 = vmatprep.subr.mxu0 0.0
  %3141 = vmatpush2.msra.mxu0 0.0
  %3142 = vmatprep.subr.mxu0 0.0
  %3143 = vmatpush2.msra.mxu0 0.0
  %3144 = vmatprep.subr.mxu0 0.0
  %3145 = vmatpush2.msra.mxu0 0.0
  %3146 = vmatprep.subr.mxu0 0.0
  %3147 = vmatpush2.msra.mxu0 0.0
  %3148 = vmatprep.subr.mxu0 0.0
  %3149 = vmatpush2.msra.mxu0 0.0
  %3150 = vmatprep.subr.mxu0 0.0
  %3151 = vmatpush2.msra.mxu0 0.0
  %3152 = vmatprep.subr.mxu0 0.0
  %3153 = vmatpush2.msra.mxu0 0.0
  %3154 = vmatprep.subr.mxu0 0.0
  %3155 = vmatpush2.msra.mxu0 0.0
  %3156 = vmatprep.mubr.f32.mxu0 0.0
  %3157 = vmatmul.mubr.f32.gmra.mxu0 %v3090
  %v3158 = vpop.f32.mrf.mxu0
  %v3159 = vadd.f32 %v2140, %v3158
  %v3160 = vpop.f32.mrf.mxu0
  %v3161 = vadd.f32 %v2144, %v3160
  %3162 = vdwg.mxu0
  %v3163 = vadd.f32 %v3082, %v3159
  %v3164 = vxor.u32 %v3163, 2147483648
  %v3165 = vmul.f32 %v3164, 1.442695
  %v3166 = vpow.pop %v3165
  %v3167 = vadd.f32 %v3166, 1.0
  %v3168 = vrcp.pop %v3167
  %v3169 = vmul.f32 1.0, %v3168
  %3171 = vrot.lane.b32.xlu0 %v3159, 64
  %v3172 = vpop.permute.xlu0 %3171
  %v3174 = vmul.f32 %v3169, %v3172
  %3176 = vrot.lane.b32.xlu0 %v3174, 64
  %v3177 = vpop.permute.xlu0 %3176
  %v3179 = vadd.f32 %v3082, %v3177
  %v3180 = vtanh.pop %v3179
  %v3181 = vsub.f32 1.0, %v3169
  %3183 = vrot.lane.b32.xlu0 %v3180, 96
  %v3184 = vpop.permute.xlu0 %3183
  %v3186 = vmul.f32 %v3181, %v3184
  %v3187 = vmul.f32 %v3169, %v3080
  %v3188 = vadd.f32 %v3186, %v3187
  %v3189 = vadd.f32 %v3083, %v3161
  %v3190 = vxor.u32 %v3189, 2147483648
  %v3191 = vmul.f32 %v3190, 1.442695
  %v3192 = vpow.pop %v3191
  %v3193 = vadd.f32 %v3192, 1.0
  %v3194 = vrcp.pop %v3193
  %v3195 = vmul.f32 1.0, %v3194
  %3197 = vrot.lane.b32.xlu0 %v3161, 64
  %v3198 = vpop.permute.xlu0 %3197
  %v3200 = vmul.f32 %v3195, %v3198
  %3202 = vrot.lane.b32.xlu0 %v3200, 64
  %v3203 = vpop.permute.xlu0 %3202
  %v3205 = vadd.f32 %v3083, %v3203
  %v3206 = vtanh.pop %v3205
  %v3207 = vsub.f32 1.0, %v3195
  %3209 = vrot.lane.b32.xlu0 %v3206, 96
  %v3210 = vpop.permute.xlu0 %3209
  %v3212 = vmul.f32 %v3207, %v3210
  %v3213 = vmul.f32 %v3195, %v3081
  %v3214 = vadd.f32 %v3212, %v3213
  %v3215 = vsel %vm509, %v3188, %v3080
  %v3216 = vsel %vm502, %v3214, %v3081
  %v3217 = vld [vmem:[%s14] sm:$0xff]
  %v3218 = vld [vmem:[%s14 + $0x8] sm:$0xff]
  %v3219 = vld [vmem:[%s14 + $0x10] sm:$0xff]
  %v3220 = vld [vmem:[%s14 + $0x18] sm:$0xff]
  %v3221 = vld [vmem:[%s15] sm:$0xff]
  %v3222 = vld [vmem:[%s15 + $0x8] sm:$0xff]
  %v3223 = vld [vmem:[%s15 + $0x10] sm:$0xff]
  %v3224 = vld [vmem:[%s15 + $0x18] sm:$0xff]
  %3226 = vrot.lane.b32.xlu0 %v3216, 96
  %v3227 = vpop.permute.xlu0 %3226
  %v3228 = vsel %vm76, %v3227, 0
  %3230 = vmatprep.subr.mxu0 0.0
  %3231 = vmatpush1.msra.mxu0 0.0
  %3232 = vmatprep.subr.mxu0 0.0
  %3233 = vmatpush1.msra.mxu0 0.0
  %3234 = vmatprep.subr.mxu0 0.0
  %3235 = vmatpush1.msra.mxu0 0.0
  %3236 = vmatprep.subr.mxu0 0.0
  %3237 = vmatpush1.msra.mxu0 0.0
  %3238 = vmatprep.subr.mxu0 0.0
  %3239 = vmatpush1.msra.mxu0 0.0
  %3240 = vmatprep.subr.mxu0 0.0
  %3241 = vmatpush1.msra.mxu0 0.0
  %3242 = vmatprep.subr.mxu0 0.0
  %3243 = vmatpush1.msra.mxu0 0.0
  %3244 = vmatprep.subr.mxu0 0.0
  %3245 = vmatpush1.msra.mxu0 0.0
  %3246 = vmatprep.subr.mxu0 0.0
  %3247 = vmatpush1.msra.mxu0 0.0
  %3248 = vmatprep.subr.mxu0 0.0
  %3249 = vmatpush1.msra.mxu0 0.0
  %3250 = vmatprep.subr.mxu0 0.0
  %3251 = vmatpush1.msra.mxu0 0.0
  %3252 = vmatprep.subr.mxu0 0.0
  %3253 = vmatpush1.msra.mxu0 0.0
  %3254 = vmatprep.subr.mxu0 0.0
  %3255 = vmatpush1.msra.mxu0 %v3224
  %3256 = vmatprep.subr.mxu0 0.0
  %3257 = vmatpush1.msra.mxu0 %v3223
  %3258 = vmatprep.subr.mxu0 0.0
  %3259 = vmatpush1.msra.mxu0 %v3222
  %3260 = vmatprep.subr.mxu0 0.0
  %3261 = vmatpush1.msra.mxu0 %v3221
  %3262 = vmatprep.subr.mxu0 0.0
  %3263 = vmatpush2.msra.mxu0 0.0
  %3264 = vmatprep.subr.mxu0 0.0
  %3265 = vmatpush2.msra.mxu0 0.0
  %3266 = vmatprep.subr.mxu0 0.0
  %3267 = vmatpush2.msra.mxu0 0.0
  %3268 = vmatprep.subr.mxu0 0.0
  %3269 = vmatpush2.msra.mxu0 0.0
  %3270 = vmatprep.subr.mxu0 0.0
  %3271 = vmatpush2.msra.mxu0 0.0
  %3272 = vmatprep.subr.mxu0 0.0
  %3273 = vmatpush2.msra.mxu0 0.0
  %3274 = vmatprep.subr.mxu0 0.0
  %3275 = vmatpush2.msra.mxu0 0.0
  %3276 = vmatprep.subr.mxu0 0.0
  %3277 = vmatpush2.msra.mxu0 0.0
  %3278 = vmatprep.subr.mxu0 0.0
  %3279 = vmatpush2.msra.mxu0 0.0
  %3280 = vmatprep.subr.mxu0 0.0
  %3281 = vmatpush2.msra.mxu0 0.0
  %3282 = vmatprep.subr.mxu0 0.0
  %3283 = vmatpush2.msra.mxu0 0.0
  %3284 = vmatprep.subr.mxu0 0.0
  %3285 = vmatpush2.msra.mxu0 0.0
  %3286 = vmatprep.subr.mxu0 0.0
  %3287 = vmatpush2.msra.mxu0 0.0
  %3288 = vmatprep.subr.mxu0 0.0
  %3289 = vmatpush2.msra.mxu0 0.0
  %3290 = vmatprep.subr.mxu0 0.0
  %3291 = vmatpush2.msra.mxu0 0.0
  %3292 = vmatprep.subr.mxu0 0.0
  %3293 = vmatpush2.msra.mxu0 0.0
  %3294 = vmatprep.mubr.f32.mxu0 0.0
  %3295 = vmatmul.mubr.f32.gmra.mxu0 %v3228
  %v3296 = vpop.f32.mrf.mxu0
  %v3297 = vadd.f32 0.0, %v3296
  %v3298 = vpop.f32.mrf.mxu0
  %3299 = vdwg.mxu0
  %3301 = vrot.lane.b32.xlu0 %v3215, 96
  %v3302 = vpop.permute.xlu0 %3301
  %v3303 = vsel %vm76, %v3302, 0
  %3305 = vmatprep.subr.mxu0 0.0
  %3306 = vmatpush1.msra.mxu0 0.0
  %3307 = vmatprep.subr.mxu0 0.0
  %3308 = vmatpush1.msra.mxu0 0.0
  %3309 = vmatprep.subr.mxu0 0.0
  %3310 = vmatpush1.msra.mxu0 0.0
  %3311 = vmatprep.subr.mxu0 0.0
  %3312 = vmatpush1.msra.mxu0 0.0
  %3313 = vmatprep.subr.mxu0 0.0
  %3314 = vmatpush1.msra.mxu0 0.0
  %3315 = vmatprep.subr.mxu0 0.0
  %3316 = vmatpush1.msra.mxu0 0.0
  %3317 = vmatprep.subr.mxu0 0.0
  %3318 = vmatpush1.msra.mxu0 0.0
  %3319 = vmatprep.subr.mxu0 0.0
  %3320 = vmatpush1.msra.mxu0 0.0
  %3321 = vmatprep.subr.mxu0 0.0
  %3322 = vmatpush1.msra.mxu0 0.0
  %3323 = vmatprep.subr.mxu0 0.0
  %3324 = vmatpush1.msra.mxu0 0.0
  %3325 = vmatprep.subr.mxu0 0.0
  %3326 = vmatpush1.msra.mxu0 0.0
  %3327 = vmatprep.subr.mxu0 0.0
  %3328 = vmatpush1.msra.mxu0 0.0
  %3329 = vmatprep.subr.mxu0 0.0
  %3330 = vmatpush1.msra.mxu0 %v3220
  %3331 = vmatprep.subr.mxu0 0.0
  %3332 = vmatpush1.msra.mxu0 %v3219
  %3333 = vmatprep.subr.mxu0 0.0
  %3334 = vmatpush1.msra.mxu0 %v3218
  %3335 = vmatprep.subr.mxu0 0.0
  %3336 = vmatpush1.msra.mxu0 %v3217
  %3337 = vmatprep.subr.mxu0 0.0
  %3338 = vmatpush2.msra.mxu0 0.0
  %3339 = vmatprep.subr.mxu0 0.0
  %3340 = vmatpush2.msra.mxu0 0.0
  %3341 = vmatprep.subr.mxu0 0.0
  %3342 = vmatpush2.msra.mxu0 0.0
  %3343 = vmatprep.subr.mxu0 0.0
  %3344 = vmatpush2.msra.mxu0 0.0
  %3345 = vmatprep.subr.mxu0 0.0
  %3346 = vmatpush2.msra.mxu0 0.0
  %3347 = vmatprep.subr.mxu0 0.0
  %3348 = vmatpush2.msra.mxu0 0.0
  %3349 = vmatprep.subr.mxu0 0.0
  %3350 = vmatpush2.msra.mxu0 0.0
  %3351 = vmatprep.subr.mxu0 0.0
  %3352 = vmatpush2.msra.mxu0 0.0
  %3353 = vmatprep.subr.mxu0 0.0
  %3354 = vmatpush2.msra.mxu0 0.0
  %3355 = vmatprep.subr.mxu0 0.0
  %3356 = vmatpush2.msra.mxu0 0.0
  %3357 = vmatprep.subr.mxu0 0.0
  %3358 = vmatpush2.msra.mxu0 0.0
  %3359 = vmatprep.subr.mxu0 0.0
  %3360 = vmatpush2.msra.mxu0 0.0
  %3361 = vmatprep.subr.mxu0 0.0
  %3362 = vmatpush2.msra.mxu0 0.0
  %3363 = vmatprep.subr.mxu0 0.0
  %3364 = vmatpush2.msra.mxu0 0.0
  %3365 = vmatprep.subr.mxu0 0.0
  %3366 = vmatpush2.msra.mxu0 0.0
  %3367 = vmatprep.subr.mxu0 0.0
  %3368 = vmatpush2.msra.mxu0 0.0
  %3369 = vmatprep.mubr.f32.mxu0 0.0
  %3370 = vmatmul.mubr.f32.gmra.mxu0 %v3303
  %v3371 = vpop.f32.mrf.mxu0
  %v3372 = vadd.f32 %v3297, %v3371
  %v3373 = vpop.f32.mrf.mxu0
  %3374 = vdwg.mxu0
  %v3375 = vld [vmem:[%s16] sm:$0x1]
  %v3377 = vlaneseq
  %v3378 = vshrl.u32 %v3377, 7
  %v3379 = vsub.s32 0, %v3378
  %v3380 = vrot.slane %v3375, %v3379
  %v3382 = vadd.f32 %v3372, %v3380
  %vm3383 = vcmask 31744
  %3384 = vst.msk [vmem:[%s17] sm:$0xff] %vm3383, %v3382
  // Predicated region
  $region70: #{gru_net_forward.1} parent=0 // pred_check
    _
  $region71: #{gru_net_forward.1} parent=0 // pred_check_branch
    %3386 = sbr.rel (0) target = $region73
  $region72: #{gru_net_forward.1} parent=0 // pred_region
    _
  $region73: #{gru_net_forward.1} parent=0 // pred_fallthru
    _
  // Predicated region
  $region74: #{gru_net_forward.1} parent=0 // pred_check
    _
  $region75: #{gru_net_forward.1} parent=0 // pred_check_branch
    %3388 = sbr.rel (0) target = $region77
  $region76: #{gru_net_forward.1} parent=0 // pred_region
    _
  $region77: #{gru_net_forward.1} parent=0 // pred_fallthru
    _

</llo_original>
